<compile_context>
chip_gen: v6e
topology: v6e:2x2x1
jax: 0.10.0
libtpu: 0.0.40
codegen_flags: <defaults>
</compile_context>

<pallas_src>
import functools

import jax
import jax.numpy as jnp
from jax.experimental import pallas as pl
from jax.experimental.pallas import tpu as pltpu


_TM = 512                       # voxel tile (lane axis); multiple of 128
_KC = 128                       # codebook streaming chunk (sublane axis)
_BIG = 1e30                     # distance sentinel for padded codebook rows
_VMEM_LIMIT = 32 * 1024 * 1024  # safe on v5e / v6e / v7x


# ----------------------------------------------------------------------------
# Fused Pallas kernel: (enc o quant_conv) affine -> streamed VQ argmin ->
# (codebook gather o post_quant_conv o decoder-proj) affine, one tile at a time
# ----------------------------------------------------------------------------
def _fused_vq_kernel(sid_ref, x_ref, wi_ref, bi_ref, cb_ref, esq_ref,
                     wo_ref, bo_ref, y_ref, idx_ref, dmin_ref, *, kc):
    del sid_ref  # only consumed by the index_maps (scalar prefetch)

    x = x_ref[...].astype(jnp.float32)                    # (Cin, TM)
    wi = wi_ref[...]                                      # (Cmax, Cin)
    bi = bi_ref[...]                                      # (Cmax, 1)
    if x.shape[0] == 1:
        # Cin == 1: degenerate matmul -> VPU broadcast multiply-add, no MXU.
        z = wi * x + bi                                   # (Cmax, TM)
    else:
        z = jnp.dot(wi, x, preferred_element_type=jnp.float32) + bi
    z_sq = jnp.sum(z * z, axis=0, keepdims=True)          # (1, TM)

    kmax = cb_ref.shape[0]
    tm = x.shape[1]
    n_chunks = kmax // kc

    # ---- pass 1: streamed nearest-neighbour search over K-chunks -----------
    # Running min / argmin; first index wins on ties (matches torch.argmin).
    run_min = None
    run_idx = None
    for c in range(n_chunks):
        cs = c * kc
        cb_c = cb_ref[pl.ds(cs, kc), :]                   # (kc, Cmax)
        esq_c = esq_ref[pl.ds(cs, kc), :]                 # (kc, 1)
        # ||e||^2 - 2 e.z + ||z||^2 ; padded codebook rows carry esq = _BIG.
        dist = esq_c - 2.0 * jnp.dot(cb_c, z, preferred_element_type=jnp.float32) + z_sq
        lmin = jnp.min(dist, axis=0, keepdims=True)                         # (1, TM)
        rowiota = jax.lax.broadcasted_iota(jnp.int32, (kc, 1), 0) + cs      # (kc, 1)
        lidx = jnp.min(jnp.where(dist <= lmin, rowiota, kmax),
                       axis=0, keepdims=True)                               # (1, TM)
        if c == 0:
            run_min, run_idx = lmin, lidx
        else:
            better = lmin < run_min          # strict: earlier chunk wins ties
            run_idx = jnp.where(better, lidx, run_idx)
            run_min = jnp.minimum(run_min, lmin)

    idx_ref[...] = run_idx
    # ||z_q - z||^2 per voxel via the quadratic expansion (clamped at 0; the
    # expansion can dip slightly negative from fp cancellation).
    dmin_ref[...] = jnp.maximum(run_min, 0.0)

    # ---- pass 2: chunked codebook gather fused with the output projection --
    # y[:, v] = wo[idx[v], :]^T + bo   (wo already folds post_quant_conv and
    # the linear decoder-projection slice for this scale).
    cout = y_ref.shape[0]
    acc = jnp.zeros((cout, tm), jnp.float32)
    for c in range(n_chunks):
        cs = c * kc
        rowiota = jax.lax.broadcasted_iota(jnp.int32, (kc, 1), 0) + cs
        onehot = rowiota == run_idx                       # (kc, TM) bool
        wo_c = wo_ref[pl.ds(cs, kc), :]                   # (kc, Cout)
        if cout == 1:
            # VPU select-reduce: exact (no weight rounding), no MXU round trip.
            acc = acc + jnp.sum(jnp.where(onehot, wo_c, 0.0),
                                axis=0, keepdims=True)
        else:
            # bf16 one-hot through the MXU (0/1 exact in bf16), f32 accumulate.
            acc = acc + jax.lax.dot_general(
                wo_c.astype(jnp.bfloat16), onehot.astype(jnp.bfloat16),
                (((0,), (0,)), ((), ())), preferred_element_type=jnp.float32)
    y_ref[...] = (acc + bo_ref[...]).astype(y_ref.dtype)


def fused_vq_decode(scale_id, x_slab, wi, bi, cb, esq, wo, bo, *, tm=_TM, kc=_KC):
    """Single-launch multi-scale VQ.

    scale_id: (T,) int32  per-tile scale index (scalar-prefetched to SMEM).
    x_slab:   (Cin, T*tm) packed encoded features (each scale zero-padded).
    wi/bi/cb/esq/wo/bo: per-scale params stacked on axis 0, padded to
        (S, Cmax, Cin), (S, Cmax, 1), (S, Kmax, Cmax), (S, Kmax, 1),
        (S, Kmax, Cout), (S, Cout, 1).
    Returns: y (Cout, T*tm) decoder contribution, idx (1, T*tm) i32,
             dmin (1, T*tm) per-voxel min squared distance.
    """
    cin, m_slab = x_slab.shape
    _, cmax, _ = wi.shape
    kmax = cb.shape[1]
    cout = wo.shape[2]
    t = scale_id.shape[0]
    assert tm % 128 == 0 and m_slab == t * tm, (m_slab, t, tm)
    kc = min(kc, kmax)
    assert kmax % kc == 0, (kmax, kc)

    kernel = functools.partial(_fused_vq_kernel, kc=kc)
    return pl.pallas_call(
        kernel,
        out_shape=(
            jax.ShapeDtypeStruct((cout, m_slab), jnp.float32),
            jax.ShapeDtypeStruct((1, m_slab), jnp.int32),
            jax.ShapeDtypeStruct((1, m_slab), jnp.float32),
        ),
        grid_spec=pltpu.PrefetchScalarGridSpec(
            num_scalar_prefetch=1,
            grid=(t,),
            in_specs=[
                pl.BlockSpec((cin, tm), lambda i, sid: (0, i)),
                pl.BlockSpec((None, cmax, cin), lambda i, sid: (sid[i], 0, 0)),
                pl.BlockSpec((None, cmax, 1), lambda i, sid: (sid[i], 0, 0)),
                pl.BlockSpec((None, kmax, cmax), lambda i, sid: (sid[i], 0, 0)),
                pl.BlockSpec((None, kmax, 1), lambda i, sid: (sid[i], 0, 0)),
                pl.BlockSpec((None, kmax, cout), lambda i, sid: (sid[i], 0, 0)),
                pl.BlockSpec((None, cout, 1), lambda i, sid: (sid[i], 0, 0)),
            ],
            out_specs=[
                pl.BlockSpec((cout, tm), lambda i, sid: (0, i)),
                pl.BlockSpec((1, tm), lambda i, sid: (0, i)),
                pl.BlockSpec((1, tm), lambda i, sid: (0, i)),
            ],
        ),
        compiler_params=pltpu.CompilerParams(
            dimension_semantics=("parallel",),   # tiles independent -> megacore
            vmem_limit_bytes=_VMEM_LIMIT,
        ),
    )(scale_id, x_slab, wi, bi, cb, esq, wo, bo)


# ----------------------------------------------------------------------------
# Layout / glue helpers (plain JAX, entry / exit only)
# ----------------------------------------------------------------------------
def ncdhw_to_cm(x):
    n, c, d, h, w = x.shape
    return jnp.transpose(x, (1, 0, 2, 3, 4)).reshape(c, n * d * h * w)


def cm_to_ncdhw(x_cm, dims):
    n, d, h, w = dims
    c = x_cm.shape[0]
    return jnp.transpose(x_cm.reshape(c, n, d, h, w), (1, 0, 2, 3, 4))


def avg_pool3d(x, f):
    if f == 1:
        return x
    n, c, d, h, w = x.shape
    x = x.reshape(n, c, d // f, f, h // f, f, w // f, f)
    return x.mean(axis=(3, 5, 7))


def upsample_cm(x_cm, n, r, f):
    if f == 1:
        return x_cm
    c = x_cm.shape[0]
    x = x_cm.reshape(c, n, r, r, r)
    x = jnp.repeat(x, f, axis=2)
    x = jnp.repeat(x, f, axis=3)
    x = jnp.repeat(x, f, axis=4)
    return x.reshape(c, n * (r * f) ** 3)


# ----------------------------------------------------------------------------
# VQGAN model (forward only)
# ----------------------------------------------------------------------------
class VQGANPallas:
    def __init__(self, latent_dim=32, num_codebook_vectors=128, base_r=16,
                 in_channels=1, out_channels=1, beta=0.25, seed=0,
                 tm=_TM, kc=_KC):
        self.beta = beta
        self.base_r = base_r
        self.in_channels = in_channels
        self.out_channels = out_channels
        self.tm = tm
        self.kc = kc
        self.channels = [latent_dim // 8, latent_dim // 4, latent_dim // 2, latent_dim]
        self.books = [num_codebook_vectors, num_codebook_vectors,
                      num_codebook_vectors * 2, num_codebook_vectors * 2]
        self.resolutions = [base_r, base_r // 2, base_r // 4, base_r // 8]
        cmax, kmax = max(self.channels), max(self.books)

        key = jax.random.PRNGKey(seed)
        keys = iter(jax.random.split(key, 64))

        def uinit(shape, fan_in):
            s = 1.0 / jnp.sqrt(jnp.float32(fan_in))
            return jax.random.uniform(next(keys), shape, jnp.float32, -s, s)

        # raw parameters (PyTorch-style parameterization)
        enc_w = [uinit((in_channels, c), in_channels) for c in self.channels]
        enc_b = [uinit((1, c), in_channels) for c in self.channels]
        quant_w = [uinit((c, c), c) for c in self.channels]
        quant_b = [uinit((1, c), c) for c in self.channels]
        post_w = [uinit((c, c), c) for c in self.channels]
        post_b = [uinit((1, c), c) for c in self.channels]
        # codebooks: uniform(-1/K, 1/K) like the reference VQGAN Codebook
        codebooks = [
            jax.random.uniform(next(keys), (k, c), jnp.float32, -1.0 / k, 1.0 / k)
            for c, k in zip(self.channels, self.books)
        ]
        cat_c = sum(self.channels)
        dec_w = uinit((cat_c, out_channels), cat_c)
        dec_b = uinit((1, out_channels), cat_c)

        # ---- fused, padded, stacked kernel params (constants hoisted) ------
        # TODO(synk): the decoder-projection slice of dec_w is folded into the
        # per-scale gather weight (valid because the stand-in decoder is
        # linear: nearest-upsample + concat + 1x1x1 conv); revisit the fold if
        # the real Decoder is nonlinear.
        wi_l, bi_l, cb_l, esq_l, wo_l, bo_l = [], [], [], [], [], []
        row = 0
        for i, (c, k) in enumerate(zip(self.channels, self.books)):
            wi = (enc_w[i] @ quant_w[i]).T                          # (c, Cin)
            bi = (enc_b[i] @ quant_w[i] + quant_b[i]).T             # (c, 1)
            cb = codebooks[i]                                       # (k, c)
            esq = jnp.sum(cb * cb, axis=-1, keepdims=True)          # (k, 1)
            w_post = (cb @ post_w[i]).T                             # (c, k)
            b_post = post_b[i].T                                    # (c, 1)
            dw = dec_w[row:row + c, :]                              # (c, Cout)
            row += c
            wo = (dw.T @ w_post).T                                  # (k, Cout)
            bo = dw.T @ b_post                                      # (Cout, 1)
            wi_l.append(jnp.pad(wi, ((0, cmax - c), (0, 0))))
            bi_l.append(jnp.pad(bi, ((0, cmax - c), (0, 0))))
            cb_l.append(jnp.pad(cb, ((0, kmax - k), (0, cmax - c))))
            esq_l.append(jnp.pad(esq, ((0, kmax - k), (0, 0)),
                                 constant_values=_BIG))             # padded rows never win
            wo_l.append(jnp.pad(wo, ((0, kmax - k), (0, 0))))
            bo_l.append(bo)
        self.wi = jnp.stack(wi_l)      # (S, Cmax, Cin)
        self.bi = jnp.stack(bi_l)      # (S, Cmax, 1)
        self.cb = jnp.stack(cb_l)      # (S, Kmax, Cmax)
        self.esq = jnp.stack(esq_l)    # (S, Kmax, 1)
        self.wo = jnp.stack(wo_l)      # (S, Kmax, Cout)
        self.bo = jnp.stack(bo_l)      # (S, Cout, 1)
        self.dec_b = dec_b.T           # (Cout, 1)

    # ------------------------------------------------------------------ enc
    def _encode_and_pack(self, imgs):
        # TODO(synk): real Encoder / Encoder_MedNext not specified; avg-pool
        # stand-in.  The per-scale 1x1x1 channel projection is folded into the
        # fused enc@quant weight consumed by the kernel.
        xs, sids, offs, valid = [], [], [], []
        off = 0
        for i, r in enumerate(self.resolutions):
            f = self.base_r // r
            pooled = avg_pool3d(imgs, f)                 # (N, Cin, r, r, r)
            x_cm = ncdhw_to_cm(pooled)                   # (Cin, M_i)
            m = x_cm.shape[1]
            t = -(-m // self.tm)                         # cdiv
            p = t * self.tm
            xs.append(jnp.pad(x_cm, ((0, 0), (0, p - m))))
            sids.append(jnp.full((t,), i, jnp.int32))
            offs.append(off)
            valid.append(m)
            off += p
        return jnp.concatenate(xs, axis=1), jnp.concatenate(sids), offs, valid

    # -------------------------------------------------------------- forward
    def forward(self, imgs, info=None):
        n = imgs.shape[0]
        x_slab, scale_id, offs, valid = self._encode_and_pack(imgs)

        y_slab, idx_slab, dmin_slab = fused_vq_decode(
            scale_id, x_slab, self.wi, self.bi, self.cb, self.esq,
            self.wo, self.bo, tm=self.tm, kc=self.kc)

        q_loss = 0.0
        codebook_indices = None
        ups = []
        for i, (r, c) in enumerate(zip(self.resolutions, self.channels)):
            o, m = offs[i], valid[i]
            # loss = mean((z_q.detach()-z)^2) + beta*mean((z_q-z.detach())^2)
            # forward value == (1+beta) * mean(||z_q - z||^2 over N*C*D*H*W)
            q_loss = q_loss + (1.0 + self.beta) * jnp.sum(dmin_slab[:, o:o + m]) / (m * c)
            # TODO(synk): real Decoder not specified; nearest-upsample + summed
            # linear projection stand-in (projection folded into the kernel).
            ups.append(upsample_cm(y_slab[:, o:o + m], n, r, self.base_r // r))
            codebook_indices = idx_slab[0, o:o + m]      # last scale, as in reference
        decoded_cm = ups[0] + ups[1] + ups[2] + ups[3] + self.dec_b
        decoded = cm_to_ncdhw(decoded_cm,
                              (n, self.base_r, self.base_r, self.base_r))
        return decoded, codebook_indices, q_loss


# ----------------------------------------------------------------------------
if __name__ == "__main__":
    model = VQGANPallas(latent_dim=32, num_codebook_vectors=128, base_r=16,
                        in_channels=1, out_channels=1, seed=0)

    key = jax.random.PRNGKey(0)
    imgs = jax.random.normal(key, (1, 1, 16, 16, 16), jnp.float32)  # NCDHW

    fwd = jax.jit(model.forward)
    decoded, indices, q_loss = fwd(imgs)
    jax.block_until_ready((decoded, indices, q_loss))

    assert decoded.shape == (1, 1, 16, 16, 16), decoded.shape
    assert indices.shape == (1 * 2 * 2 * 2,), indices.shape
    assert q_loss.shape == (), q_loss.shape
    assert bool(jnp.isfinite(q_loss)), q_loss
    print("KERNEL_OK")
</pallas_src>

<mosaic_0001>
module attributes {stable_mosaic.version = 11 : i64} {
  func.func @_fused_vq_kernel(%arg0: i32, %arg1: memref<11xi32, #tpu.memory_space<smem>>, %arg2: memref<1x512xf32, #tpu.memory_space<vmem>>, %arg3: memref<1x32x1xf32, #tpu.memory_space<vmem>>, %arg4: memref<1x32x1xf32, #tpu.memory_space<vmem>>, %arg5: memref<1x256x32xf32, #tpu.memory_space<vmem>>, %arg6: memref<1x256x1xf32, #tpu.memory_space<vmem>>, %arg7: memref<1x256x1xf32, #tpu.memory_space<vmem>>, %arg8: memref<1x1x1xf32, #tpu.memory_space<vmem>>, %arg9: memref<1x512xf32, #tpu.memory_space<vmem>>, %arg10: memref<1x512xi32, #tpu.memory_space<vmem>>, %arg11: memref<1x512xf32, #tpu.memory_space<vmem>>) attributes {dimension_semantics = [#tpu.dimension_semantics<parallel>], iteration_bounds = array<i64: 11>, scalar_prefetch = 1 : i64, scratch_operands = 0 : i64, tpu.core_type = #tpu.core_type<tc>, window_params = [{transform_indices = @transform_0, window_bounds = array<i64: 1, 512>}, {transform_indices = @transform_1, window_bounds = array<i64: 1, 32, 1>}, {transform_indices = @transform_2, window_bounds = array<i64: 1, 32, 1>}, {transform_indices = @transform_3, window_bounds = array<i64: 1, 256, 32>}, {transform_indices = @transform_4, window_bounds = array<i64: 1, 256, 1>}, {transform_indices = @transform_5, window_bounds = array<i64: 1, 256, 1>}, {transform_indices = @transform_6, window_bounds = array<i64: 1, 1, 1>}, {transform_indices = @transform_7, window_bounds = array<i64: 1, 512>}, {transform_indices = @transform_8, window_bounds = array<i64: 1, 512>}, {transform_indices = @transform_9, window_bounds = array<i64: 1, 512>}]} {
    %c0 = arith.constant 0 : index
    %c0_0 = arith.constant 0 : index
    %0 = vector.load %arg2[%c0, %c0_0] : memref<1x512xf32, #tpu.memory_space<vmem>>, vector<1x512xf32>
    %c0_1 = arith.constant 0 : index
    %c0_2 = arith.constant 0 : index
    %c0_3 = arith.constant 0 : index
    %1 = vector.load %arg3[%c0_1, %c0_2, %c0_3] : memref<1x32x1xf32, #tpu.memory_space<vmem>>, vector<1x32x1xf32>
    %2 = vector.shape_cast %1 : vector<1x32x1xf32> to vector<32x1xf32>
    %c0_4 = arith.constant 0 : index
    %c0_5 = arith.constant 0 : index
    %c0_6 = arith.constant 0 : index
    %3 = vector.load %arg4[%c0_4, %c0_5, %c0_6] : memref<1x32x1xf32, #tpu.memory_space<vmem>>, vector<1x32x1xf32>
    %4 = vector.shape_cast %3 : vector<1x32x1xf32> to vector<32x1xf32>
    %5 = vector.broadcast %2 : vector<32x1xf32> to vector<32x512xf32>
    %6 = vector.broadcast %0 : vector<1x512xf32> to vector<32x512xf32>
    %7 = arith.mulf %5, %6 : vector<32x512xf32>
    %8 = vector.broadcast %4 : vector<32x1xf32> to vector<32x512xf32>
    %9 = arith.addf %7, %8 : vector<32x512xf32>
    %10 = arith.mulf %9, %9 : vector<32x512xf32>
    %cst = arith.constant dense<0.000000e+00> : vector<512xf32>
    %11 = vector.multi_reduction <add>, %10, %cst [0] : vector<32x512xf32> to vector<512xf32>
    %12 = vector.shape_cast %11 : vector<512xf32> to vector<1x512xf32>
    %c0_7 = arith.constant 0 : index
    %c0_8 = arith.constant 0 : index
    %c0_9 = arith.constant 0 : index
    %13 = vector.load %arg5[%c0_7, %c0_8, %c0_9] : memref<1x256x32xf32, #tpu.memory_space<vmem>>, vector<1x128x32xf32>
    %14 = vector.shape_cast %13 : vector<1x128x32xf32> to vector<128x32xf32>
    %c0_10 = arith.constant 0 : index
    %c0_11 = arith.constant 0 : index
    %c0_12 = arith.constant 0 : index
    %15 = vector.load %arg6[%c0_10, %c0_11, %c0_12] : memref<1x256x1xf32, #tpu.memory_space<vmem>>, vector<1x128x1xf32>
    %16 = vector.shape_cast %15 : vector<1x128x1xf32> to vector<128x1xf32>
    %cst_13 = arith.constant dense<0.000000e+00> : vector<128x512xf32>
    %17 = tpu.matmul %14, %9, %cst_13 {dimension_numbers = #tpu.dot_dimension_numbers<[1], [0], [0], [1], [0, 0, 1, 1], [], []>} : vector<128x32xf32>, vector<32x512xf32>, vector<128x512xf32> -> vector<128x512xf32>
    %cst_14 = arith.constant 2.000000e+00 : f32
    %18 = vector.broadcast %cst_14 : f32 to vector<128x512xf32>
    %19 = arith.mulf %18, %17 : vector<128x512xf32>
    %20 = vector.broadcast %16 : vector<128x1xf32> to vector<128x512xf32>
    %21 = arith.subf %20, %19 : vector<128x512xf32>
    %22 = vector.broadcast %12 : vector<1x512xf32> to vector<128x512xf32>
    %23 = arith.addf %21, %22 : vector<128x512xf32>
    %cst_15 = arith.constant dense<0x7F800000> : vector<512xf32>
    %24 = vector.multi_reduction <minimumf>, %23, %cst_15 [0] : vector<128x512xf32> to vector<512xf32>
    %25 = vector.shape_cast %24 : vector<512xf32> to vector<1x512xf32>
    %26 = tpu.iota {dimensions = array<i32: 0>} : vector<128x1xi32>
    %c0_i32 = arith.constant 0 : i32
    %27 = vector.broadcast %c0_i32 : i32 to vector<128x1xi32>
    %28 = arith.addi %26, %27 : vector<128x1xi32>
    %29 = vector.broadcast %25 : vector<1x512xf32> to vector<128x512xf32>
    %30 = arith.cmpf ole, %23, %29 : vector<128x512xf32>
    %c256_i32 = arith.constant 256 : i32
    %31 = vector.shape_cast %28 : vector<128x1xi32> to vector<128x1xi32>
    %32 = vector.broadcast %31 : vector<128x1xi32> to vector<128x512xi32>
    %33 = vector.broadcast %c256_i32 : i32 to vector<128x512xi32>
    %34 = arith.select %30, %32, %33 : vector<128x512xi1>, vector<128x512xi32>
    %cst_16 = arith.constant dense<2147483647> : vector<512xi32>
    %35 = vector.multi_reduction <minsi>, %34, %cst_16 [0] : vector<128x512xi32> to vector<512xi32>
    %36 = vector.shape_cast %35 : vector<512xi32> to vector<1x512xi32>
    %c0_17 = arith.constant 0 : index
    %c128 = arith.constant 128 : index
    %c0_18 = arith.constant 0 : index
    %37 = vector.load %arg5[%c0_17, %c128, %c0_18] : memref<1x256x32xf32, #tpu.memory_space<vmem>>, vector<1x128x32xf32>
    %38 = vector.shape_cast %37 : vector<1x128x32xf32> to vector<128x32xf32>
    %c0_19 = arith.constant 0 : index
    %c128_20 = arith.constant 128 : index
    %c0_21 = arith.constant 0 : index
    %39 = vector.load %arg6[%c0_19, %c128_20, %c0_21] : memref<1x256x1xf32, #tpu.memory_space<vmem>>, vector<1x128x1xf32>
    %40 = vector.shape_cast %39 : vector<1x128x1xf32> to vector<128x1xf32>
    %cst_22 = arith.constant dense<0.000000e+00> : vector<128x512xf32>
    %41 = tpu.matmul %38, %9, %cst_22 {dimension_numbers = #tpu.dot_dimension_numbers<[1], [0], [0], [1], [0, 0, 1, 1], [], []>} : vector<128x32xf32>, vector<32x512xf32>, vector<128x512xf32> -> vector<128x512xf32>
    %cst_23 = arith.constant 2.000000e+00 : f32
    %42 = vector.broadcast %cst_23 : f32 to vector<128x512xf32>
    %43 = arith.mulf %42, %41 : vector<128x512xf32>
    %44 = vector.broadcast %40 : vector<128x1xf32> to vector<128x512xf32>
    %45 = arith.subf %44, %43 : vector<128x512xf32>
    %46 = vector.broadcast %12 : vector<1x512xf32> to vector<128x512xf32>
    %47 = arith.addf %45, %46 : vector<128x512xf32>
    %cst_24 = arith.constant dense<0x7F800000> : vector<512xf32>
    %48 = vector.multi_reduction <minimumf>, %47, %cst_24 [0] : vector<128x512xf32> to vector<512xf32>
    %49 = vector.shape_cast %48 : vector<512xf32> to vector<1x512xf32>
    %50 = tpu.iota {dimensions = array<i32: 0>} : vector<128x1xi32>
    %c128_i32 = arith.constant 128 : i32
    %51 = vector.broadcast %c128_i32 : i32 to vector<128x1xi32>
    %52 = arith.addi %50, %51 : vector<128x1xi32>
    %53 = vector.broadcast %49 : vector<1x512xf32> to vector<128x512xf32>
    %54 = arith.cmpf ole, %47, %53 : vector<128x512xf32>
    %c256_i32_25 = arith.constant 256 : i32
    %55 = vector.shape_cast %52 : vector<128x1xi32> to vector<128x1xi32>
    %56 = vector.broadcast %55 : vector<128x1xi32> to vector<128x512xi32>
    %57 = vector.broadcast %c256_i32_25 : i32 to vector<128x512xi32>
    %58 = arith.select %54, %56, %57 : vector<128x512xi1>, vector<128x512xi32>
    %cst_26 = arith.constant dense<2147483647> : vector<512xi32>
    %59 = vector.multi_reduction <minsi>, %58, %cst_26 [0] : vector<128x512xi32> to vector<512xi32>
    %60 = vector.shape_cast %59 : vector<512xi32> to vector<1x512xi32>
    %61 = arith.cmpf olt, %49, %25 : vector<1x512xf32>
    %62 = arith.select %61, %60, %36 : vector<1x512xi1>, vector<1x512xi32>
    %63 = arith.minimumf %25, %49 : vector<1x512xf32>
    %c0_27 = arith.constant 0 : index
    %c0_28 = arith.constant 0 : index
    %64 = vector.load %arg10[%c0_27, %c0_28] : memref<1x512xi32, #tpu.memory_space<vmem>>, vector<1x512xi32>
    tpu.vector_store %arg10[%c0_27, %c0_28], %62 {strides = array<i32>} : memref<1x512xi32, #tpu.memory_space<vmem>>, vector<1x512xi32>,
    %cst_29 = arith.constant 0.000000e+00 : f32
    %65 = vector.broadcast %cst_29 : f32 to vector<1x512xf32>
    %66 = arith.maximumf %63, %65 : vector<1x512xf32>
    %c0_30 = arith.constant 0 : index
    %c0_31 = arith.constant 0 : index
    %67 = vector.load %arg11[%c0_30, %c0_31] : memref<1x512xf32, #tpu.memory_space<vmem>>, vector<1x512xf32>
    tpu.vector_store %arg11[%c0_30, %c0_31], %66 {strides = array<i32>} : memref<1x512xf32, #tpu.memory_space<vmem>>, vector<1x512xf32>,
    %cst_32 = arith.constant 0.000000e+00 : f32
    %68 = vector.broadcast %cst_32 : f32 to vector<1x512xf32>
    %69 = tpu.iota {dimensions = array<i32: 0>} : vector<128x1xi32>
    %c0_i32_33 = arith.constant 0 : i32
    %70 = vector.broadcast %c0_i32_33 : i32 to vector<128x1xi32>
    %71 = arith.addi %69, %70 : vector<128x1xi32>
    %72 = vector.broadcast %71 : vector<128x1xi32> to vector<128x512xi32>
    %73 = vector.broadcast %62 : vector<1x512xi32> to vector<128x512xi32>
    %74 = arith.cmpi eq, %72, %73 : vector<128x512xi32>
    %c0_34 = arith.constant 0 : index
    %c0_35 = arith.constant 0 : index
    %c0_36 = arith.constant 0 : index
    %75 = vector.load %arg7[%c0_34, %c0_35, %c0_36] : memref<1x256x1xf32, #tpu.memory_space<vmem>>, vector<1x128x1xf32>
    %76 = vector.shape_cast %75 : vector<1x128x1xf32> to vector<128x1xf32>
    %cst_37 = arith.constant 0.000000e+00 : f32
    %77 = vector.shape_cast %76 : vector<128x1xf32> to vector<128x1xf32>
    %78 = vector.broadcast %77 : vector<128x1xf32> to vector<128x512xf32>
    %79 = vector.broadcast %cst_37 : f32 to vector<128x512xf32>
    %80 = arith.select %74, %78, %79 : vector<128x512xi1>, vector<128x512xf32>
    %cst_38 = arith.constant dense<0.000000e+00> : vector<512xf32>
    %81 = vector.multi_reduction <add>, %80, %cst_38 [0] : vector<128x512xf32> to vector<512xf32>
    %82 = vector.shape_cast %81 : vector<512xf32> to vector<1x512xf32>
    %83 = arith.addf %68, %82 : vector<1x512xf32>
    %84 = tpu.iota {dimensions = array<i32: 0>} : vector<128x1xi32>
    %c128_i32_39 = arith.constant 128 : i32
    %85 = vector.broadcast %c128_i32_39 : i32 to vector<128x1xi32>
    %86 = arith.addi %84, %85 : vector<128x1xi32>
    %87 = vector.broadcast %86 : vector<128x1xi32> to vector<128x512xi32>
    %88 = vector.broadcast %62 : vector<1x512xi32> to vector<128x512xi32>
    %89 = arith.cmpi eq, %87, %88 : vector<128x512xi32>
    %c0_40 = arith.constant 0 : index
    %c128_41 = arith.constant 128 : index
    %c0_42 = arith.constant 0 : index
    %90 = vector.load %arg7[%c0_40, %c128_41, %c0_42] : memref<1x256x1xf32, #tpu.memory_space<vmem>>, vector<1x128x1xf32>
    %91 = vector.shape_cast %90 : vector<1x128x1xf32> to vector<128x1xf32>
    %cst_43 = arith.constant 0.000000e+00 : f32
    %92 = vector.shape_cast %91 : vector<128x1xf32> to vector<128x1xf32>
    %93 = vector.broadcast %92 : vector<128x1xf32> to vector<128x512xf32>
    %94 = vector.broadcast %cst_43 : f32 to vector<128x512xf32>
    %95 = arith.select %89, %93, %94 : vector<128x512xi1>, vector<128x512xf32>
    %cst_44 = arith.constant dense<0.000000e+00> : vector<512xf32>
    %96 = vector.multi_reduction <add>, %95, %cst_44 [0] : vector<128x512xf32> to vector<512xf32>
    %97 = vector.shape_cast %96 : vector<512xf32> to vector<1x512xf32>
    %98 = arith.addf %83, %97 : vector<1x512xf32>
    %c0_45 = arith.constant 0 : index
    %c0_46 = arith.constant 0 : index
    %c0_47 = arith.constant 0 : index
    %99 = vector.load %arg8[%c0_45, %c0_46, %c0_47] : memref<1x1x1xf32, #tpu.memory_space<vmem>>, vector<1x1x1xf32>
    %100 = vector.shape_cast %99 : vector<1x1x1xf32> to vector<1x1xf32>
    %101 = vector.broadcast %100 : vector<1x1xf32> to vector<1x512xf32>
    %102 = arith.addf %98, %101 : vector<1x512xf32>
    %c0_48 = arith.constant 0 : index
    %c0_49 = arith.constant 0 : index
    %103 = vector.load %arg9[%c0_48, %c0_49] : memref<1x512xf32, #tpu.memory_space<vmem>>, vector<1x512xf32>
    tpu.vector_store %arg9[%c0_48, %c0_49], %102 {strides = array<i32>} : memref<1x512xf32, #tpu.memory_space<vmem>>, vector<1x512xf32>,
    return
  }
  func.func @transform_0(%arg0: i32, %arg1: memref<11xi32, #tpu.memory_space<smem>>) -> (i32, i32) {
    %c0_i32 = arith.constant 0 : i32
    %c0_i32_0 = arith.constant 0 : i32
    return %c0_i32, %arg0 : i32, i32
  }
  func.func @transform_1(%arg0: i32, %arg1: memref<11xi32, #tpu.memory_space<smem>>) -> (i32, i32, i32) {
    %0 = arith.index_cast %arg0 : i32 to index
    %1 = memref.load %arg1[%0] : memref<11xi32, #tpu.memory_space<smem>>
    %c0_i32 = arith.constant 0 : i32
    %c0_i32_0 = arith.constant 0 : i32
    %c0_i32_1 = arith.constant 0 : i32
    return %1, %c0_i32, %c0_i32_0 : i32, i32, i32
  }
  func.func @transform_2(%arg0: i32, %arg1: memref<11xi32, #tpu.memory_space<smem>>) -> (i32, i32, i32) {
    %0 = arith.index_cast %arg0 : i32 to index
    %1 = memref.load %arg1[%0] : memref<11xi32, #tpu.memory_space<smem>>
    %c0_i32 = arith.constant 0 : i32
    %c0_i32_0 = arith.constant 0 : i32
    %c0_i32_1 = arith.constant 0 : i32
    return %1, %c0_i32, %c0_i32_0 : i32, i32, i32
  }
  func.func @transform_3(%arg0: i32, %arg1: memref<11xi32, #tpu.memory_space<smem>>) -> (i32, i32, i32) {
    %0 = arith.index_cast %arg0 : i32 to index
    %1 = memref.load %arg1[%0] : memref<11xi32, #tpu.memory_space<smem>>
    %c0_i32 = arith.constant 0 : i32
    %c0_i32_0 = arith.constant 0 : i32
    %c0_i32_1 = arith.constant 0 : i32
    return %1, %c0_i32, %c0_i32_0 : i32, i32, i32
  }
  func.func @transform_4(%arg0: i32, %arg1: memref<11xi32, #tpu.memory_space<smem>>) -> (i32, i32, i32) {
    %0 = arith.index_cast %arg0 : i32 to index
    %1 = memref.load %arg1[%0] : memref<11xi32, #tpu.memory_space<smem>>
    %c0_i32 = arith.constant 0 : i32
    %c0_i32_0 = arith.constant 0 : i32
    %c0_i32_1 = arith.constant 0 : i32
    return %1, %c0_i32, %c0_i32_0 : i32, i32, i32
  }
  func.func @transform_5(%arg0: i32, %arg1: memref<11xi32, #tpu.memory_space<smem>>) -> (i32, i32, i32) {
    %0 = arith.index_cast %arg0 : i32 to index
    %1 = memref.load %arg1[%0] : memref<11xi32, #tpu.memory_space<smem>>
    %c0_i32 = arith.constant 0 : i32
    %c0_i32_0 = arith.constant 0 : i32
    %c0_i32_1 = arith.constant 0 : i32
    return %1, %c0_i32, %c0_i32_0 : i32, i32, i32
  }
  func.func @transform_6(%arg0: i32, %arg1: memref<11xi32, #tpu.memory_space<smem>>) -> (i32, i32, i32) {
    %0 = arith.index_cast %arg0 : i32 to index
    %1 = memref.load %arg1[%0] : memref<11xi32, #tpu.memory_space<smem>>
    %c0_i32 = arith.constant 0 : i32
    %c0_i32_0 = arith.constant 0 : i32
    %c0_i32_1 = arith.constant 0 : i32
    return %1, %c0_i32, %c0_i32_0 : i32, i32, i32
  }
  func.func @transform_7(%arg0: i32, %arg1: memref<11xi32, #tpu.memory_space<smem>>) -> (i32, i32) {
    %c0_i32 = arith.constant 0 : i32
    %c0_i32_0 = arith.constant 0 : i32
    return %c0_i32, %arg0 : i32, i32
  }
  func.func @transform_8(%arg0: i32, %arg1: memref<11xi32, #tpu.memory_space<smem>>) -> (i32, i32) {
    %c0_i32 = arith.constant 0 : i32
    %c0_i32_0 = arith.constant 0 : i32
    return %c0_i32, %arg0 : i32, i32
  }
  func.func @transform_9(%arg0: i32, %arg1: memref<11xi32, #tpu.memory_space<smem>>) -> (i32, i32) {
    %c0_i32 = arith.constant 0 : i32
    %c0_i32_0 = arith.constant 0 : i32
    return %c0_i32, %arg0 : i32, i32
  }
}

</mosaic_0001>

<llo_original>
// kernel: forward.1
$region0: #{forward.1}
  #allocation0 [shape = 'u32[]', space=smem, size = 0x4, offset = 0x4, fixed_abs, tag = 'smem constant byte address 0x4 - core index']
  #allocation1 [shape = 'u32[144,128]{1,0:T(1,128)}', space=vmem, size = 0x12000, scoped, tag = 'internal scratch']
  #allocation2 [shape = 's32[1]{0}', space=sflag, size = 0x4, scoped, tag = 'scoped memory for forward.1']
  #allocation3 [shape = 'u8[512]{0}', space=smem, size = 0x200, scoped, tag = 'prefetched SMEM operand 0']
  %s0 = inlined_call_operand.vmem [shape: s32[11], index: 0, kind: input, shape index: {}]
  %s1 = inlined_call_operand.vmem [shape: f32[1,5632], index: 1, kind: input, shape index: {}]
  %s2 = inlined_call_operand.vmem [shape: f32[4,32,1], index: 2, kind: input, shape index: {}]
  %s3 = inlined_call_operand.vmem [shape: f32[4,32,1], index: 3, kind: input, shape index: {}]
  %s4 = inlined_call_operand.vmem [shape: f32[4,256,32], index: 4, kind: input, shape index: {}]
  %s5 = inlined_call_operand.vmem [shape: f32[4,256,1], index: 5, kind: input, shape index: {}]
  %s6 = inlined_call_operand.vmem [shape: f32[4,256,1], index: 6, kind: input, shape index: {}]
  %s7 = inlined_call_operand.vmem [shape: f32[4,1,1], index: 7, kind: input, shape index: {}]
  %s8 = inlined_call_operand.vmem [shape: f32[1,5632], index: 8, kind: output, shape index: {0}]
  %s9 = inlined_call_operand.vmem [shape: s32[1,5632], index: 9, kind: output, shape index: {1}]
  %s10 = inlined_call_operand.vmem [shape: f32[1,5632], index: 10, kind: output, shape index: {2}]
  %11 = xla_tuple %s8, %s9, %s10
  %s12 = sld [smem:[#allocation0]]
  $region77: #{forward.1} parent=0
    _
  %s14 = ssub.s32 1, %s12
  %s15 = scalar_select 0, %s14, %s12
  %s16 = sshll.u32 %s0, 4
  %s17 = int_to_ptr.vmem [resolvable:$true] %s16
  %19 = dma.vmem_to_smem %s17, 16, [#allocation3], [#allocation2]
  %20 = dma.done [#allocation2], 16
  %21 = sfence
  loop: start=0, step=1, limit=13
  $region2: #{forward.1} parent=0 // loop_pre_header
    _
  $region3: #{forward.1} parent=0 // loop_header
    %s23 = sphi 0, %s27
    %p24 = scmp.ge.s32.totalorder %s23, 13
    %s33 = sphi 0, %s35
    %s36 = sphi 0, %s33
    %s37 = sphi 0, %s36
    %s53 = sphi 0, %s37
    %s61 = sphi 0, %s63
    %s64 = sphi 0, %s61
    %s65 = sphi 0, %s64
    %s81 = sphi 0, %s65
    %s89 = sphi 0, %s91
    %s92 = sphi 0, %s89
    %s93 = sphi 0, %s92
    %s109 = sphi 0, %s93
    %s117 = sphi 0, %s119
    %s120 = sphi 0, %s117
    %s121 = sphi 0, %s120
    %s137 = sphi 0, %s121
    %s145 = sphi 0, %s147
    %s148 = sphi 0, %s145
    %s149 = sphi 0, %s148
    %s165 = sphi 0, %s149
    %s173 = sphi 0, %s175
    %s176 = sphi 0, %s173
    %s177 = sphi 0, %s176
    %s193 = sphi 0, %s177
    %s201 = sphi 0, %s203
    %s204 = sphi 0, %s201
    %s205 = sphi 0, %s204
    %s221 = sphi 0, %s205
    %s227 = sphi 0, %s229
    %s230 = sphi 0, %s227
    %s231 = sphi 0, %s230
    %s247 = sphi 0, %s231
    %s253 = sphi 0, %s255
    %s256 = sphi 0, %s253
    %s257 = sphi 0, %s256
    %s273 = sphi 0, %s257
    %s279 = sphi 0, %s281
    %s282 = sphi 0, %s279
    %s283 = sphi 0, %s282
    %s299 = sphi 0, %s283
  $region4: #{forward.1} parent=0 // loop_header_branch
    %26 = sbr.rel (%p24) target = $region8
  $region5: #{forward.1} parent=0 // loop_body
    %s28 = ssub.s32 %s23, 1
    %s29 = ssub.s32 %s23, 2
    %s30 = sadd.s32 %s23, 1
    %s31 = ssub.s32 %s23, %s30
    %p32 = scmp.eq.s32.totalorder %s31, 0
    %s34 = sadd.s32 %s33, 1
    %s35 = scalar_select %p32, %s33, %s34
    %p38 = pneg %p32
    %p39 = scmp.eq.s32.totalorder %s23, 10
    %p40 = por %p38, %p39
    %p41 = scmp.ne.s32.totalorder %s33, %s36
    %p42 = scmp.eq.s32.totalorder %s23, 0
    %p43 = por %p41, %p42
    %p44 = scmp.ne.s32.totalorder %s33, %s36
    %p45 = scmp.eq.s32.totalorder %s28, 10
    %p46 = por %p44, %p45
    %p47 = scmp.ne.s32.totalorder %s36, %s37
    %p48 = scmp.eq.s32.totalorder %s28, 0
    %p49 = por %p47, %p48
    %p50 = scmp.ne.s32.totalorder %s36, %s37
    %p51 = scmp.eq.s32.totalorder %s29, 10
    %p52 = por %p50, %p51
    %p54 = scmp.ne.s32.totalorder %s37, %s53
    %p55 = scmp.eq.s32.totalorder %s29, 0
    %p56 = por %p54, %p55
    %s57 = sld [smem:[#allocation3 + %s23]]
    %s58 = sld [smem:[#allocation3 + %s30]]
    %s59 = ssub.s32 %s57, %s58
    %p60 = scmp.eq.s32.totalorder %s59, 0
    %s62 = sadd.s32 %s61, 1
    %s63 = scalar_select %p60, %s61, %s62
    %p66 = pneg %p60
    %p67 = scmp.eq.s32.totalorder %s23, 10
    %p68 = por %p66, %p67
    %p69 = scmp.ne.s32.totalorder %s61, %s64
    %p70 = scmp.eq.s32.totalorder %s23, 0
    %p71 = por %p69, %p70
    %p72 = scmp.ne.s32.totalorder %s61, %s64
    %p73 = scmp.eq.s32.totalorder %s28, 10
    %p74 = por %p72, %p73
    %p75 = scmp.ne.s32.totalorder %s64, %s65
    %p76 = scmp.eq.s32.totalorder %s28, 0
    %p77 = por %p75, %p76
    %p78 = scmp.ne.s32.totalorder %s64, %s65
    %p79 = scmp.eq.s32.totalorder %s29, 10
    %p80 = por %p78, %p79
    %p82 = scmp.ne.s32.totalorder %s65, %s81
    %p83 = scmp.eq.s32.totalorder %s29, 0
    %p84 = por %p82, %p83
    %s85 = sld [smem:[#allocation3 + %s23]]
    %s86 = sld [smem:[#allocation3 + %s30]]
    %s87 = ssub.s32 %s85, %s86
    %p88 = scmp.eq.s32.totalorder %s87, 0
    %s90 = sadd.s32 %s89, 1
    %s91 = scalar_select %p88, %s89, %s90
    %p94 = pneg %p88
    %p95 = scmp.eq.s32.totalorder %s23, 10
    %p96 = por %p94, %p95
    %p97 = scmp.ne.s32.totalorder %s89, %s92
    %p98 = scmp.eq.s32.totalorder %s23, 0
    %p99 = por %p97, %p98
    %p100 = scmp.ne.s32.totalorder %s89, %s92
    %p101 = scmp.eq.s32.totalorder %s28, 10
    %p102 = por %p100, %p101
    %p103 = scmp.ne.s32.totalorder %s92, %s93
    %p104 = scmp.eq.s32.totalorder %s28, 0
    %p105 = por %p103, %p104
    %p106 = scmp.ne.s32.totalorder %s92, %s93
    %p107 = scmp.eq.s32.totalorder %s29, 10
    %p108 = por %p106, %p107
    %p110 = scmp.ne.s32.totalorder %s93, %s109
    %p111 = scmp.eq.s32.totalorder %s29, 0
    %p112 = por %p110, %p111
    %s113 = sld [smem:[#allocation3 + %s23]]
    %s114 = sld [smem:[#allocation3 + %s30]]
    %s115 = ssub.s32 %s113, %s114
    %p116 = scmp.eq.s32.totalorder %s115, 0
    %s118 = sadd.s32 %s117, 1
    %s119 = scalar_select %p116, %s117, %s118
    %p122 = pneg %p116
    %p123 = scmp.eq.s32.totalorder %s23, 10
    %p124 = por %p122, %p123
    %p125 = scmp.ne.s32.totalorder %s117, %s120
    %p126 = scmp.eq.s32.totalorder %s23, 0
    %p127 = por %p125, %p126
    %p128 = scmp.ne.s32.totalorder %s117, %s120
    %p129 = scmp.eq.s32.totalorder %s28, 10
    %p130 = por %p128, %p129
    %p131 = scmp.ne.s32.totalorder %s120, %s121
    %p132 = scmp.eq.s32.totalorder %s28, 0
    %p133 = por %p131, %p132
    %p134 = scmp.ne.s32.totalorder %s120, %s121
    %p135 = scmp.eq.s32.totalorder %s29, 10
    %p136 = por %p134, %p135
    %p138 = scmp.ne.s32.totalorder %s121, %s137
    %p139 = scmp.eq.s32.totalorder %s29, 0
    %p140 = por %p138, %p139
    %s141 = sld [smem:[#allocation3 + %s23]]
    %s142 = sld [smem:[#allocation3 + %s30]]
    %s143 = ssub.s32 %s141, %s142
    %p144 = scmp.eq.s32.totalorder %s143, 0
    %s146 = sadd.s32 %s145, 1
    %s147 = scalar_select %p144, %s145, %s146
    %p150 = pneg %p144
    %p151 = scmp.eq.s32.totalorder %s23, 10
    %p152 = por %p150, %p151
    %p153 = scmp.ne.s32.totalorder %s145, %s148
    %p154 = scmp.eq.s32.totalorder %s23, 0
    %p155 = por %p153, %p154
    %p156 = scmp.ne.s32.totalorder %s145, %s148
    %p157 = scmp.eq.s32.totalorder %s28, 10
    %p158 = por %p156, %p157
    %p159 = scmp.ne.s32.totalorder %s148, %s149
    %p160 = scmp.eq.s32.totalorder %s28, 0
    %p161 = por %p159, %p160
    %p162 = scmp.ne.s32.totalorder %s148, %s149
    %p163 = scmp.eq.s32.totalorder %s29, 10
    %p164 = por %p162, %p163
    %p166 = scmp.ne.s32.totalorder %s149, %s165
    %p167 = scmp.eq.s32.totalorder %s29, 0
    %p168 = por %p166, %p167
    %s169 = sld [smem:[#allocation3 + %s23]]
    %s170 = sld [smem:[#allocation3 + %s30]]
    %s171 = ssub.s32 %s169, %s170
    %p172 = scmp.eq.s32.totalorder %s171, 0
    %s174 = sadd.s32 %s173, 1
    %s175 = scalar_select %p172, %s173, %s174
    %p178 = pneg %p172
    %p179 = scmp.eq.s32.totalorder %s23, 10
    %p180 = por %p178, %p179
    %p181 = scmp.ne.s32.totalorder %s173, %s176
    %p182 = scmp.eq.s32.totalorder %s23, 0
    %p183 = por %p181, %p182
    %p184 = scmp.ne.s32.totalorder %s173, %s176
    %p185 = scmp.eq.s32.totalorder %s28, 10
    %p186 = por %p184, %p185
    %p187 = scmp.ne.s32.totalorder %s176, %s177
    %p188 = scmp.eq.s32.totalorder %s28, 0
    %p189 = por %p187, %p188
    %p190 = scmp.ne.s32.totalorder %s176, %s177
    %p191 = scmp.eq.s32.totalorder %s29, 10
    %p192 = por %p190, %p191
    %p194 = scmp.ne.s32.totalorder %s177, %s193
    %p195 = scmp.eq.s32.totalorder %s29, 0
    %p196 = por %p194, %p195
    %s197 = sld [smem:[#allocation3 + %s23]]
    %s198 = sld [smem:[#allocation3 + %s30]]
    %s199 = ssub.s32 %s197, %s198
    %p200 = scmp.eq.s32.totalorder %s199, 0
    %s202 = sadd.s32 %s201, 1
    %s203 = scalar_select %p200, %s201, %s202
    %p206 = pneg %p200
    %p207 = scmp.eq.s32.totalorder %s23, 10
    %p208 = por %p206, %p207
    %p209 = scmp.ne.s32.totalorder %s201, %s204
    %p210 = scmp.eq.s32.totalorder %s23, 0
    %p211 = por %p209, %p210
    %p212 = scmp.ne.s32.totalorder %s201, %s204
    %p213 = scmp.eq.s32.totalorder %s28, 10
    %p214 = por %p212, %p213
    %p215 = scmp.ne.s32.totalorder %s204, %s205
    %p216 = scmp.eq.s32.totalorder %s28, 0
    %p217 = por %p215, %p216
    %p218 = scmp.ne.s32.totalorder %s204, %s205
    %p219 = scmp.eq.s32.totalorder %s29, 10
    %p220 = por %p218, %p219
    %p222 = scmp.ne.s32.totalorder %s205, %s221
    %p223 = scmp.eq.s32.totalorder %s29, 0
    %p224 = por %p222, %p223
    %s225 = ssub.s32 %s23, %s30
    %p226 = scmp.eq.s32.totalorder %s225, 0
    %s228 = sadd.s32 %s227, 1
    %s229 = scalar_select %p226, %s227, %s228
    %p232 = pneg %p226
    %p233 = scmp.eq.s32.totalorder %s23, 10
    %p234 = por %p232, %p233
    %p235 = scmp.ne.s32.totalorder %s227, %s230
    %p236 = scmp.eq.s32.totalorder %s23, 0
    %p237 = por %p235, %p236
    %p238 = scmp.ne.s32.totalorder %s227, %s230
    %p239 = scmp.eq.s32.totalorder %s28, 10
    %p240 = por %p238, %p239
    %p241 = scmp.ne.s32.totalorder %s230, %s231
    %p242 = scmp.eq.s32.totalorder %s28, 0
    %p243 = por %p241, %p242
    %p244 = scmp.ne.s32.totalorder %s230, %s231
    %p245 = scmp.eq.s32.totalorder %s29, 10
    %p246 = por %p244, %p245
    %p248 = scmp.ne.s32.totalorder %s231, %s247
    %p249 = scmp.eq.s32.totalorder %s29, 0
    %p250 = por %p248, %p249
    %s251 = ssub.s32 %s23, %s30
    %p252 = scmp.eq.s32.totalorder %s251, 0
    %s254 = sadd.s32 %s253, 1
    %s255 = scalar_select %p252, %s253, %s254
    %p258 = pneg %p252
    %p259 = scmp.eq.s32.totalorder %s23, 10
    %p260 = por %p258, %p259
    %p261 = scmp.ne.s32.totalorder %s253, %s256
    %p262 = scmp.eq.s32.totalorder %s23, 0
    %p263 = por %p261, %p262
    %p264 = scmp.ne.s32.totalorder %s253, %s256
    %p265 = scmp.eq.s32.totalorder %s28, 10
    %p266 = por %p264, %p265
    %p267 = scmp.ne.s32.totalorder %s256, %s257
    %p268 = scmp.eq.s32.totalorder %s28, 0
    %p269 = por %p267, %p268
    %p270 = scmp.ne.s32.totalorder %s256, %s257
    %p271 = scmp.eq.s32.totalorder %s29, 10
    %p272 = por %p270, %p271
    %p274 = scmp.ne.s32.totalorder %s257, %s273
    %p275 = scmp.eq.s32.totalorder %s29, 0
    %p276 = por %p274, %p275
    %s277 = ssub.s32 %s23, %s30
    %p278 = scmp.eq.s32.totalorder %s277, 0
    %s280 = sadd.s32 %s279, 1
    %s281 = scalar_select %p278, %s279, %s280
    %p284 = pneg %p278
    %p285 = scmp.eq.s32.totalorder %s23, 10
    %p286 = por %p284, %p285
    %p287 = scmp.ne.s32.totalorder %s279, %s282
    %p288 = scmp.eq.s32.totalorder %s23, 0
    %p289 = por %p287, %p288
    %p290 = scmp.ne.s32.totalorder %s279, %s282
    %p291 = scmp.eq.s32.totalorder %s28, 10
    %p292 = por %p290, %p291
    %p293 = scmp.ne.s32.totalorder %s282, %s283
    %p294 = scmp.eq.s32.totalorder %s28, 0
    %p295 = por %p293, %p294
    %p296 = scmp.ne.s32.totalorder %s282, %s283
    %p297 = scmp.eq.s32.totalorder %s29, 10
    %p298 = por %p296, %p297
    %p300 = scmp.ne.s32.totalorder %s283, %s299
    %p301 = scmp.eq.s32.totalorder %s29, 0
    %p302 = por %p300, %p301
    %p303 = scmp.le.s32.totalorder 1, %s23
    %p304 = scmp.lt.s32.totalorder %s23, 12
    %p305 = pnand %p303, %p304
    %p306 = pneg %p305
    // Predicated region
    $region9: #{forward.1} parent=5 // pred_check
      _
    $region10: #{forward.1} parent=5 // pred_check_branch
      %308 = sbr.rel (%p305) target = $region12
    $region11: #{forward.1} parent=5 // pred_region
      %s309 = ssub.s32 %s23, 1
    $region12: #{forward.1} parent=5 // pred_fallthru
      _
    %p310 = scmp.lt.s32.totalorder %s23, 11
    // Predicated region
    $region13: #{forward.1} parent=5 // pred_check
      %p311 = pneg %p310
    $region14: #{forward.1} parent=5 // pred_check_branch
      %313 = sbr.rel (%p311) target = $region16
    $region15: #{forward.1} parent=5 // pred_region
      // Predicated region
      $region17: #{forward.1} parent=15 // pred_check
        %p314 = pneg %p43
      $region18: #{forward.1} parent=15 // pred_check_branch
        %316 = sbr.rel (%p314) target = $region20
      $region19: #{forward.1} parent=15 // pred_region
        %s317 = smul.u32 4, %s23
        %p318 = scmp.lt.s32.totalorder %s317, 43
        %s319 = scalar_select %p318, %s317, 43
        %s320 = scalar_lea.vmem %s1, %s319
        %s321 = smul.u32 4, %s23
      $region20: #{forward.1} parent=15 // pred_fallthru
        _
      // Predicated region
      $region21: #{forward.1} parent=15 // pred_check
        %p322 = pneg %p71
      $region22: #{forward.1} parent=15 // pred_check_branch
        %324 = sbr.rel (%p322) target = $region24
      $region23: #{forward.1} parent=15 // pred_region
        %s325 = sld [smem:[#allocation3 + %s23]]
        %p326 = scmp.lt.s32.totalorder %s325, 3
        %s327 = scalar_select %p326, %s325, 3
        %s328 = smul.addr %s327, 4
        %s329 = smul.addr %s328, 8
        %s330 = scalar_lea.vmem %s2, %s329
        %s331 = sld [smem:[#allocation3 + %s23]]
      $region24: #{forward.1} parent=15 // pred_fallthru
        _
      // Predicated region
      $region25: #{forward.1} parent=15 // pred_check
        %p332 = pneg %p99
      $region26: #{forward.1} parent=15 // pred_check_branch
        %334 = sbr.rel (%p332) target = $region28
      $region27: #{forward.1} parent=15 // pred_region
        %s335 = sld [smem:[#allocation3 + %s23]]
        %p336 = scmp.lt.s32.totalorder %s335, 3
        %s337 = scalar_select %p336, %s335, 3
        %s338 = smul.addr %s337, 4
        %s339 = smul.addr %s338, 8
        %s340 = scalar_lea.vmem %s3, %s339
        %s341 = sld [smem:[#allocation3 + %s23]]
      $region28: #{forward.1} parent=15 // pred_fallthru
        _
      // Predicated region
      $region29: #{forward.1} parent=15 // pred_check
        %p342 = pneg %p127
      $region30: #{forward.1} parent=15 // pred_check_branch
        %344 = sbr.rel (%p342) target = $region32
      $region31: #{forward.1} parent=15 // pred_region
        %s345 = sld [smem:[#allocation3 + %s23]]
        %p346 = scmp.lt.s32.totalorder %s345, 3
        %s347 = scalar_select %p346, %s345, 3
        %s348 = smul.addr %s347, 32
        %s349 = smul.addr %s348, 8
        %s350 = scalar_lea.vmem %s4, %s349
        %s351 = sld [smem:[#allocation3 + %s23]]
      $region32: #{forward.1} parent=15 // pred_fallthru
        _
      // Predicated region
      $region33: #{forward.1} parent=15 // pred_check
        %p352 = pneg %p155
      $region34: #{forward.1} parent=15 // pred_check_branch
        %354 = sbr.rel (%p352) target = $region36
      $region35: #{forward.1} parent=15 // pred_region
        %s355 = sld [smem:[#allocation3 + %s23]]
        %p356 = scmp.lt.s32.totalorder %s355, 3
        %s357 = scalar_select %p356, %s355, 3
        %s358 = smul.addr %s357, 32
        %s359 = smul.addr %s358, 8
        %s360 = scalar_lea.vmem %s5, %s359
        %s361 = sld [smem:[#allocation3 + %s23]]
      $region36: #{forward.1} parent=15 // pred_fallthru
        _
      // Predicated region
      $region37: #{forward.1} parent=15 // pred_check
        %p362 = pneg %p183
      $region38: #{forward.1} parent=15 // pred_check_branch
        %364 = sbr.rel (%p362) target = $region40
      $region39: #{forward.1} parent=15 // pred_region
        %s365 = sld [smem:[#allocation3 + %s23]]
        %p366 = scmp.lt.s32.totalorder %s365, 3
        %s367 = scalar_select %p366, %s365, 3
        %s368 = smul.addr %s367, 32
        %s369 = smul.addr %s368, 8
        %s370 = scalar_lea.vmem %s6, %s369
        %s371 = sld [smem:[#allocation3 + %s23]]
      $region40: #{forward.1} parent=15 // pred_fallthru
        _
      // Predicated region
      $region41: #{forward.1} parent=15 // pred_check
        %p372 = pneg %p211
      $region42: #{forward.1} parent=15 // pred_check_branch
        %374 = sbr.rel (%p372) target = $region44
      $region43: #{forward.1} parent=15 // pred_region
        %s375 = sld [smem:[#allocation3 + %s23]]
        %p376 = scmp.lt.s32.totalorder %s375, 3
        %s377 = scalar_select %p376, %s375, 3
        %s378 = scalar_lea.vmem %s7, %s377
        %s379 = sld [smem:[#allocation3 + %s23]]
      $region44: #{forward.1} parent=15 // pred_fallthru
        _
    $region16: #{forward.1} parent=5 // pred_fallthru
      _
    %p380 = scmp.le.s32.totalorder 1, %s23
    %p381 = scmp.lt.s32.totalorder %s23, 12
    %p382 = pnand %p380, %p381
    %p383 = pneg %p382
    // Predicated region
    $region45: #{forward.1} parent=5 // pred_check
      _
    $region46: #{forward.1} parent=5 // pred_check_branch
      %385 = sbr.rel (%p382) target = $region48
    $region47: #{forward.1} parent=5 // pred_region
      %s386 = ssub.s32 %s23, 1
      %s387 = smul.u32 4, %s28
      %p388 = scmp.lt.s32.totalorder %s387, 43
      %s389 = scalar_select %p388, %s387, 43
      %s390 = scalar_lea.vmem %s1, %s389
      %p391 = pneg %p49
      %p392 = pneg %p46
      %s393 = sld [smem:[#allocation3 + %s28]]
      %p394 = scmp.lt.s32.totalorder %s393, 3
      %s395 = scalar_select %p394, %s393, 3
      %s396 = smul.addr %s395, 4
      %s397 = smul.addr %s396, 8
      %s398 = scalar_lea.vmem %s2, %s397
      %p399 = pneg %p77
      %p400 = pneg %p74
      %s401 = sld [smem:[#allocation3 + %s28]]
      %p402 = scmp.lt.s32.totalorder %s401, 3
      %s403 = scalar_select %p402, %s401, 3
      %s404 = smul.addr %s403, 4
      %s405 = smul.addr %s404, 8
      %s406 = scalar_lea.vmem %s3, %s405
      %p407 = pneg %p105
      %p408 = pneg %p102
      %s409 = sld [smem:[#allocation3 + %s28]]
      %p410 = scmp.lt.s32.totalorder %s409, 3
      %s411 = scalar_select %p410, %s409, 3
      %s412 = smul.addr %s411, 32
      %s413 = smul.addr %s412, 8
      %s414 = scalar_lea.vmem %s4, %s413
      %p415 = pneg %p133
      %p416 = pneg %p130
      %s417 = sld [smem:[#allocation3 + %s28]]
      %p418 = scmp.lt.s32.totalorder %s417, 3
      %s419 = scalar_select %p418, %s417, 3
      %s420 = smul.addr %s419, 32
      %s421 = smul.addr %s420, 8
      %s422 = scalar_lea.vmem %s5, %s421
      %p423 = pneg %p161
      %p424 = pneg %p158
      %s425 = sld [smem:[#allocation3 + %s28]]
      %p426 = scmp.lt.s32.totalorder %s425, 3
      %s427 = scalar_select %p426, %s425, 3
      %s428 = smul.addr %s427, 32
      %s429 = smul.addr %s428, 8
      %s430 = scalar_lea.vmem %s6, %s429
      %p431 = pneg %p189
      %p432 = pneg %p186
      %s433 = sld [smem:[#allocation3 + %s28]]
      %p434 = scmp.lt.s32.totalorder %s433, 3
      %s435 = scalar_select %p434, %s433, 3
      %s436 = scalar_lea.vmem %s7, %s435
      %p437 = pneg %p217
      %p438 = pneg %p214
      %p439 = pneg %p243
      %p440 = pneg %p240
      %s441 = smul.u32 4, %s28
      %p442 = scmp.lt.s32.totalorder %s441, 43
      %s443 = scalar_select %p442, %s441, 43
      %s444 = scalar_lea.vmem %s8, %s443
      %p445 = pneg %p269
      %p446 = pneg %p266
      %s447 = smul.u32 4, %s28
      %p448 = scmp.lt.s32.totalorder %s447, 43
      %s449 = scalar_select %p448, %s447, 43
      %s450 = scalar_lea.vmem %s9, %s449
      %p451 = pneg %p295
      %p452 = pneg %p292
      %s453 = smul.u32 4, %s28
      %p454 = scmp.lt.s32.totalorder %s453, 43
      %s455 = scalar_select %p454, %s453, 43
      %s456 = scalar_lea.vmem %s10, %s455
      %s457 = smul.u32 4, %s28
      %p458 = scmp.lt.s32.totalorder %s457, 43
      %s459 = scalar_select %p458, %s457, 43
      %s460 = scalar_lea.vmem %s1, %s459
      %s461 = smul.u32 4, %s28
      %s462 = sld [smem:[#allocation3 + %s28]]
      %p463 = scmp.lt.s32.totalorder %s462, 3
      %s464 = scalar_select %p463, %s462, 3
      %s465 = smul.addr %s464, 4
      %s466 = smul.addr %s465, 8
      %s467 = scalar_lea.vmem %s2, %s466
      %s468 = sld [smem:[#allocation3 + %s28]]
      %s469 = sld [smem:[#allocation3 + %s28]]
      %p470 = scmp.lt.s32.totalorder %s469, 3
      %s471 = scalar_select %p470, %s469, 3
      %s472 = smul.addr %s471, 4
      %s473 = smul.addr %s472, 8
      %s474 = scalar_lea.vmem %s3, %s473
      %s475 = sld [smem:[#allocation3 + %s28]]
      %s476 = sld [smem:[#allocation3 + %s28]]
      %p477 = scmp.lt.s32.totalorder %s476, 3
      %s478 = scalar_select %p477, %s476, 3
      %s479 = smul.addr %s478, 32
      %s480 = smul.addr %s479, 8
      %s481 = scalar_lea.vmem %s4, %s480
      %s482 = sld [smem:[#allocation3 + %s28]]
      %s483 = sld [smem:[#allocation3 + %s28]]
      %p484 = scmp.lt.s32.totalorder %s483, 3
      %s485 = scalar_select %p484, %s483, 3
      %s486 = smul.addr %s485, 32
      %s487 = smul.addr %s486, 8
      %s488 = scalar_lea.vmem %s5, %s487
      %s489 = sld [smem:[#allocation3 + %s28]]
      %s490 = sld [smem:[#allocation3 + %s28]]
      %p491 = scmp.lt.s32.totalorder %s490, 3
      %s492 = scalar_select %p491, %s490, 3
      %s493 = smul.addr %s492, 32
      %s494 = smul.addr %s493, 8
      %s495 = scalar_lea.vmem %s6, %s494
      %s496 = sld [smem:[#allocation3 + %s28]]
      %s497 = sld [smem:[#allocation3 + %s28]]
      %p498 = scmp.lt.s32.totalorder %s497, 3
      %s499 = scalar_select %p498, %s497, 3
      %s500 = scalar_lea.vmem %s7, %s499
      %s501 = sld [smem:[#allocation3 + %s28]]
      %s502 = smul.u32 4, %s28
      %p503 = scmp.lt.s32.totalorder %s502, 43
      %s504 = scalar_select %p503, %s502, 43
      %s505 = scalar_lea.vmem %s8, %s504
      %s506 = smul.u32 4, %s28
      %s507 = smul.u32 4, %s28
      %p508 = scmp.lt.s32.totalorder %s507, 43
      %s509 = scalar_select %p508, %s507, 43
      %s510 = scalar_lea.vmem %s9, %s509
      %s511 = smul.u32 4, %s28
      %s512 = smul.u32 4, %s28
      %p513 = scmp.lt.s32.totalorder %s512, 43
      %s514 = scalar_select %p513, %s512, 43
      %s515 = scalar_lea.vmem %s10, %s514
      %s516 = smul.u32 4, %s28
      %v517 = vld [vmem:[%s460] sm:$0xf]
      %v518 = vld [vmem:[%s467] sm:$0xff]
      %v519 = vld [vmem:[%s467 + $0x8] sm:$0xff]
      %v520 = vld [vmem:[%s467 + $0x10] sm:$0xff]
      %v521 = vld [vmem:[%s467 + $0x18] sm:$0xff]
      %v522 = vld [vmem:[%s474] sm:$0xff]
      %v523 = vld [vmem:[%s474 + $0x8] sm:$0xff]
      %v524 = vld [vmem:[%s474 + $0x10] sm:$0xff]
      %v525 = vld [vmem:[%s474 + $0x18] sm:$0xff]
      %527 = vset.pattern.permute.xlu0 0
      %528 = vperm.xlu0 %527, %v518
      %v529 = vpop.permute.xlu0 %528
      %532 = vset.pattern.permute.xlu0 0
      %533 = vperm.xlu0 %532, %v519
      %v534 = vpop.permute.xlu0 %533
      %537 = vset.pattern.permute.xlu0 0
      %538 = vperm.xlu0 %537, %v520
      %v539 = vpop.permute.xlu0 %538
      %542 = vset.pattern.permute.xlu0 0
      %543 = vperm.xlu0 %542, %v521
      %v544 = vpop.permute.xlu0 %543
      %v547 = vlaneseq
      %v548 = vshrl.u32 %v547, 7
      %v549 = vsub.s32 0, %v548
      %v550 = vrot.slane %v517, %v549
      %v551 = vlaneseq
      %v552 = vshrl.u32 %v551, 7
      %v553 = vsub.s32 1, %v552
      %v554 = vrot.slane %v517, %v553
      %v555 = vlaneseq
      %v556 = vshrl.u32 %v555, 7
      %v557 = vsub.s32 2, %v556
      %v558 = vrot.slane %v517, %v557
      %v559 = vlaneseq
      %v560 = vshrl.u32 %v559, 7
      %v561 = vsub.s32 3, %v560
      %v562 = vrot.slane %v517, %v561
      %v567 = vmul.f32 %v529, %v550
      %v568 = vmul.f32 %v529, %v554
      %v569 = vmul.f32 %v529, %v558
      %v570 = vmul.f32 %v529, %v562
      %v571 = vmul.f32 %v534, %v550
      %v572 = vmul.f32 %v534, %v554
      %v573 = vmul.f32 %v534, %v558
      %v574 = vmul.f32 %v534, %v562
      %v575 = vmul.f32 %v539, %v550
      %v576 = vmul.f32 %v539, %v554
      %v577 = vmul.f32 %v539, %v558
      %v578 = vmul.f32 %v539, %v562
      %v579 = vmul.f32 %v544, %v550
      %v580 = vmul.f32 %v544, %v554
      %v581 = vmul.f32 %v544, %v558
      %v582 = vmul.f32 %v544, %v562
      %584 = vset.pattern.permute.xlu0 0
      %585 = vperm.xlu0 %584, %v522
      %v586 = vpop.permute.xlu0 %585
      %589 = vset.pattern.permute.xlu0 0
      %590 = vperm.xlu0 %589, %v523
      %v591 = vpop.permute.xlu0 %590
      %594 = vset.pattern.permute.xlu0 0
      %595 = vperm.xlu0 %594, %v524
      %v596 = vpop.permute.xlu0 %595
      %599 = vset.pattern.permute.xlu0 0
      %600 = vperm.xlu0 %599, %v525
      %v601 = vpop.permute.xlu0 %600
      %v603 = vadd.f32 %v567, %v586
      %v604 = vadd.f32 %v568, %v586
      %v605 = vadd.f32 %v569, %v586
      %v606 = vadd.f32 %v570, %v586
      %v607 = vadd.f32 %v571, %v591
      %v608 = vadd.f32 %v572, %v591
      %v609 = vadd.f32 %v573, %v591
      %v610 = vadd.f32 %v574, %v591
      %v611 = vadd.f32 %v575, %v596
      %v612 = vadd.f32 %v576, %v596
      %v613 = vadd.f32 %v577, %v596
      %v614 = vadd.f32 %v578, %v596
      %v615 = vadd.f32 %v579, %v601
      %v616 = vadd.f32 %v580, %v601
      %v617 = vadd.f32 %v581, %v601
      %v618 = vadd.f32 %v582, %v601
      %v619 = vmul.f32 %v603, %v603
      %v620 = vmul.f32 %v604, %v604
      %v621 = vmul.f32 %v605, %v605
      %v622 = vmul.f32 %v606, %v606
      %v623 = vmul.f32 %v607, %v607
      %v624 = vmul.f32 %v608, %v608
      %v625 = vmul.f32 %v609, %v609
      %v626 = vmul.f32 %v610, %v610
      %v627 = vmul.f32 %v611, %v611
      %v628 = vmul.f32 %v612, %v612
      %v629 = vmul.f32 %v613, %v613
      %v630 = vmul.f32 %v614, %v614
      %v631 = vmul.f32 %v615, %v615
      %v632 = vmul.f32 %v616, %v616
      %v633 = vmul.f32 %v617, %v617
      %v634 = vmul.f32 %v618, %v618
      %v635 = vadd.f32 %v619, %v623
      %v636 = vadd.f32 %v635, %v627
      %v637 = vadd.f32 %v636, %v631
      %v638 = vrot.slane %v637, 4
      %v639 = vadd.f32 %v637, %v638
      %v640 = vrot.slane %v639, 2
      %v641 = vadd.f32 %v639, %v640
      %v642 = vrot.slane %v641, 1
      %v643 = vadd.f32 %v641, %v642
      %v644 = vadd.f32 %v620, %v624
      %v645 = vadd.f32 %v644, %v628
      %v646 = vadd.f32 %v645, %v632
      %v647 = vrot.slane %v646, 4
      %v648 = vadd.f32 %v646, %v647
      %v649 = vrot.slane %v648, 2
      %v650 = vadd.f32 %v648, %v649
      %v651 = vrot.slane %v650, 1
      %v652 = vadd.f32 %v650, %v651
      %v653 = vadd.f32 %v621, %v625
      %v654 = vadd.f32 %v653, %v629
      %v655 = vadd.f32 %v654, %v633
      %v656 = vrot.slane %v655, 4
      %v657 = vadd.f32 %v655, %v656
      %v658 = vrot.slane %v657, 2
      %v659 = vadd.f32 %v657, %v658
      %v660 = vrot.slane %v659, 1
      %v661 = vadd.f32 %v659, %v660
      %v662 = vadd.f32 %v622, %v626
      %v663 = vadd.f32 %v662, %v630
      %v664 = vadd.f32 %v663, %v634
      %v665 = vrot.slane %v664, 4
      %v666 = vadd.f32 %v664, %v665
      %v667 = vrot.slane %v666, 2
      %v668 = vadd.f32 %v666, %v667
      %v669 = vrot.slane %v668, 1
      %v670 = vadd.f32 %v668, %v669
      %v671 = vld [vmem:[%s481] sm:$0xff]
      %v672 = vld [vmem:[%s481 + $0x8] sm:$0xff]
      %v673 = vld [vmem:[%s481 + $0x10] sm:$0xff]
      %v674 = vld [vmem:[%s481 + $0x18] sm:$0xff]
      %v675 = vld [vmem:[%s481 + $0x20] sm:$0xff]
      %v676 = vld [vmem:[%s481 + $0x28] sm:$0xff]
      %v677 = vld [vmem:[%s481 + $0x30] sm:$0xff]
      %v678 = vld [vmem:[%s481 + $0x38] sm:$0xff]
      %v679 = vld [vmem:[%s481 + $0x40] sm:$0xff]
      %v680 = vld [vmem:[%s481 + $0x48] sm:$0xff]
      %v681 = vld [vmem:[%s481 + $0x50] sm:$0xff]
      %v682 = vld [vmem:[%s481 + $0x58] sm:$0xff]
      %v683 = vld [vmem:[%s481 + $0x60] sm:$0xff]
      %v684 = vld [vmem:[%s481 + $0x68] sm:$0xff]
      %v685 = vld [vmem:[%s481 + $0x70] sm:$0xff]
      %v686 = vld [vmem:[%s481 + $0x78] sm:$0xff]
      %v687 = vld [vmem:[%s488] sm:$0xff]
      %v688 = vld [vmem:[%s488 + $0x8] sm:$0xff]
      %v689 = vld [vmem:[%s488 + $0x10] sm:$0xff]
      %v690 = vld [vmem:[%s488 + $0x18] sm:$0xff]
      %v691 = vld [vmem:[%s488 + $0x20] sm:$0xff]
      %v692 = vld [vmem:[%s488 + $0x28] sm:$0xff]
      %v693 = vld [vmem:[%s488 + $0x30] sm:$0xff]
      %v694 = vld [vmem:[%s488 + $0x38] sm:$0xff]
      %v695 = vld [vmem:[%s488 + $0x40] sm:$0xff]
      %v696 = vld [vmem:[%s488 + $0x48] sm:$0xff]
      %v697 = vld [vmem:[%s488 + $0x50] sm:$0xff]
      %v698 = vld [vmem:[%s488 + $0x58] sm:$0xff]
      %v699 = vld [vmem:[%s488 + $0x60] sm:$0xff]
      %v700 = vld [vmem:[%s488 + $0x68] sm:$0xff]
      %v701 = vld [vmem:[%s488 + $0x70] sm:$0xff]
      %v702 = vld [vmem:[%s488 + $0x78] sm:$0xff]
      %vm703 = vcmask 261120
      %v705 = vsel %vm703, %v671, 0
      %v708 = vsel %vm703, %v672, 0
      %v711 = vsel %vm703, %v673, 0
      %v714 = vsel %vm703, %v674, 0
      %v717 = vsel %vm703, %v675, 0
      %v720 = vsel %vm703, %v676, 0
      %v723 = vsel %vm703, %v677, 0
      %v726 = vsel %vm703, %v678, 0
      %v729 = vsel %vm703, %v679, 0
      %v732 = vsel %vm703, %v680, 0
      %v735 = vsel %vm703, %v681, 0
      %v738 = vsel %vm703, %v682, 0
      %v741 = vsel %vm703, %v683, 0
      %v744 = vsel %vm703, %v684, 0
      %v747 = vsel %vm703, %v685, 0
      %v750 = vsel %vm703, %v686, 0
      %752 = vmatprep.subr.mxu0 0.0
      %753 = vmatpush1.msra.mxu0 0.0
      %754 = vmatprep.subr.mxu0 0.0
      %755 = vmatpush1.msra.mxu0 0.0
      %756 = vmatprep.subr.mxu0 0.0
      %757 = vmatpush1.msra.mxu0 0.0
      %758 = vmatprep.subr.mxu0 0.0
      %759 = vmatpush1.msra.mxu0 0.0
      %760 = vmatprep.subr.mxu0 0.0
      %761 = vmatpush1.msra.mxu0 0.0
      %762 = vmatprep.subr.mxu0 0.0
      %763 = vmatpush1.msra.mxu0 0.0
      %764 = vmatprep.subr.mxu0 0.0
      %765 = vmatpush1.msra.mxu0 0.0
      %766 = vmatprep.subr.mxu0 0.0
      %767 = vmatpush1.msra.mxu0 0.0
      %768 = vmatprep.subr.mxu0 0.0
      %769 = vmatpush1.msra.mxu0 0.0
      %770 = vmatprep.subr.mxu0 0.0
      %771 = vmatpush1.msra.mxu0 0.0
      %772 = vmatprep.subr.mxu0 0.0
      %773 = vmatpush1.msra.mxu0 0.0
      %774 = vmatprep.subr.mxu0 0.0
      %775 = vmatpush1.msra.mxu0 0.0
      %776 = vmatprep.subr.mxu0 %v616
      %777 = vmatpush1.msra.mxu0 %v615
      %778 = vmatprep.subr.mxu0 %v612
      %779 = vmatpush1.msra.mxu0 %v611
      %780 = vmatprep.subr.mxu0 %v608
      %781 = vmatpush1.msra.mxu0 %v607
      %782 = vmatprep.subr.mxu0 %v604
      %783 = vmatpush1.msra.mxu0 %v603
      %784 = vmatprep.subr.mxu0 0.0
      %785 = vmatpush2.msra.mxu0 0.0
      %786 = vmatprep.subr.mxu0 0.0
      %787 = vmatpush2.msra.mxu0 0.0
      %788 = vmatprep.subr.mxu0 0.0
      %789 = vmatpush2.msra.mxu0 0.0
      %790 = vmatprep.subr.mxu0 0.0
      %791 = vmatpush2.msra.mxu0 0.0
      %792 = vmatprep.subr.mxu0 0.0
      %793 = vmatpush2.msra.mxu0 0.0
      %794 = vmatprep.subr.mxu0 0.0
      %795 = vmatpush2.msra.mxu0 0.0
      %796 = vmatprep.subr.mxu0 0.0
      %797 = vmatpush2.msra.mxu0 0.0
      %798 = vmatprep.subr.mxu0 0.0
      %799 = vmatpush2.msra.mxu0 0.0
      %800 = vmatprep.subr.mxu0 0.0
      %801 = vmatpush2.msra.mxu0 0.0
      %802 = vmatprep.subr.mxu0 0.0
      %803 = vmatpush2.msra.mxu0 0.0
      %804 = vmatprep.subr.mxu0 0.0
      %805 = vmatpush2.msra.mxu0 0.0
      %806 = vmatprep.subr.mxu0 0.0
      %807 = vmatpush2.msra.mxu0 0.0
      %808 = vmatprep.subr.mxu0 0.0
      %809 = vmatpush2.msra.mxu0 0.0
      %810 = vmatprep.subr.mxu0 0.0
      %811 = vmatpush2.msra.mxu0 0.0
      %812 = vmatprep.subr.mxu0 0.0
      %813 = vmatpush2.msra.mxu0 0.0
      %814 = vmatprep.subr.mxu0 0.0
      %815 = vmatpush2.msra.mxu0 0.0
      %816 = vmatprep.mubr.f32.mxu0 0.0
      %817 = vmatmul.mubr.f32.gmra.mxu0 %v705
      %v818 = vpop.f32.mrf.mxu0
      %v819 = vadd.f32 0.0, %v818
      %v820 = vpop.f32.mrf.mxu0
      %v821 = vadd.f32 0.0, %v820
      %822 = vmatprep.mubr.f32.mxu0 0.0
      %823 = vmatmul.mubr.f32.gmra.mxu0 %v708
      %v824 = vpop.f32.mrf.mxu0
      %v825 = vadd.f32 0.0, %v824
      %v826 = vpop.f32.mrf.mxu0
      %v827 = vadd.f32 0.0, %v826
      %828 = vmatprep.mubr.f32.mxu0 0.0
      %829 = vmatmul.mubr.f32.gmra.mxu0 %v711
      %v830 = vpop.f32.mrf.mxu0
      %v831 = vadd.f32 0.0, %v830
      %v832 = vpop.f32.mrf.mxu0
      %v833 = vadd.f32 0.0, %v832
      %834 = vmatprep.mubr.f32.mxu0 0.0
      %835 = vmatmul.mubr.f32.gmra.mxu0 %v714
      %v836 = vpop.f32.mrf.mxu0
      %v837 = vadd.f32 0.0, %v836
      %v838 = vpop.f32.mrf.mxu0
      %v839 = vadd.f32 0.0, %v838
      %840 = vmatprep.mubr.f32.mxu0 0.0
      %841 = vmatmul.mubr.f32.gmra.mxu0 %v717
      %v842 = vpop.f32.mrf.mxu0
      %v843 = vadd.f32 0.0, %v842
      %v844 = vpop.f32.mrf.mxu0
      %v845 = vadd.f32 0.0, %v844
      %846 = vmatprep.mubr.f32.mxu0 0.0
      %847 = vmatmul.mubr.f32.gmra.mxu0 %v720
      %v848 = vpop.f32.mrf.mxu0
      %v849 = vadd.f32 0.0, %v848
      %v850 = vpop.f32.mrf.mxu0
      %v851 = vadd.f32 0.0, %v850
      %852 = vmatprep.mubr.f32.mxu0 0.0
      %853 = vmatmul.mubr.f32.gmra.mxu0 %v723
      %v854 = vpop.f32.mrf.mxu0
      %v855 = vadd.f32 0.0, %v854
      %v856 = vpop.f32.mrf.mxu0
      %v857 = vadd.f32 0.0, %v856
      %858 = vmatprep.mubr.f32.mxu0 0.0
      %859 = vmatmul.mubr.f32.gmra.mxu0 %v726
      %v860 = vpop.f32.mrf.mxu0
      %v861 = vadd.f32 0.0, %v860
      %v862 = vpop.f32.mrf.mxu0
      %v863 = vadd.f32 0.0, %v862
      %864 = vmatprep.mubr.f32.mxu0 0.0
      %865 = vmatmul.mubr.f32.gmra.mxu0 %v729
      %v866 = vpop.f32.mrf.mxu0
      %v867 = vadd.f32 0.0, %v866
      %v868 = vpop.f32.mrf.mxu0
      %v869 = vadd.f32 0.0, %v868
      %870 = vmatprep.mubr.f32.mxu0 0.0
      %871 = vmatmul.mubr.f32.gmra.mxu0 %v732
      %v872 = vpop.f32.mrf.mxu0
      %v873 = vadd.f32 0.0, %v872
      %v874 = vpop.f32.mrf.mxu0
      %v875 = vadd.f32 0.0, %v874
      %876 = vmatprep.mubr.f32.mxu0 0.0
      %877 = vmatmul.mubr.f32.gmra.mxu0 %v735
      %v878 = vpop.f32.mrf.mxu0
      %v879 = vadd.f32 0.0, %v878
      %v880 = vpop.f32.mrf.mxu0
      %v881 = vadd.f32 0.0, %v880
      %882 = vmatprep.mubr.f32.mxu0 0.0
      %883 = vmatmul.mubr.f32.gmra.mxu0 %v738
      %v884 = vpop.f32.mrf.mxu0
      %v885 = vadd.f32 0.0, %v884
      %v886 = vpop.f32.mrf.mxu0
      %v887 = vadd.f32 0.0, %v886
      %888 = vmatprep.mubr.f32.mxu0 0.0
      %889 = vmatmul.mubr.f32.gmra.mxu0 %v741
      %v890 = vpop.f32.mrf.mxu0
      %v891 = vadd.f32 0.0, %v890
      %v892 = vpop.f32.mrf.mxu0
      %v893 = vadd.f32 0.0, %v892
      %894 = vmatprep.mubr.f32.mxu0 0.0
      %895 = vmatmul.mubr.f32.gmra.mxu0 %v744
      %v896 = vpop.f32.mrf.mxu0
      %v897 = vadd.f32 0.0, %v896
      %v898 = vpop.f32.mrf.mxu0
      %v899 = vadd.f32 0.0, %v898
      %900 = vmatprep.mubr.f32.mxu0 0.0
      %901 = vmatmul.mubr.f32.gmra.mxu0 %v747
      %v902 = vpop.f32.mrf.mxu0
      %v903 = vadd.f32 0.0, %v902
      %v904 = vpop.f32.mrf.mxu0
      %v905 = vadd.f32 0.0, %v904
      %906 = vmatprep.mubr.f32.mxu0 0.0
      %907 = vmatmul.mubr.f32.gmra.mxu0 %v750
      %v908 = vpop.f32.mrf.mxu0
      %v909 = vadd.f32 0.0, %v908
      %v910 = vpop.f32.mrf.mxu0
      %v911 = vadd.f32 0.0, %v910
      %912 = vdwg.mxu0
      %913 = vmatprep.subr.mxu0 0.0
      %914 = vmatpush1.msra.mxu0 0.0
      %915 = vmatprep.subr.mxu0 0.0
      %916 = vmatpush1.msra.mxu0 0.0
      %917 = vmatprep.subr.mxu0 0.0
      %918 = vmatpush1.msra.mxu0 0.0
      %919 = vmatprep.subr.mxu0 0.0
      %920 = vmatpush1.msra.mxu0 0.0
      %921 = vmatprep.subr.mxu0 0.0
      %922 = vmatpush1.msra.mxu0 0.0
      %923 = vmatprep.subr.mxu0 0.0
      %924 = vmatpush1.msra.mxu0 0.0
      %925 = vmatprep.subr.mxu0 0.0
      %926 = vmatpush1.msra.mxu0 0.0
      %927 = vmatprep.subr.mxu0 0.0
      %928 = vmatpush1.msra.mxu0 0.0
      %929 = vmatprep.subr.mxu0 0.0
      %930 = vmatpush1.msra.mxu0 0.0
      %931 = vmatprep.subr.mxu0 0.0
      %932 = vmatpush1.msra.mxu0 0.0
      %933 = vmatprep.subr.mxu0 0.0
      %934 = vmatpush1.msra.mxu0 0.0
      %935 = vmatprep.subr.mxu0 0.0
      %936 = vmatpush1.msra.mxu0 0.0
      %937 = vmatprep.subr.mxu0 %v618
      %938 = vmatpush1.msra.mxu0 %v617
      %939 = vmatprep.subr.mxu0 %v614
      %940 = vmatpush1.msra.mxu0 %v613
      %941 = vmatprep.subr.mxu0 %v610
      %942 = vmatpush1.msra.mxu0 %v609
      %943 = vmatprep.subr.mxu0 %v606
      %944 = vmatpush1.msra.mxu0 %v605
      %945 = vmatprep.subr.mxu0 0.0
      %946 = vmatpush2.msra.mxu0 0.0
      %947 = vmatprep.subr.mxu0 0.0
      %948 = vmatpush2.msra.mxu0 0.0
      %949 = vmatprep.subr.mxu0 0.0
      %950 = vmatpush2.msra.mxu0 0.0
      %951 = vmatprep.subr.mxu0 0.0
      %952 = vmatpush2.msra.mxu0 0.0
      %953 = vmatprep.subr.mxu0 0.0
      %954 = vmatpush2.msra.mxu0 0.0
      %955 = vmatprep.subr.mxu0 0.0
      %956 = vmatpush2.msra.mxu0 0.0
      %957 = vmatprep.subr.mxu0 0.0
      %958 = vmatpush2.msra.mxu0 0.0
      %959 = vmatprep.subr.mxu0 0.0
      %960 = vmatpush2.msra.mxu0 0.0
      %961 = vmatprep.subr.mxu0 0.0
      %962 = vmatpush2.msra.mxu0 0.0
      %963 = vmatprep.subr.mxu0 0.0
      %964 = vmatpush2.msra.mxu0 0.0
      %965 = vmatprep.subr.mxu0 0.0
      %966 = vmatpush2.msra.mxu0 0.0
      %967 = vmatprep.subr.mxu0 0.0
      %968 = vmatpush2.msra.mxu0 0.0
      %969 = vmatprep.subr.mxu0 0.0
      %970 = vmatpush2.msra.mxu0 0.0
      %971 = vmatprep.subr.mxu0 0.0
      %972 = vmatpush2.msra.mxu0 0.0
      %973 = vmatprep.subr.mxu0 0.0
      %974 = vmatpush2.msra.mxu0 0.0
      %975 = vmatprep.subr.mxu0 0.0
      %976 = vmatpush2.msra.mxu0 0.0
      %977 = vmatprep.mubr.f32.mxu0 0.0
      %978 = vmatmul.mubr.f32.gmra.mxu0 %v705
      %v979 = vpop.f32.mrf.mxu0
      %v980 = vadd.f32 0.0, %v979
      %v981 = vpop.f32.mrf.mxu0
      %v982 = vadd.f32 0.0, %v981
      %983 = vmatprep.mubr.f32.mxu0 0.0
      %984 = vmatmul.mubr.f32.gmra.mxu0 %v708
      %v985 = vpop.f32.mrf.mxu0
      %v986 = vadd.f32 0.0, %v985
      %v987 = vpop.f32.mrf.mxu0
      %v988 = vadd.f32 0.0, %v987
      %989 = vmatprep.mubr.f32.mxu0 0.0
      %990 = vmatmul.mubr.f32.gmra.mxu0 %v711
      %v991 = vpop.f32.mrf.mxu0
      %v992 = vadd.f32 0.0, %v991
      %v993 = vpop.f32.mrf.mxu0
      %v994 = vadd.f32 0.0, %v993
      %995 = vmatprep.mubr.f32.mxu0 0.0
      %996 = vmatmul.mubr.f32.gmra.mxu0 %v714
      %v997 = vpop.f32.mrf.mxu0
      %v998 = vadd.f32 0.0, %v997
      %v999 = vpop.f32.mrf.mxu0
      %v1000 = vadd.f32 0.0, %v999
      %1001 = vmatprep.mubr.f32.mxu0 0.0
      %1002 = vmatmul.mubr.f32.gmra.mxu0 %v717
      %v1003 = vpop.f32.mrf.mxu0
      %v1004 = vadd.f32 0.0, %v1003
      %v1005 = vpop.f32.mrf.mxu0
      %v1006 = vadd.f32 0.0, %v1005
      %1007 = vmatprep.mubr.f32.mxu0 0.0
      %1008 = vmatmul.mubr.f32.gmra.mxu0 %v720
      %v1009 = vpop.f32.mrf.mxu0
      %v1010 = vadd.f32 0.0, %v1009
      %v1011 = vpop.f32.mrf.mxu0
      %v1012 = vadd.f32 0.0, %v1011
      %1013 = vmatprep.mubr.f32.mxu0 0.0
      %1014 = vmatmul.mubr.f32.gmra.mxu0 %v723
      %v1015 = vpop.f32.mrf.mxu0
      %v1016 = vadd.f32 0.0, %v1015
      %v1017 = vpop.f32.mrf.mxu0
      %v1018 = vadd.f32 0.0, %v1017
      %1019 = vmatprep.mubr.f32.mxu0 0.0
      %1020 = vmatmul.mubr.f32.gmra.mxu0 %v726
      %v1021 = vpop.f32.mrf.mxu0
      %v1022 = vadd.f32 0.0, %v1021
      %v1023 = vpop.f32.mrf.mxu0
      %v1024 = vadd.f32 0.0, %v1023
      %1025 = vmatprep.mubr.f32.mxu0 0.0
      %1026 = vmatmul.mubr.f32.gmra.mxu0 %v729
      %v1027 = vpop.f32.mrf.mxu0
      %v1028 = vadd.f32 0.0, %v1027
      %v1029 = vpop.f32.mrf.mxu0
      %v1030 = vadd.f32 0.0, %v1029
      %1031 = vmatprep.mubr.f32.mxu0 0.0
      %1032 = vmatmul.mubr.f32.gmra.mxu0 %v732
      %v1033 = vpop.f32.mrf.mxu0
      %v1034 = vadd.f32 0.0, %v1033
      %v1035 = vpop.f32.mrf.mxu0
      %v1036 = vadd.f32 0.0, %v1035
      %1037 = vmatprep.mubr.f32.mxu0 0.0
      %1038 = vmatmul.mubr.f32.gmra.mxu0 %v735
      %v1039 = vpop.f32.mrf.mxu0
      %v1040 = vadd.f32 0.0, %v1039
      %v1041 = vpop.f32.mrf.mxu0
      %v1042 = vadd.f32 0.0, %v1041
      %1043 = vmatprep.mubr.f32.mxu0 0.0
      %1044 = vmatmul.mubr.f32.gmra.mxu0 %v738
      %v1045 = vpop.f32.mrf.mxu0
      %v1046 = vadd.f32 0.0, %v1045
      %v1047 = vpop.f32.mrf.mxu0
      %v1048 = vadd.f32 0.0, %v1047
      %1049 = vmatprep.mubr.f32.mxu0 0.0
      %1050 = vmatmul.mubr.f32.gmra.mxu0 %v741
      %v1051 = vpop.f32.mrf.mxu0
      %v1052 = vadd.f32 0.0, %v1051
      %v1053 = vpop.f32.mrf.mxu0
      %v1054 = vadd.f32 0.0, %v1053
      %1055 = vmatprep.mubr.f32.mxu0 0.0
      %1056 = vmatmul.mubr.f32.gmra.mxu0 %v744
      %v1057 = vpop.f32.mrf.mxu0
      %v1058 = vadd.f32 0.0, %v1057
      %v1059 = vpop.f32.mrf.mxu0
      %v1060 = vadd.f32 0.0, %v1059
      %1061 = vmatprep.mubr.f32.mxu0 0.0
      %1062 = vmatmul.mubr.f32.gmra.mxu0 %v747
      %v1063 = vpop.f32.mrf.mxu0
      %v1064 = vadd.f32 0.0, %v1063
      %v1065 = vpop.f32.mrf.mxu0
      %v1066 = vadd.f32 0.0, %v1065
      %1067 = vmatprep.mubr.f32.mxu0 0.0
      %1068 = vmatmul.mubr.f32.gmra.mxu0 %v750
      %v1069 = vpop.f32.mrf.mxu0
      %v1070 = vadd.f32 0.0, %v1069
      %v1071 = vpop.f32.mrf.mxu0
      %v1072 = vadd.f32 0.0, %v1071
      %1073 = vdwg.mxu0
      %v1074 = vmul.f32 %v819, 2.0
      %v1075 = vmul.f32 %v821, 2.0
      %v1076 = vmul.f32 %v980, 2.0
      %v1077 = vmul.f32 %v982, 2.0
      %v1078 = vmul.f32 %v825, 2.0
      %v1079 = vmul.f32 %v827, 2.0
      %v1080 = vmul.f32 %v986, 2.0
      %v1081 = vmul.f32 %v988, 2.0
      %v1082 = vmul.f32 %v831, 2.0
      %v1083 = vmul.f32 %v833, 2.0
      %v1084 = vmul.f32 %v992, 2.0
      %v1085 = vmul.f32 %v994, 2.0
      %v1086 = vmul.f32 %v837, 2.0
      %v1087 = vmul.f32 %v839, 2.0
      %v1088 = vmul.f32 %v998, 2.0
      %v1089 = vmul.f32 %v1000, 2.0
      %v1090 = vmul.f32 %v843, 2.0
      %v1091 = vmul.f32 %v845, 2.0
      %v1092 = vmul.f32 %v1004, 2.0
      %v1093 = vmul.f32 %v1006, 2.0
      %v1094 = vmul.f32 %v849, 2.0
      %v1095 = vmul.f32 %v851, 2.0
      %v1096 = vmul.f32 %v1010, 2.0
      %v1097 = vmul.f32 %v1012, 2.0
      %v1098 = vmul.f32 %v855, 2.0
      %v1099 = vmul.f32 %v857, 2.0
      %v1100 = vmul.f32 %v1016, 2.0
      %v1101 = vmul.f32 %v1018, 2.0
      %v1102 = vmul.f32 %v861, 2.0
      %v1103 = vmul.f32 %v863, 2.0
      %v1104 = vmul.f32 %v1022, 2.0
      %v1105 = vmul.f32 %v1024, 2.0
      %v1106 = vmul.f32 %v867, 2.0
      %v1107 = vmul.f32 %v869, 2.0
      %v1108 = vmul.f32 %v1028, 2.0
      %v1109 = vmul.f32 %v1030, 2.0
      %v1110 = vmul.f32 %v873, 2.0
      %v1111 = vmul.f32 %v875, 2.0
      %v1112 = vmul.f32 %v1034, 2.0
      %v1113 = vmul.f32 %v1036, 2.0
      %v1114 = vmul.f32 %v879, 2.0
      %v1115 = vmul.f32 %v881, 2.0
      %v1116 = vmul.f32 %v1040, 2.0
      %v1117 = vmul.f32 %v1042, 2.0
      %v1118 = vmul.f32 %v885, 2.0
      %v1119 = vmul.f32 %v887, 2.0
      %v1120 = vmul.f32 %v1046, 2.0
      %v1121 = vmul.f32 %v1048, 2.0
      %v1122 = vmul.f32 %v891, 2.0
      %v1123 = vmul.f32 %v893, 2.0
      %v1124 = vmul.f32 %v1052, 2.0
      %v1125 = vmul.f32 %v1054, 2.0
      %v1126 = vmul.f32 %v897, 2.0
      %v1127 = vmul.f32 %v899, 2.0
      %v1128 = vmul.f32 %v1058, 2.0
      %v1129 = vmul.f32 %v1060, 2.0
      %v1130 = vmul.f32 %v903, 2.0
      %v1131 = vmul.f32 %v905, 2.0
      %v1132 = vmul.f32 %v1064, 2.0
      %v1133 = vmul.f32 %v1066, 2.0
      %v1134 = vmul.f32 %v909, 2.0
      %v1135 = vmul.f32 %v911, 2.0
      %v1136 = vmul.f32 %v1070, 2.0
      %v1137 = vmul.f32 %v1072, 2.0
      %1139 = vset.pattern.permute.xlu0 0
      %1140 = vperm.xlu0 %1139, %v687
      %v1141 = vpop.permute.xlu0 %1140
      %1144 = vset.pattern.permute.xlu0 0
      %1145 = vperm.xlu0 %1144, %v688
      %v1146 = vpop.permute.xlu0 %1145
      %1149 = vset.pattern.permute.xlu0 0
      %1150 = vperm.xlu0 %1149, %v689
      %v1151 = vpop.permute.xlu0 %1150
      %1154 = vset.pattern.permute.xlu0 0
      %1155 = vperm.xlu0 %1154, %v690
      %v1156 = vpop.permute.xlu0 %1155
      %1159 = vset.pattern.permute.xlu0 0
      %1160 = vperm.xlu0 %1159, %v691
      %v1161 = vpop.permute.xlu0 %1160
      %1164 = vset.pattern.permute.xlu0 0
      %1165 = vperm.xlu0 %1164, %v692
      %v1166 = vpop.permute.xlu0 %1165
      %1169 = vset.pattern.permute.xlu0 0
      %1170 = vperm.xlu0 %1169, %v693
      %v1171 = vpop.permute.xlu0 %1170
      %1174 = vset.pattern.permute.xlu0 0
      %1175 = vperm.xlu0 %1174, %v694
      %v1176 = vpop.permute.xlu0 %1175
      %1179 = vset.pattern.permute.xlu0 0
      %1180 = vperm.xlu0 %1179, %v695
      %v1181 = vpop.permute.xlu0 %1180
      %1184 = vset.pattern.permute.xlu0 0
      %1185 = vperm.xlu0 %1184, %v696
      %v1186 = vpop.permute.xlu0 %1185
      %1189 = vset.pattern.permute.xlu0 0
      %1190 = vperm.xlu0 %1189, %v697
      %v1191 = vpop.permute.xlu0 %1190
      %1194 = vset.pattern.permute.xlu0 0
      %1195 = vperm.xlu0 %1194, %v698
      %v1196 = vpop.permute.xlu0 %1195
      %1199 = vset.pattern.permute.xlu0 0
      %1200 = vperm.xlu0 %1199, %v699
      %v1201 = vpop.permute.xlu0 %1200
      %1204 = vset.pattern.permute.xlu0 0
      %1205 = vperm.xlu0 %1204, %v700
      %v1206 = vpop.permute.xlu0 %1205
      %1209 = vset.pattern.permute.xlu0 0
      %1210 = vperm.xlu0 %1209, %v701
      %v1211 = vpop.permute.xlu0 %1210
      %1214 = vset.pattern.permute.xlu0 0
      %1215 = vperm.xlu0 %1214, %v702
      %v1216 = vpop.permute.xlu0 %1215
      %v1218 = vsub.f32 %v1141, %v1074
      %v1219 = vsub.f32 %v1141, %v1075
      %v1220 = vsub.f32 %v1141, %v1076
      %v1221 = vsub.f32 %v1141, %v1077
      %v1222 = vsub.f32 %v1146, %v1078
      %v1223 = vsub.f32 %v1146, %v1079
      %v1224 = vsub.f32 %v1146, %v1080
      %v1225 = vsub.f32 %v1146, %v1081
      %v1226 = vsub.f32 %v1151, %v1082
      %v1227 = vsub.f32 %v1151, %v1083
      %v1228 = vsub.f32 %v1151, %v1084
      %v1229 = vsub.f32 %v1151, %v1085
      %v1230 = vsub.f32 %v1156, %v1086
      %v1231 = vsub.f32 %v1156, %v1087
      %v1232 = vsub.f32 %v1156, %v1088
      %v1233 = vsub.f32 %v1156, %v1089
      %v1234 = vsub.f32 %v1161, %v1090
      %v1235 = vsub.f32 %v1161, %v1091
      %v1236 = vsub.f32 %v1161, %v1092
      %v1237 = vsub.f32 %v1161, %v1093
      %v1238 = vsub.f32 %v1166, %v1094
      %v1239 = vsub.f32 %v1166, %v1095
      %v1240 = vsub.f32 %v1166, %v1096
      %v1241 = vsub.f32 %v1166, %v1097
      %v1242 = vsub.f32 %v1171, %v1098
      %v1243 = vsub.f32 %v1171, %v1099
      %v1244 = vsub.f32 %v1171, %v1100
      %v1245 = vsub.f32 %v1171, %v1101
      %v1246 = vsub.f32 %v1176, %v1102
      %v1247 = vsub.f32 %v1176, %v1103
      %v1248 = vsub.f32 %v1176, %v1104
      %v1249 = vsub.f32 %v1176, %v1105
      %v1250 = vsub.f32 %v1181, %v1106
      %v1251 = vsub.f32 %v1181, %v1107
      %v1252 = vsub.f32 %v1181, %v1108
      %v1253 = vsub.f32 %v1181, %v1109
      %v1254 = vsub.f32 %v1186, %v1110
      %v1255 = vsub.f32 %v1186, %v1111
      %v1256 = vsub.f32 %v1186, %v1112
      %v1257 = vsub.f32 %v1186, %v1113
      %v1258 = vsub.f32 %v1191, %v1114
      %v1259 = vsub.f32 %v1191, %v1115
      %v1260 = vsub.f32 %v1191, %v1116
      %v1261 = vsub.f32 %v1191, %v1117
      %v1262 = vsub.f32 %v1196, %v1118
      %v1263 = vsub.f32 %v1196, %v1119
      %v1264 = vsub.f32 %v1196, %v1120
      %v1265 = vsub.f32 %v1196, %v1121
      %v1266 = vsub.f32 %v1201, %v1122
      %v1267 = vsub.f32 %v1201, %v1123
      %v1268 = vsub.f32 %v1201, %v1124
      %v1269 = vsub.f32 %v1201, %v1125
      %v1270 = vsub.f32 %v1206, %v1126
      %v1271 = vsub.f32 %v1206, %v1127
      %v1272 = vsub.f32 %v1206, %v1128
      %v1273 = vsub.f32 %v1206, %v1129
      %v1274 = vsub.f32 %v1211, %v1130
      %v1275 = vsub.f32 %v1211, %v1131
      %v1276 = vsub.f32 %v1211, %v1132
      %v1277 = vsub.f32 %v1211, %v1133
      %v1278 = vsub.f32 %v1216, %v1134
      %v1279 = vsub.f32 %v1216, %v1135
      %v1280 = vsub.f32 %v1216, %v1136
      %v1281 = vsub.f32 %v1216, %v1137
      %v1282 = vadd.f32 %v1218, %v643
      %v1283 = vadd.f32 %v1219, %v652
      %v1284 = vadd.f32 %v1220, %v661
      %v1285 = vadd.f32 %v1221, %v670
      %v1286 = vadd.f32 %v1222, %v643
      %v1287 = vadd.f32 %v1223, %v652
      %v1288 = vadd.f32 %v1224, %v661
      %v1289 = vadd.f32 %v1225, %v670
      %v1290 = vadd.f32 %v1226, %v643
      %v1291 = vadd.f32 %v1227, %v652
      %v1292 = vadd.f32 %v1228, %v661
      %v1293 = vadd.f32 %v1229, %v670
      %v1294 = vadd.f32 %v1230, %v643
      %v1295 = vadd.f32 %v1231, %v652
      %v1296 = vadd.f32 %v1232, %v661
      %v1297 = vadd.f32 %v1233, %v670
      %v1298 = vadd.f32 %v1234, %v643
      %v1299 = vadd.f32 %v1235, %v652
      %v1300 = vadd.f32 %v1236, %v661
      %v1301 = vadd.f32 %v1237, %v670
      %v1302 = vadd.f32 %v1238, %v643
      %v1303 = vadd.f32 %v1239, %v652
      %v1304 = vadd.f32 %v1240, %v661
      %v1305 = vadd.f32 %v1241, %v670
      %v1306 = vadd.f32 %v1242, %v643
      %v1307 = vadd.f32 %v1243, %v652
      %v1308 = vadd.f32 %v1244, %v661
      %v1309 = vadd.f32 %v1245, %v670
      %v1310 = vadd.f32 %v1246, %v643
      %v1311 = vadd.f32 %v1247, %v652
      %v1312 = vadd.f32 %v1248, %v661
      %v1313 = vadd.f32 %v1249, %v670
      %v1314 = vadd.f32 %v1250, %v643
      %v1315 = vadd.f32 %v1251, %v652
      %v1316 = vadd.f32 %v1252, %v661
      %v1317 = vadd.f32 %v1253, %v670
      %v1318 = vadd.f32 %v1254, %v643
      %v1319 = vadd.f32 %v1255, %v652
      %v1320 = vadd.f32 %v1256, %v661
      %v1321 = vadd.f32 %v1257, %v670
      %v1322 = vadd.f32 %v1258, %v643
      %v1323 = vadd.f32 %v1259, %v652
      %v1324 = vadd.f32 %v1260, %v661
      %v1325 = vadd.f32 %v1261, %v670
      %v1326 = vadd.f32 %v1262, %v643
      %v1327 = vadd.f32 %v1263, %v652
      %v1328 = vadd.f32 %v1264, %v661
      %v1329 = vadd.f32 %v1265, %v670
      %v1330 = vadd.f32 %v1266, %v643
      %v1331 = vadd.f32 %v1267, %v652
      %v1332 = vadd.f32 %v1268, %v661
      %v1333 = vadd.f32 %v1269, %v670
      %v1334 = vadd.f32 %v1270, %v643
      %v1335 = vadd.f32 %v1271, %v652
      %v1336 = vadd.f32 %v1272, %v661
      %v1337 = vadd.f32 %v1273, %v670
      %v1338 = vadd.f32 %v1274, %v643
      %v1339 = vadd.f32 %v1275, %v652
      %v1340 = vadd.f32 %v1276, %v661
      %v1341 = vadd.f32 %v1277, %v670
      %v1342 = vadd.f32 %v1278, %v643
      %v1343 = vadd.f32 %v1279, %v652
      %v1344 = vadd.f32 %v1280, %v661
      %v1345 = vadd.f32 %v1281, %v670
      %v1346 = vmin.f32 %v1282, %v1286
      %v1347 = vmin.f32 %v1346, %v1290
      %v1348 = vmin.f32 %v1347, %v1294
      %v1349 = vmin.f32 %v1348, %v1298
      %v1350 = vmin.f32 %v1349, %v1302
      %v1351 = vmin.f32 %v1350, %v1306
      %v1352 = vmin.f32 %v1351, %v1310
      %v1353 = vmin.f32 %v1352, %v1314
      %v1354 = vmin.f32 %v1353, %v1318
      %v1355 = vmin.f32 %v1354, %v1322
      %v1356 = vmin.f32 %v1355, %v1326
      %v1357 = vmin.f32 %v1356, %v1330
      %v1358 = vmin.f32 %v1357, %v1334
      %v1359 = vmin.f32 %v1358, %v1338
      %v1360 = vmin.f32 %v1359, %v1342
      %v1361 = vrot.slane %v1360, 4
      %v1362 = vmin.f32 %v1360, %v1361
      %v1363 = vrot.slane %v1362, 2
      %v1364 = vmin.f32 %v1362, %v1363
      %v1365 = vrot.slane %v1364, 1
      %v1366 = vmin.f32 %v1364, %v1365
      %v1367 = vmin.f32 %v1283, %v1287
      %v1368 = vmin.f32 %v1367, %v1291
      %v1369 = vmin.f32 %v1368, %v1295
      %v1370 = vmin.f32 %v1369, %v1299
      %v1371 = vmin.f32 %v1370, %v1303
      %v1372 = vmin.f32 %v1371, %v1307
      %v1373 = vmin.f32 %v1372, %v1311
      %v1374 = vmin.f32 %v1373, %v1315
      %v1375 = vmin.f32 %v1374, %v1319
      %v1376 = vmin.f32 %v1375, %v1323
      %v1377 = vmin.f32 %v1376, %v1327
      %v1378 = vmin.f32 %v1377, %v1331
      %v1379 = vmin.f32 %v1378, %v1335
      %v1380 = vmin.f32 %v1379, %v1339
      %v1381 = vmin.f32 %v1380, %v1343
      %v1382 = vrot.slane %v1381, 4
      %v1383 = vmin.f32 %v1381, %v1382
      %v1384 = vrot.slane %v1383, 2
      %v1385 = vmin.f32 %v1383, %v1384
      %v1386 = vrot.slane %v1385, 1
      %v1387 = vmin.f32 %v1385, %v1386
      %v1388 = vmin.f32 %v1284, %v1288
      %v1389 = vmin.f32 %v1388, %v1292
      %v1390 = vmin.f32 %v1389, %v1296
      %v1391 = vmin.f32 %v1390, %v1300
      %v1392 = vmin.f32 %v1391, %v1304
      %v1393 = vmin.f32 %v1392, %v1308
      %v1394 = vmin.f32 %v1393, %v1312
      %v1395 = vmin.f32 %v1394, %v1316
      %v1396 = vmin.f32 %v1395, %v1320
      %v1397 = vmin.f32 %v1396, %v1324
      %v1398 = vmin.f32 %v1397, %v1328
      %v1399 = vmin.f32 %v1398, %v1332
      %v1400 = vmin.f32 %v1399, %v1336
      %v1401 = vmin.f32 %v1400, %v1340
      %v1402 = vmin.f32 %v1401, %v1344
      %v1403 = vrot.slane %v1402, 4
      %v1404 = vmin.f32 %v1402, %v1403
      %v1405 = vrot.slane %v1404, 2
      %v1406 = vmin.f32 %v1404, %v1405
      %v1407 = vrot.slane %v1406, 1
      %v1408 = vmin.f32 %v1406, %v1407
      %v1409 = vmin.f32 %v1285, %v1289
      %v1410 = vmin.f32 %v1409, %v1293
      %v1411 = vmin.f32 %v1410, %v1297
      %v1412 = vmin.f32 %v1411, %v1301
      %v1413 = vmin.f32 %v1412, %v1305
      %v1414 = vmin.f32 %v1413, %v1309
      %v1415 = vmin.f32 %v1414, %v1313
      %v1416 = vmin.f32 %v1415, %v1317
      %v1417 = vmin.f32 %v1416, %v1321
      %v1418 = vmin.f32 %v1417, %v1325
      %v1419 = vmin.f32 %v1418, %v1329
      %v1420 = vmin.f32 %v1419, %v1333
      %v1421 = vmin.f32 %v1420, %v1337
      %v1422 = vmin.f32 %v1421, %v1341
      %v1423 = vmin.f32 %v1422, %v1345
      %v1424 = vrot.slane %v1423, 4
      %v1425 = vmin.f32 %v1423, %v1424
      %v1426 = vrot.slane %v1425, 2
      %v1427 = vmin.f32 %v1425, %v1426
      %v1428 = vrot.slane %v1427, 1
      %v1429 = vmin.f32 %v1427, %v1428
      %v1430 = vlaneseq
      %v1431 = vshrl.u32 %v1430, 7
      %v1432 = vadd.s32 %v1431, 8
      %v1433 = vadd.s32 %v1431, 16
      %v1434 = vadd.s32 %v1431, 24
      %v1435 = vadd.s32 %v1431, 32
      %v1436 = vadd.s32 %v1431, 40
      %v1437 = vadd.s32 %v1431, 48
      %v1438 = vadd.s32 %v1431, 56
      %v1439 = vadd.s32 %v1431, 64
      %v1440 = vadd.s32 %v1431, 72
      %v1441 = vadd.s32 %v1431, 80
      %v1442 = vadd.s32 %v1431, 88
      %v1443 = vadd.s32 %v1431, 96
      %v1444 = vadd.s32 %v1431, 104
      %v1445 = vadd.s32 %v1431, 112
      %v1446 = vadd.s32 %v1431, 120
      %vm1447 = vcmp.le.f32.partialorder %v1282, %v1366
      %vm1448 = vcmp.le.f32.partialorder %v1283, %v1387
      %vm1449 = vcmp.le.f32.partialorder %v1284, %v1408
      %vm1450 = vcmp.le.f32.partialorder %v1285, %v1429
      %vm1451 = vcmp.le.f32.partialorder %v1286, %v1366
      %vm1452 = vcmp.le.f32.partialorder %v1287, %v1387
      %vm1453 = vcmp.le.f32.partialorder %v1288, %v1408
      %vm1454 = vcmp.le.f32.partialorder %v1289, %v1429
      %vm1455 = vcmp.le.f32.partialorder %v1290, %v1366
      %vm1456 = vcmp.le.f32.partialorder %v1291, %v1387
      %vm1457 = vcmp.le.f32.partialorder %v1292, %v1408
      %vm1458 = vcmp.le.f32.partialorder %v1293, %v1429
      %vm1459 = vcmp.le.f32.partialorder %v1294, %v1366
      %vm1460 = vcmp.le.f32.partialorder %v1295, %v1387
      %vm1461 = vcmp.le.f32.partialorder %v1296, %v1408
      %vm1462 = vcmp.le.f32.partialorder %v1297, %v1429
      %vm1463 = vcmp.le.f32.partialorder %v1298, %v1366
      %vm1464 = vcmp.le.f32.partialorder %v1299, %v1387
      %vm1465 = vcmp.le.f32.partialorder %v1300, %v1408
      %vm1466 = vcmp.le.f32.partialorder %v1301, %v1429
      %vm1467 = vcmp.le.f32.partialorder %v1302, %v1366
      %vm1468 = vcmp.le.f32.partialorder %v1303, %v1387
      %vm1469 = vcmp.le.f32.partialorder %v1304, %v1408
      %vm1470 = vcmp.le.f32.partialorder %v1305, %v1429
      %vm1471 = vcmp.le.f32.partialorder %v1306, %v1366
      %vm1472 = vcmp.le.f32.partialorder %v1307, %v1387
      %vm1473 = vcmp.le.f32.partialorder %v1308, %v1408
      %vm1474 = vcmp.le.f32.partialorder %v1309, %v1429
      %vm1475 = vcmp.le.f32.partialorder %v1310, %v1366
      %vm1476 = vcmp.le.f32.partialorder %v1311, %v1387
      %vm1477 = vcmp.le.f32.partialorder %v1312, %v1408
      %vm1478 = vcmp.le.f32.partialorder %v1313, %v1429
      %vm1479 = vcmp.le.f32.partialorder %v1314, %v1366
      %vm1480 = vcmp.le.f32.partialorder %v1315, %v1387
      %vm1481 = vcmp.le.f32.partialorder %v1316, %v1408
      %vm1482 = vcmp.le.f32.partialorder %v1317, %v1429
      %vm1483 = vcmp.le.f32.partialorder %v1318, %v1366
      %vm1484 = vcmp.le.f32.partialorder %v1319, %v1387
      %vm1485 = vcmp.le.f32.partialorder %v1320, %v1408
      %vm1486 = vcmp.le.f32.partialorder %v1321, %v1429
      %vm1487 = vcmp.le.f32.partialorder %v1322, %v1366
      %vm1488 = vcmp.le.f32.partialorder %v1323, %v1387
      %vm1489 = vcmp.le.f32.partialorder %v1324, %v1408
      %vm1490 = vcmp.le.f32.partialorder %v1325, %v1429
      %vm1491 = vcmp.le.f32.partialorder %v1326, %v1366
      %vm1492 = vcmp.le.f32.partialorder %v1327, %v1387
      %vm1493 = vcmp.le.f32.partialorder %v1328, %v1408
      %vm1494 = vcmp.le.f32.partialorder %v1329, %v1429
      %vm1495 = vcmp.le.f32.partialorder %v1330, %v1366
      %vm1496 = vcmp.le.f32.partialorder %v1331, %v1387
      %vm1497 = vcmp.le.f32.partialorder %v1332, %v1408
      %vm1498 = vcmp.le.f32.partialorder %v1333, %v1429
      %vm1499 = vcmp.le.f32.partialorder %v1334, %v1366
      %vm1500 = vcmp.le.f32.partialorder %v1335, %v1387
      %vm1501 = vcmp.le.f32.partialorder %v1336, %v1408
      %vm1502 = vcmp.le.f32.partialorder %v1337, %v1429
      %vm1503 = vcmp.le.f32.partialorder %v1338, %v1366
      %vm1504 = vcmp.le.f32.partialorder %v1339, %v1387
      %vm1505 = vcmp.le.f32.partialorder %v1340, %v1408
      %vm1506 = vcmp.le.f32.partialorder %v1341, %v1429
      %vm1507 = vcmp.le.f32.partialorder %v1342, %v1366
      %vm1508 = vcmp.le.f32.partialorder %v1343, %v1387
      %vm1509 = vcmp.le.f32.partialorder %v1344, %v1408
      %vm1510 = vcmp.le.f32.partialorder %v1345, %v1429
      %v1511 = vsel %vm1447, %v1431, 256
      %v1512 = vsel %vm1448, %v1431, 256
      %v1513 = vsel %vm1449, %v1431, 256
      %v1514 = vsel %vm1450, %v1431, 256
      %v1515 = vsel %vm1451, %v1432, 256
      %v1516 = vsel %vm1452, %v1432, 256
      %v1517 = vsel %vm1453, %v1432, 256
      %v1518 = vsel %vm1454, %v1432, 256
      %v1519 = vsel %vm1455, %v1433, 256
      %v1520 = vsel %vm1456, %v1433, 256
      %v1521 = vsel %vm1457, %v1433, 256
      %v1522 = vsel %vm1458, %v1433, 256
      %v1523 = vsel %vm1459, %v1434, 256
      %v1524 = vsel %vm1460, %v1434, 256
      %v1525 = vsel %vm1461, %v1434, 256
      %v1526 = vsel %vm1462, %v1434, 256
      %v1527 = vsel %vm1463, %v1435, 256
      %v1528 = vsel %vm1464, %v1435, 256
      %v1529 = vsel %vm1465, %v1435, 256
      %v1530 = vsel %vm1466, %v1435, 256
      %v1531 = vsel %vm1467, %v1436, 256
      %v1532 = vsel %vm1468, %v1436, 256
      %v1533 = vsel %vm1469, %v1436, 256
      %v1534 = vsel %vm1470, %v1436, 256
      %v1535 = vsel %vm1471, %v1437, 256
      %v1536 = vsel %vm1472, %v1437, 256
      %v1537 = vsel %vm1473, %v1437, 256
      %v1538 = vsel %vm1474, %v1437, 256
      %v1539 = vsel %vm1475, %v1438, 256
      %v1540 = vsel %vm1476, %v1438, 256
      %v1541 = vsel %vm1477, %v1438, 256
      %v1542 = vsel %vm1478, %v1438, 256
      %v1543 = vsel %vm1479, %v1439, 256
      %v1544 = vsel %vm1480, %v1439, 256
      %v1545 = vsel %vm1481, %v1439, 256
      %v1546 = vsel %vm1482, %v1439, 256
      %v1547 = vsel %vm1483, %v1440, 256
      %v1548 = vsel %vm1484, %v1440, 256
      %v1549 = vsel %vm1485, %v1440, 256
      %v1550 = vsel %vm1486, %v1440, 256
      %v1551 = vsel %vm1487, %v1441, 256
      %v1552 = vsel %vm1488, %v1441, 256
      %v1553 = vsel %vm1489, %v1441, 256
      %v1554 = vsel %vm1490, %v1441, 256
      %v1555 = vsel %vm1491, %v1442, 256
      %v1556 = vsel %vm1492, %v1442, 256
      %v1557 = vsel %vm1493, %v1442, 256
      %v1558 = vsel %vm1494, %v1442, 256
      %v1559 = vsel %vm1495, %v1443, 256
      %v1560 = vsel %vm1496, %v1443, 256
      %v1561 = vsel %vm1497, %v1443, 256
      %v1562 = vsel %vm1498, %v1443, 256
      %v1563 = vsel %vm1499, %v1444, 256
      %v1564 = vsel %vm1500, %v1444, 256
      %v1565 = vsel %vm1501, %v1444, 256
      %v1566 = vsel %vm1502, %v1444, 256
      %v1567 = vsel %vm1503, %v1445, 256
      %v1568 = vsel %vm1504, %v1445, 256
      %v1569 = vsel %vm1505, %v1445, 256
      %v1570 = vsel %vm1506, %v1445, 256
      %v1571 = vsel %vm1507, %v1446, 256
      %v1572 = vsel %vm1508, %v1446, 256
      %v1573 = vsel %vm1509, %v1446, 256
      %v1574 = vsel %vm1510, %v1446, 256
      %vm1575 = vcmp.lt.s32.totalorder %v1511, %v1515
      %v1576 = vsel %vm1575, %v1511, %v1515
      %vm1577 = vcmp.lt.s32.totalorder %v1576, %v1519
      %v1578 = vsel %vm1577, %v1576, %v1519
      %vm1579 = vcmp.lt.s32.totalorder %v1578, %v1523
      %v1580 = vsel %vm1579, %v1578, %v1523
      %vm1581 = vcmp.lt.s32.totalorder %v1580, %v1527
      %v1582 = vsel %vm1581, %v1580, %v1527
      %vm1583 = vcmp.lt.s32.totalorder %v1582, %v1531
      %v1584 = vsel %vm1583, %v1582, %v1531
      %vm1585 = vcmp.lt.s32.totalorder %v1584, %v1535
      %v1586 = vsel %vm1585, %v1584, %v1535
      %vm1587 = vcmp.lt.s32.totalorder %v1586, %v1539
      %v1588 = vsel %vm1587, %v1586, %v1539
      %vm1589 = vcmp.lt.s32.totalorder %v1588, %v1543
      %v1590 = vsel %vm1589, %v1588, %v1543
      %vm1591 = vcmp.lt.s32.totalorder %v1590, %v1547
      %v1592 = vsel %vm1591, %v1590, %v1547
      %vm1593 = vcmp.lt.s32.totalorder %v1592, %v1551
      %v1594 = vsel %vm1593, %v1592, %v1551
      %vm1595 = vcmp.lt.s32.totalorder %v1594, %v1555
      %v1596 = vsel %vm1595, %v1594, %v1555
      %vm1597 = vcmp.lt.s32.totalorder %v1596, %v1559
      %v1598 = vsel %vm1597, %v1596, %v1559
      %vm1599 = vcmp.lt.s32.totalorder %v1598, %v1563
      %v1600 = vsel %vm1599, %v1598, %v1563
      %vm1601 = vcmp.lt.s32.totalorder %v1600, %v1567
      %v1602 = vsel %vm1601, %v1600, %v1567
      %vm1603 = vcmp.lt.s32.totalorder %v1602, %v1571
      %v1604 = vsel %vm1603, %v1602, %v1571
      %v1605 = vrot.slane %v1604, 4
      %vm1606 = vcmp.lt.s32.totalorder %v1604, %v1605
      %v1607 = vsel %vm1606, %v1604, %v1605
      %v1608 = vrot.slane %v1607, 2
      %vm1609 = vcmp.lt.s32.totalorder %v1607, %v1608
      %v1610 = vsel %vm1609, %v1607, %v1608
      %v1611 = vrot.slane %v1610, 1
      %vm1612 = vcmp.lt.s32.totalorder %v1610, %v1611
      %v1613 = vsel %vm1612, %v1610, %v1611
      %vm1614 = vcmp.lt.s32.totalorder %v1512, %v1516
      %v1615 = vsel %vm1614, %v1512, %v1516
      %vm1616 = vcmp.lt.s32.totalorder %v1615, %v1520
      %v1617 = vsel %vm1616, %v1615, %v1520
      %vm1618 = vcmp.lt.s32.totalorder %v1617, %v1524
      %v1619 = vsel %vm1618, %v1617, %v1524
      %vm1620 = vcmp.lt.s32.totalorder %v1619, %v1528
      %v1621 = vsel %vm1620, %v1619, %v1528
      %vm1622 = vcmp.lt.s32.totalorder %v1621, %v1532
      %v1623 = vsel %vm1622, %v1621, %v1532
      %vm1624 = vcmp.lt.s32.totalorder %v1623, %v1536
      %v1625 = vsel %vm1624, %v1623, %v1536
      %vm1626 = vcmp.lt.s32.totalorder %v1625, %v1540
      %v1627 = vsel %vm1626, %v1625, %v1540
      %vm1628 = vcmp.lt.s32.totalorder %v1627, %v1544
      %v1629 = vsel %vm1628, %v1627, %v1544
      %vm1630 = vcmp.lt.s32.totalorder %v1629, %v1548
      %v1631 = vsel %vm1630, %v1629, %v1548
      %vm1632 = vcmp.lt.s32.totalorder %v1631, %v1552
      %v1633 = vsel %vm1632, %v1631, %v1552
      %vm1634 = vcmp.lt.s32.totalorder %v1633, %v1556
      %v1635 = vsel %vm1634, %v1633, %v1556
      %vm1636 = vcmp.lt.s32.totalorder %v1635, %v1560
      %v1637 = vsel %vm1636, %v1635, %v1560
      %vm1638 = vcmp.lt.s32.totalorder %v1637, %v1564
      %v1639 = vsel %vm1638, %v1637, %v1564
      %vm1640 = vcmp.lt.s32.totalorder %v1639, %v1568
      %v1641 = vsel %vm1640, %v1639, %v1568
      %vm1642 = vcmp.lt.s32.totalorder %v1641, %v1572
      %v1643 = vsel %vm1642, %v1641, %v1572
      %v1644 = vrot.slane %v1643, 4
      %vm1645 = vcmp.lt.s32.totalorder %v1643, %v1644
      %v1646 = vsel %vm1645, %v1643, %v1644
      %v1647 = vrot.slane %v1646, 2
      %vm1648 = vcmp.lt.s32.totalorder %v1646, %v1647
      %v1649 = vsel %vm1648, %v1646, %v1647
      %v1650 = vrot.slane %v1649, 1
      %vm1651 = vcmp.lt.s32.totalorder %v1649, %v1650
      %v1652 = vsel %vm1651, %v1649, %v1650
      %vm1653 = vcmp.lt.s32.totalorder %v1513, %v1517
      %v1654 = vsel %vm1653, %v1513, %v1517
      %vm1655 = vcmp.lt.s32.totalorder %v1654, %v1521
      %v1656 = vsel %vm1655, %v1654, %v1521
      %vm1657 = vcmp.lt.s32.totalorder %v1656, %v1525
      %v1658 = vsel %vm1657, %v1656, %v1525
      %vm1659 = vcmp.lt.s32.totalorder %v1658, %v1529
      %v1660 = vsel %vm1659, %v1658, %v1529
      %vm1661 = vcmp.lt.s32.totalorder %v1660, %v1533
      %v1662 = vsel %vm1661, %v1660, %v1533
      %vm1663 = vcmp.lt.s32.totalorder %v1662, %v1537
      %v1664 = vsel %vm1663, %v1662, %v1537
      %vm1665 = vcmp.lt.s32.totalorder %v1664, %v1541
      %v1666 = vsel %vm1665, %v1664, %v1541
      %vm1667 = vcmp.lt.s32.totalorder %v1666, %v1545
      %v1668 = vsel %vm1667, %v1666, %v1545
      %vm1669 = vcmp.lt.s32.totalorder %v1668, %v1549
      %v1670 = vsel %vm1669, %v1668, %v1549
      %vm1671 = vcmp.lt.s32.totalorder %v1670, %v1553
      %v1672 = vsel %vm1671, %v1670, %v1553
      %vm1673 = vcmp.lt.s32.totalorder %v1672, %v1557
      %v1674 = vsel %vm1673, %v1672, %v1557
      %vm1675 = vcmp.lt.s32.totalorder %v1674, %v1561
      %v1676 = vsel %vm1675, %v1674, %v1561
      %vm1677 = vcmp.lt.s32.totalorder %v1676, %v1565
      %v1678 = vsel %vm1677, %v1676, %v1565
      %vm1679 = vcmp.lt.s32.totalorder %v1678, %v1569
      %v1680 = vsel %vm1679, %v1678, %v1569
      %vm1681 = vcmp.lt.s32.totalorder %v1680, %v1573
      %v1682 = vsel %vm1681, %v1680, %v1573
      %v1683 = vrot.slane %v1682, 4
      %vm1684 = vcmp.lt.s32.totalorder %v1682, %v1683
      %v1685 = vsel %vm1684, %v1682, %v1683
      %v1686 = vrot.slane %v1685, 2
      %vm1687 = vcmp.lt.s32.totalorder %v1685, %v1686
      %v1688 = vsel %vm1687, %v1685, %v1686
      %v1689 = vrot.slane %v1688, 1
      %vm1690 = vcmp.lt.s32.totalorder %v1688, %v1689
      %v1691 = vsel %vm1690, %v1688, %v1689
      %vm1692 = vcmp.lt.s32.totalorder %v1514, %v1518
      %v1693 = vsel %vm1692, %v1514, %v1518
      %vm1694 = vcmp.lt.s32.totalorder %v1693, %v1522
      %v1695 = vsel %vm1694, %v1693, %v1522
      %vm1696 = vcmp.lt.s32.totalorder %v1695, %v1526
      %v1697 = vsel %vm1696, %v1695, %v1526
      %vm1698 = vcmp.lt.s32.totalorder %v1697, %v1530
      %v1699 = vsel %vm1698, %v1697, %v1530
      %vm1700 = vcmp.lt.s32.totalorder %v1699, %v1534
      %v1701 = vsel %vm1700, %v1699, %v1534
      %vm1702 = vcmp.lt.s32.totalorder %v1701, %v1538
      %v1703 = vsel %vm1702, %v1701, %v1538
      %vm1704 = vcmp.lt.s32.totalorder %v1703, %v1542
      %v1705 = vsel %vm1704, %v1703, %v1542
      %vm1706 = vcmp.lt.s32.totalorder %v1705, %v1546
      %v1707 = vsel %vm1706, %v1705, %v1546
      %vm1708 = vcmp.lt.s32.totalorder %v1707, %v1550
      %v1709 = vsel %vm1708, %v1707, %v1550
      %vm1710 = vcmp.lt.s32.totalorder %v1709, %v1554
      %v1711 = vsel %vm1710, %v1709, %v1554
      %vm1712 = vcmp.lt.s32.totalorder %v1711, %v1558
      %v1713 = vsel %vm1712, %v1711, %v1558
      %vm1714 = vcmp.lt.s32.totalorder %v1713, %v1562
      %v1715 = vsel %vm1714, %v1713, %v1562
      %vm1716 = vcmp.lt.s32.totalorder %v1715, %v1566
      %v1717 = vsel %vm1716, %v1715, %v1566
      %vm1718 = vcmp.lt.s32.totalorder %v1717, %v1570
      %v1719 = vsel %vm1718, %v1717, %v1570
      %vm1720 = vcmp.lt.s32.totalorder %v1719, %v1574
      %v1721 = vsel %vm1720, %v1719, %v1574
      %v1722 = vrot.slane %v1721, 4
      %vm1723 = vcmp.lt.s32.totalorder %v1721, %v1722
      %v1724 = vsel %vm1723, %v1721, %v1722
      %v1725 = vrot.slane %v1724, 2
      %vm1726 = vcmp.lt.s32.totalorder %v1724, %v1725
      %v1727 = vsel %vm1726, %v1724, %v1725
      %v1728 = vrot.slane %v1727, 1
      %vm1729 = vcmp.lt.s32.totalorder %v1727, %v1728
      %v1730 = vsel %vm1729, %v1727, %v1728
      %v1731 = vld [vmem:[%s481 + $0x80] sm:$0xff]
      %v1732 = vld [vmem:[%s481 + $0x88] sm:$0xff]
      %v1733 = vld [vmem:[%s481 + $0x90] sm:$0xff]
      %v1734 = vld [vmem:[%s481 + $0x98] sm:$0xff]
      %v1735 = vld [vmem:[%s481 + $0xa0] sm:$0xff]
      %v1736 = vld [vmem:[%s481 + $0xa8] sm:$0xff]
      %v1737 = vld [vmem:[%s481 + $0xb0] sm:$0xff]
      %v1738 = vld [vmem:[%s481 + $0xb8] sm:$0xff]
      %v1739 = vld [vmem:[%s481 + $0xc0] sm:$0xff]
      %v1740 = vld [vmem:[%s481 + $0xc8] sm:$0xff]
      %v1741 = vld [vmem:[%s481 + $0xd0] sm:$0xff]
      %v1742 = vld [vmem:[%s481 + $0xd8] sm:$0xff]
      %v1743 = vld [vmem:[%s481 + $0xe0] sm:$0xff]
      %v1744 = vld [vmem:[%s481 + $0xe8] sm:$0xff]
      %v1745 = vld [vmem:[%s481 + $0xf0] sm:$0xff]
      %v1746 = vld [vmem:[%s481 + $0xf8] sm:$0xff]
      %v1747 = vld [vmem:[%s488 + $0x80] sm:$0xff]
      %v1748 = vld [vmem:[%s488 + $0x88] sm:$0xff]
      %v1749 = vld [vmem:[%s488 + $0x90] sm:$0xff]
      %v1750 = vld [vmem:[%s488 + $0x98] sm:$0xff]
      %v1751 = vld [vmem:[%s488 + $0xa0] sm:$0xff]
      %v1752 = vld [vmem:[%s488 + $0xa8] sm:$0xff]
      %v1753 = vld [vmem:[%s488 + $0xb0] sm:$0xff]
      %v1754 = vld [vmem:[%s488 + $0xb8] sm:$0xff]
      %v1755 = vld [vmem:[%s488 + $0xc0] sm:$0xff]
      %v1756 = vld [vmem:[%s488 + $0xc8] sm:$0xff]
      %v1757 = vld [vmem:[%s488 + $0xd0] sm:$0xff]
      %v1758 = vld [vmem:[%s488 + $0xd8] sm:$0xff]
      %v1759 = vld [vmem:[%s488 + $0xe0] sm:$0xff]
      %v1760 = vld [vmem:[%s488 + $0xe8] sm:$0xff]
      %v1761 = vld [vmem:[%s488 + $0xf0] sm:$0xff]
      %v1762 = vld [vmem:[%s488 + $0xf8] sm:$0xff]
      %v1764 = vsel %vm703, %v1731, 0
      %v1767 = vsel %vm703, %v1732, 0
      %v1770 = vsel %vm703, %v1733, 0
      %v1773 = vsel %vm703, %v1734, 0
      %v1776 = vsel %vm703, %v1735, 0
      %v1779 = vsel %vm703, %v1736, 0
      %v1782 = vsel %vm703, %v1737, 0
      %v1785 = vsel %vm703, %v1738, 0
      %v1788 = vsel %vm703, %v1739, 0
      %v1791 = vsel %vm703, %v1740, 0
      %v1794 = vsel %vm703, %v1741, 0
      %v1797 = vsel %vm703, %v1742, 0
      %v1800 = vsel %vm703, %v1743, 0
      %v1803 = vsel %vm703, %v1744, 0
      %v1806 = vsel %vm703, %v1745, 0
      %v1809 = vsel %vm703, %v1746, 0
      %1811 = vmatprep.subr.mxu0 0.0
      %1812 = vmatpush1.msra.mxu0 0.0
      %1813 = vmatprep.subr.mxu0 0.0
      %1814 = vmatpush1.msra.mxu0 0.0
      %1815 = vmatprep.subr.mxu0 0.0
      %1816 = vmatpush1.msra.mxu0 0.0
      %1817 = vmatprep.subr.mxu0 0.0
      %1818 = vmatpush1.msra.mxu0 0.0
      %1819 = vmatprep.subr.mxu0 0.0
      %1820 = vmatpush1.msra.mxu0 0.0
      %1821 = vmatprep.subr.mxu0 0.0
      %1822 = vmatpush1.msra.mxu0 0.0
      %1823 = vmatprep.subr.mxu0 0.0
      %1824 = vmatpush1.msra.mxu0 0.0
      %1825 = vmatprep.subr.mxu0 0.0
      %1826 = vmatpush1.msra.mxu0 0.0
      %1827 = vmatprep.subr.mxu0 0.0
      %1828 = vmatpush1.msra.mxu0 0.0
      %1829 = vmatprep.subr.mxu0 0.0
      %1830 = vmatpush1.msra.mxu0 0.0
      %1831 = vmatprep.subr.mxu0 0.0
      %1832 = vmatpush1.msra.mxu0 0.0
      %1833 = vmatprep.subr.mxu0 0.0
      %1834 = vmatpush1.msra.mxu0 0.0
      %1835 = vmatprep.subr.mxu0 %v616
      %1836 = vmatpush1.msra.mxu0 %v615
      %1837 = vmatprep.subr.mxu0 %v612
      %1838 = vmatpush1.msra.mxu0 %v611
      %1839 = vmatprep.subr.mxu0 %v608
      %1840 = vmatpush1.msra.mxu0 %v607
      %1841 = vmatprep.subr.mxu0 %v604
      %1842 = vmatpush1.msra.mxu0 %v603
      %1843 = vmatprep.subr.mxu0 0.0
      %1844 = vmatpush2.msra.mxu0 0.0
      %1845 = vmatprep.subr.mxu0 0.0
      %1846 = vmatpush2.msra.mxu0 0.0
      %1847 = vmatprep.subr.mxu0 0.0
      %1848 = vmatpush2.msra.mxu0 0.0
      %1849 = vmatprep.subr.mxu0 0.0
      %1850 = vmatpush2.msra.mxu0 0.0
      %1851 = vmatprep.subr.mxu0 0.0
      %1852 = vmatpush2.msra.mxu0 0.0
      %1853 = vmatprep.subr.mxu0 0.0
      %1854 = vmatpush2.msra.mxu0 0.0
      %1855 = vmatprep.subr.mxu0 0.0
      %1856 = vmatpush2.msra.mxu0 0.0
      %1857 = vmatprep.subr.mxu0 0.0
      %1858 = vmatpush2.msra.mxu0 0.0
      %1859 = vmatprep.subr.mxu0 0.0
      %1860 = vmatpush2.msra.mxu0 0.0
      %1861 = vmatprep.subr.mxu0 0.0
      %1862 = vmatpush2.msra.mxu0 0.0
      %1863 = vmatprep.subr.mxu0 0.0
      %1864 = vmatpush2.msra.mxu0 0.0
      %1865 = vmatprep.subr.mxu0 0.0
      %1866 = vmatpush2.msra.mxu0 0.0
      %1867 = vmatprep.subr.mxu0 0.0
      %1868 = vmatpush2.msra.mxu0 0.0
      %1869 = vmatprep.subr.mxu0 0.0
      %1870 = vmatpush2.msra.mxu0 0.0
      %1871 = vmatprep.subr.mxu0 0.0
      %1872 = vmatpush2.msra.mxu0 0.0
      %1873 = vmatprep.subr.mxu0 0.0
      %1874 = vmatpush2.msra.mxu0 0.0
      %1875 = vmatprep.mubr.f32.mxu0 0.0
      %1876 = vmatmul.mubr.f32.gmra.mxu0 %v1764
      %v1877 = vpop.f32.mrf.mxu0
      %v1878 = vadd.f32 0.0, %v1877
      %v1879 = vpop.f32.mrf.mxu0
      %v1880 = vadd.f32 0.0, %v1879
      %1881 = vmatprep.mubr.f32.mxu0 0.0
      %1882 = vmatmul.mubr.f32.gmra.mxu0 %v1767
      %v1883 = vpop.f32.mrf.mxu0
      %v1884 = vadd.f32 0.0, %v1883
      %v1885 = vpop.f32.mrf.mxu0
      %v1886 = vadd.f32 0.0, %v1885
      %1887 = vmatprep.mubr.f32.mxu0 0.0
      %1888 = vmatmul.mubr.f32.gmra.mxu0 %v1770
      %v1889 = vpop.f32.mrf.mxu0
      %v1890 = vadd.f32 0.0, %v1889
      %v1891 = vpop.f32.mrf.mxu0
      %v1892 = vadd.f32 0.0, %v1891
      %1893 = vmatprep.mubr.f32.mxu0 0.0
      %1894 = vmatmul.mubr.f32.gmra.mxu0 %v1773
      %v1895 = vpop.f32.mrf.mxu0
      %v1896 = vadd.f32 0.0, %v1895
      %v1897 = vpop.f32.mrf.mxu0
      %v1898 = vadd.f32 0.0, %v1897
      %1899 = vmatprep.mubr.f32.mxu0 0.0
      %1900 = vmatmul.mubr.f32.gmra.mxu0 %v1776
      %v1901 = vpop.f32.mrf.mxu0
      %v1902 = vadd.f32 0.0, %v1901
      %v1903 = vpop.f32.mrf.mxu0
      %v1904 = vadd.f32 0.0, %v1903
      %1905 = vmatprep.mubr.f32.mxu0 0.0
      %1906 = vmatmul.mubr.f32.gmra.mxu0 %v1779
      %v1907 = vpop.f32.mrf.mxu0
      %v1908 = vadd.f32 0.0, %v1907
      %v1909 = vpop.f32.mrf.mxu0
      %v1910 = vadd.f32 0.0, %v1909
      %1911 = vmatprep.mubr.f32.mxu0 0.0
      %1912 = vmatmul.mubr.f32.gmra.mxu0 %v1782
      %v1913 = vpop.f32.mrf.mxu0
      %v1914 = vadd.f32 0.0, %v1913
      %v1915 = vpop.f32.mrf.mxu0
      %v1916 = vadd.f32 0.0, %v1915
      %1917 = vmatprep.mubr.f32.mxu0 0.0
      %1918 = vmatmul.mubr.f32.gmra.mxu0 %v1785
      %v1919 = vpop.f32.mrf.mxu0
      %v1920 = vadd.f32 0.0, %v1919
      %v1921 = vpop.f32.mrf.mxu0
      %v1922 = vadd.f32 0.0, %v1921
      %1923 = vmatprep.mubr.f32.mxu0 0.0
      %1924 = vmatmul.mubr.f32.gmra.mxu0 %v1788
      %v1925 = vpop.f32.mrf.mxu0
      %v1926 = vadd.f32 0.0, %v1925
      %v1927 = vpop.f32.mrf.mxu0
      %v1928 = vadd.f32 0.0, %v1927
      %1929 = vmatprep.mubr.f32.mxu0 0.0
      %1930 = vmatmul.mubr.f32.gmra.mxu0 %v1791
      %v1931 = vpop.f32.mrf.mxu0
      %v1932 = vadd.f32 0.0, %v1931
      %v1933 = vpop.f32.mrf.mxu0
      %v1934 = vadd.f32 0.0, %v1933
      %1935 = vmatprep.mubr.f32.mxu0 0.0
      %1936 = vmatmul.mubr.f32.gmra.mxu0 %v1794
      %v1937 = vpop.f32.mrf.mxu0
      %v1938 = vadd.f32 0.0, %v1937
      %v1939 = vpop.f32.mrf.mxu0
      %v1940 = vadd.f32 0.0, %v1939
      %1941 = vmatprep.mubr.f32.mxu0 0.0
      %1942 = vmatmul.mubr.f32.gmra.mxu0 %v1797
      %v1943 = vpop.f32.mrf.mxu0
      %v1944 = vadd.f32 0.0, %v1943
      %v1945 = vpop.f32.mrf.mxu0
      %v1946 = vadd.f32 0.0, %v1945
      %1947 = vmatprep.mubr.f32.mxu0 0.0
      %1948 = vmatmul.mubr.f32.gmra.mxu0 %v1800
      %v1949 = vpop.f32.mrf.mxu0
      %v1950 = vadd.f32 0.0, %v1949
      %v1951 = vpop.f32.mrf.mxu0
      %v1952 = vadd.f32 0.0, %v1951
      %1953 = vmatprep.mubr.f32.mxu0 0.0
      %1954 = vmatmul.mubr.f32.gmra.mxu0 %v1803
      %v1955 = vpop.f32.mrf.mxu0
      %v1956 = vadd.f32 0.0, %v1955
      %v1957 = vpop.f32.mrf.mxu0
      %v1958 = vadd.f32 0.0, %v1957
      %1959 = vmatprep.mubr.f32.mxu0 0.0
      %1960 = vmatmul.mubr.f32.gmra.mxu0 %v1806
      %v1961 = vpop.f32.mrf.mxu0
      %v1962 = vadd.f32 0.0, %v1961
      %v1963 = vpop.f32.mrf.mxu0
      %v1964 = vadd.f32 0.0, %v1963
      %1965 = vmatprep.mubr.f32.mxu0 0.0
      %1966 = vmatmul.mubr.f32.gmra.mxu0 %v1809
      %v1967 = vpop.f32.mrf.mxu0
      %v1968 = vadd.f32 0.0, %v1967
      %v1969 = vpop.f32.mrf.mxu0
      %v1970 = vadd.f32 0.0, %v1969
      %1971 = vdwg.mxu0
      %1972 = vmatprep.subr.mxu0 0.0
      %1973 = vmatpush1.msra.mxu0 0.0
      %1974 = vmatprep.subr.mxu0 0.0
      %1975 = vmatpush1.msra.mxu0 0.0
      %1976 = vmatprep.subr.mxu0 0.0
      %1977 = vmatpush1.msra.mxu0 0.0
      %1978 = vmatprep.subr.mxu0 0.0
      %1979 = vmatpush1.msra.mxu0 0.0
      %1980 = vmatprep.subr.mxu0 0.0
      %1981 = vmatpush1.msra.mxu0 0.0
      %1982 = vmatprep.subr.mxu0 0.0
      %1983 = vmatpush1.msra.mxu0 0.0
      %1984 = vmatprep.subr.mxu0 0.0
      %1985 = vmatpush1.msra.mxu0 0.0
      %1986 = vmatprep.subr.mxu0 0.0
      %1987 = vmatpush1.msra.mxu0 0.0
      %1988 = vmatprep.subr.mxu0 0.0
      %1989 = vmatpush1.msra.mxu0 0.0
      %1990 = vmatprep.subr.mxu0 0.0
      %1991 = vmatpush1.msra.mxu0 0.0
      %1992 = vmatprep.subr.mxu0 0.0
      %1993 = vmatpush1.msra.mxu0 0.0
      %1994 = vmatprep.subr.mxu0 0.0
      %1995 = vmatpush1.msra.mxu0 0.0
      %1996 = vmatprep.subr.mxu0 %v618
      %1997 = vmatpush1.msra.mxu0 %v617
      %1998 = vmatprep.subr.mxu0 %v614
      %1999 = vmatpush1.msra.mxu0 %v613
      %2000 = vmatprep.subr.mxu0 %v610
      %2001 = vmatpush1.msra.mxu0 %v609
      %2002 = vmatprep.subr.mxu0 %v606
      %2003 = vmatpush1.msra.mxu0 %v605
      %2004 = vmatprep.subr.mxu0 0.0
      %2005 = vmatpush2.msra.mxu0 0.0
      %2006 = vmatprep.subr.mxu0 0.0
      %2007 = vmatpush2.msra.mxu0 0.0
      %2008 = vmatprep.subr.mxu0 0.0
      %2009 = vmatpush2.msra.mxu0 0.0
      %2010 = vmatprep.subr.mxu0 0.0
      %2011 = vmatpush2.msra.mxu0 0.0
      %2012 = vmatprep.subr.mxu0 0.0
      %2013 = vmatpush2.msra.mxu0 0.0
      %2014 = vmatprep.subr.mxu0 0.0
      %2015 = vmatpush2.msra.mxu0 0.0
      %2016 = vmatprep.subr.mxu0 0.0
      %2017 = vmatpush2.msra.mxu0 0.0
      %2018 = vmatprep.subr.mxu0 0.0
      %2019 = vmatpush2.msra.mxu0 0.0
      %2020 = vmatprep.subr.mxu0 0.0
      %2021 = vmatpush2.msra.mxu0 0.0
      %2022 = vmatprep.subr.mxu0 0.0
      %2023 = vmatpush2.msra.mxu0 0.0
      %2024 = vmatprep.subr.mxu0 0.0
      %2025 = vmatpush2.msra.mxu0 0.0
      %2026 = vmatprep.subr.mxu0 0.0
      %2027 = vmatpush2.msra.mxu0 0.0
      %2028 = vmatprep.subr.mxu0 0.0
      %2029 = vmatpush2.msra.mxu0 0.0
      %2030 = vmatprep.subr.mxu0 0.0
      %2031 = vmatpush2.msra.mxu0 0.0
      %2032 = vmatprep.subr.mxu0 0.0
      %2033 = vmatpush2.msra.mxu0 0.0
      %2034 = vmatprep.subr.mxu0 0.0
      %2035 = vmatpush2.msra.mxu0 0.0
      %2036 = vmatprep.mubr.f32.mxu0 0.0
      %2037 = vmatmul.mubr.f32.gmra.mxu0 %v1764
      %v2038 = vpop.f32.mrf.mxu0
      %v2039 = vadd.f32 0.0, %v2038
      %v2040 = vpop.f32.mrf.mxu0
      %v2041 = vadd.f32 0.0, %v2040
      %2042 = vmatprep.mubr.f32.mxu0 0.0
      %2043 = vmatmul.mubr.f32.gmra.mxu0 %v1767
      %v2044 = vpop.f32.mrf.mxu0
      %v2045 = vadd.f32 0.0, %v2044
      %v2046 = vpop.f32.mrf.mxu0
      %v2047 = vadd.f32 0.0, %v2046
      %2048 = vmatprep.mubr.f32.mxu0 0.0
      %2049 = vmatmul.mubr.f32.gmra.mxu0 %v1770
      %v2050 = vpop.f32.mrf.mxu0
      %v2051 = vadd.f32 0.0, %v2050
      %v2052 = vpop.f32.mrf.mxu0
      %v2053 = vadd.f32 0.0, %v2052
      %2054 = vmatprep.mubr.f32.mxu0 0.0
      %2055 = vmatmul.mubr.f32.gmra.mxu0 %v1773
      %v2056 = vpop.f32.mrf.mxu0
      %v2057 = vadd.f32 0.0, %v2056
      %v2058 = vpop.f32.mrf.mxu0
      %v2059 = vadd.f32 0.0, %v2058
      %2060 = vmatprep.mubr.f32.mxu0 0.0
      %2061 = vmatmul.mubr.f32.gmra.mxu0 %v1776
      %v2062 = vpop.f32.mrf.mxu0
      %v2063 = vadd.f32 0.0, %v2062
      %v2064 = vpop.f32.mrf.mxu0
      %v2065 = vadd.f32 0.0, %v2064
      %2066 = vmatprep.mubr.f32.mxu0 0.0
      %2067 = vmatmul.mubr.f32.gmra.mxu0 %v1779
      %v2068 = vpop.f32.mrf.mxu0
      %v2069 = vadd.f32 0.0, %v2068
      %v2070 = vpop.f32.mrf.mxu0
      %v2071 = vadd.f32 0.0, %v2070
      %2072 = vmatprep.mubr.f32.mxu0 0.0
      %2073 = vmatmul.mubr.f32.gmra.mxu0 %v1782
      %v2074 = vpop.f32.mrf.mxu0
      %v2075 = vadd.f32 0.0, %v2074
      %v2076 = vpop.f32.mrf.mxu0
      %v2077 = vadd.f32 0.0, %v2076
      %2078 = vmatprep.mubr.f32.mxu0 0.0
      %2079 = vmatmul.mubr.f32.gmra.mxu0 %v1785
      %v2080 = vpop.f32.mrf.mxu0
      %v2081 = vadd.f32 0.0, %v2080
      %v2082 = vpop.f32.mrf.mxu0
      %v2083 = vadd.f32 0.0, %v2082
      %2084 = vmatprep.mubr.f32.mxu0 0.0
      %2085 = vmatmul.mubr.f32.gmra.mxu0 %v1788
      %v2086 = vpop.f32.mrf.mxu0
      %v2087 = vadd.f32 0.0, %v2086
      %v2088 = vpop.f32.mrf.mxu0
      %v2089 = vadd.f32 0.0, %v2088
      %2090 = vmatprep.mubr.f32.mxu0 0.0
      %2091 = vmatmul.mubr.f32.gmra.mxu0 %v1791
      %v2092 = vpop.f32.mrf.mxu0
      %v2093 = vadd.f32 0.0, %v2092
      %v2094 = vpop.f32.mrf.mxu0
      %v2095 = vadd.f32 0.0, %v2094
      %2096 = vmatprep.mubr.f32.mxu0 0.0
      %2097 = vmatmul.mubr.f32.gmra.mxu0 %v1794
      %v2098 = vpop.f32.mrf.mxu0
      %v2099 = vadd.f32 0.0, %v2098
      %v2100 = vpop.f32.mrf.mxu0
      %v2101 = vadd.f32 0.0, %v2100
      %2102 = vmatprep.mubr.f32.mxu0 0.0
      %2103 = vmatmul.mubr.f32.gmra.mxu0 %v1797
      %v2104 = vpop.f32.mrf.mxu0
      %v2105 = vadd.f32 0.0, %v2104
      %v2106 = vpop.f32.mrf.mxu0
      %v2107 = vadd.f32 0.0, %v2106
      %2108 = vmatprep.mubr.f32.mxu0 0.0
      %2109 = vmatmul.mubr.f32.gmra.mxu0 %v1800
      %v2110 = vpop.f32.mrf.mxu0
      %v2111 = vadd.f32 0.0, %v2110
      %v2112 = vpop.f32.mrf.mxu0
      %v2113 = vadd.f32 0.0, %v2112
      %2114 = vmatprep.mubr.f32.mxu0 0.0
      %2115 = vmatmul.mubr.f32.gmra.mxu0 %v1803
      %v2116 = vpop.f32.mrf.mxu0
      %v2117 = vadd.f32 0.0, %v2116
      %v2118 = vpop.f32.mrf.mxu0
      %v2119 = vadd.f32 0.0, %v2118
      %2120 = vmatprep.mubr.f32.mxu0 0.0
      %2121 = vmatmul.mubr.f32.gmra.mxu0 %v1806
      %v2122 = vpop.f32.mrf.mxu0
      %v2123 = vadd.f32 0.0, %v2122
      %v2124 = vpop.f32.mrf.mxu0
      %v2125 = vadd.f32 0.0, %v2124
      %2126 = vmatprep.mubr.f32.mxu0 0.0
      %2127 = vmatmul.mubr.f32.gmra.mxu0 %v1809
      %v2128 = vpop.f32.mrf.mxu0
      %v2129 = vadd.f32 0.0, %v2128
      %v2130 = vpop.f32.mrf.mxu0
      %v2131 = vadd.f32 0.0, %v2130
      %2132 = vdwg.mxu0
      %v2133 = vmul.f32 %v1878, 2.0
      %v2134 = vmul.f32 %v1880, 2.0
      %v2135 = vmul.f32 %v2039, 2.0
      %v2136 = vmul.f32 %v2041, 2.0
      %v2137 = vmul.f32 %v1884, 2.0
      %v2138 = vmul.f32 %v1886, 2.0
      %v2139 = vmul.f32 %v2045, 2.0
      %v2140 = vmul.f32 %v2047, 2.0
      %v2141 = vmul.f32 %v1890, 2.0
      %v2142 = vmul.f32 %v1892, 2.0
      %v2143 = vmul.f32 %v2051, 2.0
      %v2144 = vmul.f32 %v2053, 2.0
      %v2145 = vmul.f32 %v1896, 2.0
      %v2146 = vmul.f32 %v1898, 2.0
      %v2147 = vmul.f32 %v2057, 2.0
      %v2148 = vmul.f32 %v2059, 2.0
      %v2149 = vmul.f32 %v1902, 2.0
      %v2150 = vmul.f32 %v1904, 2.0
      %v2151 = vmul.f32 %v2063, 2.0
      %v2152 = vmul.f32 %v2065, 2.0
      %v2153 = vmul.f32 %v1908, 2.0
      %v2154 = vmul.f32 %v1910, 2.0
      %v2155 = vmul.f32 %v2069, 2.0
      %v2156 = vmul.f32 %v2071, 2.0
      %v2157 = vmul.f32 %v1914, 2.0
      %v2158 = vmul.f32 %v1916, 2.0
      %v2159 = vmul.f32 %v2075, 2.0
      %v2160 = vmul.f32 %v2077, 2.0
      %v2161 = vmul.f32 %v1920, 2.0
      %v2162 = vmul.f32 %v1922, 2.0
      %v2163 = vmul.f32 %v2081, 2.0
      %v2164 = vmul.f32 %v2083, 2.0
      %v2165 = vmul.f32 %v1926, 2.0
      %v2166 = vmul.f32 %v1928, 2.0
      %v2167 = vmul.f32 %v2087, 2.0
      %v2168 = vmul.f32 %v2089, 2.0
      %v2169 = vmul.f32 %v1932, 2.0
      %v2170 = vmul.f32 %v1934, 2.0
      %v2171 = vmul.f32 %v2093, 2.0
      %v2172 = vmul.f32 %v2095, 2.0
      %v2173 = vmul.f32 %v1938, 2.0
      %v2174 = vmul.f32 %v1940, 2.0
      %v2175 = vmul.f32 %v2099, 2.0
      %v2176 = vmul.f32 %v2101, 2.0
      %v2177 = vmul.f32 %v1944, 2.0
      %v2178 = vmul.f32 %v1946, 2.0
      %v2179 = vmul.f32 %v2105, 2.0
      %v2180 = vmul.f32 %v2107, 2.0
      %v2181 = vmul.f32 %v1950, 2.0
      %v2182 = vmul.f32 %v1952, 2.0
      %v2183 = vmul.f32 %v2111, 2.0
      %v2184 = vmul.f32 %v2113, 2.0
      %v2185 = vmul.f32 %v1956, 2.0
      %v2186 = vmul.f32 %v1958, 2.0
      %v2187 = vmul.f32 %v2117, 2.0
      %v2188 = vmul.f32 %v2119, 2.0
      %v2189 = vmul.f32 %v1962, 2.0
      %v2190 = vmul.f32 %v1964, 2.0
      %v2191 = vmul.f32 %v2123, 2.0
      %v2192 = vmul.f32 %v2125, 2.0
      %v2193 = vmul.f32 %v1968, 2.0
      %v2194 = vmul.f32 %v1970, 2.0
      %v2195 = vmul.f32 %v2129, 2.0
      %v2196 = vmul.f32 %v2131, 2.0
      %2198 = vset.pattern.permute.xlu0 0
      %2199 = vperm.xlu0 %2198, %v1747
      %v2200 = vpop.permute.xlu0 %2199
      %2203 = vset.pattern.permute.xlu0 0
      %2204 = vperm.xlu0 %2203, %v1748
      %v2205 = vpop.permute.xlu0 %2204
      %2208 = vset.pattern.permute.xlu0 0
      %2209 = vperm.xlu0 %2208, %v1749
      %v2210 = vpop.permute.xlu0 %2209
      %2213 = vset.pattern.permute.xlu0 0
      %2214 = vperm.xlu0 %2213, %v1750
      %v2215 = vpop.permute.xlu0 %2214
      %2218 = vset.pattern.permute.xlu0 0
      %2219 = vperm.xlu0 %2218, %v1751
      %v2220 = vpop.permute.xlu0 %2219
      %2223 = vset.pattern.permute.xlu0 0
      %2224 = vperm.xlu0 %2223, %v1752
      %v2225 = vpop.permute.xlu0 %2224
      %2228 = vset.pattern.permute.xlu0 0
      %2229 = vperm.xlu0 %2228, %v1753
      %v2230 = vpop.permute.xlu0 %2229
      %2233 = vset.pattern.permute.xlu0 0
      %2234 = vperm.xlu0 %2233, %v1754
      %v2235 = vpop.permute.xlu0 %2234
      %2238 = vset.pattern.permute.xlu0 0
      %2239 = vperm.xlu0 %2238, %v1755
      %v2240 = vpop.permute.xlu0 %2239
      %2243 = vset.pattern.permute.xlu0 0
      %2244 = vperm.xlu0 %2243, %v1756
      %v2245 = vpop.permute.xlu0 %2244
      %2248 = vset.pattern.permute.xlu0 0
      %2249 = vperm.xlu0 %2248, %v1757
      %v2250 = vpop.permute.xlu0 %2249
      %2253 = vset.pattern.permute.xlu0 0
      %2254 = vperm.xlu0 %2253, %v1758
      %v2255 = vpop.permute.xlu0 %2254
      %2258 = vset.pattern.permute.xlu0 0
      %2259 = vperm.xlu0 %2258, %v1759
      %v2260 = vpop.permute.xlu0 %2259
      %2263 = vset.pattern.permute.xlu0 0
      %2264 = vperm.xlu0 %2263, %v1760
      %v2265 = vpop.permute.xlu0 %2264
      %2268 = vset.pattern.permute.xlu0 0
      %2269 = vperm.xlu0 %2268, %v1761
      %v2270 = vpop.permute.xlu0 %2269
      %2273 = vset.pattern.permute.xlu0 0
      %2274 = vperm.xlu0 %2273, %v1762
      %v2275 = vpop.permute.xlu0 %2274
      %v2277 = vsub.f32 %v2200, %v2133
      %v2278 = vsub.f32 %v2200, %v2134
      %v2279 = vsub.f32 %v2200, %v2135
      %v2280 = vsub.f32 %v2200, %v2136
      %v2281 = vsub.f32 %v2205, %v2137
      %v2282 = vsub.f32 %v2205, %v2138
      %v2283 = vsub.f32 %v2205, %v2139
      %v2284 = vsub.f32 %v2205, %v2140
      %v2285 = vsub.f32 %v2210, %v2141
      %v2286 = vsub.f32 %v2210, %v2142
      %v2287 = vsub.f32 %v2210, %v2143
      %v2288 = vsub.f32 %v2210, %v2144
      %v2289 = vsub.f32 %v2215, %v2145
      %v2290 = vsub.f32 %v2215, %v2146
      %v2291 = vsub.f32 %v2215, %v2147
      %v2292 = vsub.f32 %v2215, %v2148
      %v2293 = vsub.f32 %v2220, %v2149
      %v2294 = vsub.f32 %v2220, %v2150
      %v2295 = vsub.f32 %v2220, %v2151
      %v2296 = vsub.f32 %v2220, %v2152
      %v2297 = vsub.f32 %v2225, %v2153
      %v2298 = vsub.f32 %v2225, %v2154
      %v2299 = vsub.f32 %v2225, %v2155
      %v2300 = vsub.f32 %v2225, %v2156
      %v2301 = vsub.f32 %v2230, %v2157
      %v2302 = vsub.f32 %v2230, %v2158
      %v2303 = vsub.f32 %v2230, %v2159
      %v2304 = vsub.f32 %v2230, %v2160
      %v2305 = vsub.f32 %v2235, %v2161
      %v2306 = vsub.f32 %v2235, %v2162
      %v2307 = vsub.f32 %v2235, %v2163
      %v2308 = vsub.f32 %v2235, %v2164
      %v2309 = vsub.f32 %v2240, %v2165
      %v2310 = vsub.f32 %v2240, %v2166
      %v2311 = vsub.f32 %v2240, %v2167
      %v2312 = vsub.f32 %v2240, %v2168
      %v2313 = vsub.f32 %v2245, %v2169
      %v2314 = vsub.f32 %v2245, %v2170
      %v2315 = vsub.f32 %v2245, %v2171
      %v2316 = vsub.f32 %v2245, %v2172
      %v2317 = vsub.f32 %v2250, %v2173
      %v2318 = vsub.f32 %v2250, %v2174
      %v2319 = vsub.f32 %v2250, %v2175
      %v2320 = vsub.f32 %v2250, %v2176
      %v2321 = vsub.f32 %v2255, %v2177
      %v2322 = vsub.f32 %v2255, %v2178
      %v2323 = vsub.f32 %v2255, %v2179
      %v2324 = vsub.f32 %v2255, %v2180
      %v2325 = vsub.f32 %v2260, %v2181
      %v2326 = vsub.f32 %v2260, %v2182
      %v2327 = vsub.f32 %v2260, %v2183
      %v2328 = vsub.f32 %v2260, %v2184
      %v2329 = vsub.f32 %v2265, %v2185
      %v2330 = vsub.f32 %v2265, %v2186
      %v2331 = vsub.f32 %v2265, %v2187
      %v2332 = vsub.f32 %v2265, %v2188
      %v2333 = vsub.f32 %v2270, %v2189
      %v2334 = vsub.f32 %v2270, %v2190
      %v2335 = vsub.f32 %v2270, %v2191
      %v2336 = vsub.f32 %v2270, %v2192
      %v2337 = vsub.f32 %v2275, %v2193
      %v2338 = vsub.f32 %v2275, %v2194
      %v2339 = vsub.f32 %v2275, %v2195
      %v2340 = vsub.f32 %v2275, %v2196
      %v2341 = vadd.f32 %v2277, %v643
      %v2342 = vadd.f32 %v2278, %v652
      %v2343 = vadd.f32 %v2279, %v661
      %v2344 = vadd.f32 %v2280, %v670
      %v2345 = vadd.f32 %v2281, %v643
      %v2346 = vadd.f32 %v2282, %v652
      %v2347 = vadd.f32 %v2283, %v661
      %v2348 = vadd.f32 %v2284, %v670
      %v2349 = vadd.f32 %v2285, %v643
      %v2350 = vadd.f32 %v2286, %v652
      %v2351 = vadd.f32 %v2287, %v661
      %v2352 = vadd.f32 %v2288, %v670
      %v2353 = vadd.f32 %v2289, %v643
      %v2354 = vadd.f32 %v2290, %v652
      %v2355 = vadd.f32 %v2291, %v661
      %v2356 = vadd.f32 %v2292, %v670
      %v2357 = vadd.f32 %v2293, %v643
      %v2358 = vadd.f32 %v2294, %v652
      %v2359 = vadd.f32 %v2295, %v661
      %v2360 = vadd.f32 %v2296, %v670
      %v2361 = vadd.f32 %v2297, %v643
      %v2362 = vadd.f32 %v2298, %v652
      %v2363 = vadd.f32 %v2299, %v661
      %v2364 = vadd.f32 %v2300, %v670
      %v2365 = vadd.f32 %v2301, %v643
      %v2366 = vadd.f32 %v2302, %v652
      %v2367 = vadd.f32 %v2303, %v661
      %v2368 = vadd.f32 %v2304, %v670
      %v2369 = vadd.f32 %v2305, %v643
      %v2370 = vadd.f32 %v2306, %v652
      %v2371 = vadd.f32 %v2307, %v661
      %v2372 = vadd.f32 %v2308, %v670
      %v2373 = vadd.f32 %v2309, %v643
      %v2374 = vadd.f32 %v2310, %v652
      %v2375 = vadd.f32 %v2311, %v661
      %v2376 = vadd.f32 %v2312, %v670
      %v2377 = vadd.f32 %v2313, %v643
      %v2378 = vadd.f32 %v2314, %v652
      %v2379 = vadd.f32 %v2315, %v661
      %v2380 = vadd.f32 %v2316, %v670
      %v2381 = vadd.f32 %v2317, %v643
      %v2382 = vadd.f32 %v2318, %v652
      %v2383 = vadd.f32 %v2319, %v661
      %v2384 = vadd.f32 %v2320, %v670
      %v2385 = vadd.f32 %v2321, %v643
      %v2386 = vadd.f32 %v2322, %v652
      %v2387 = vadd.f32 %v2323, %v661
      %v2388 = vadd.f32 %v2324, %v670
      %v2389 = vadd.f32 %v2325, %v643
      %v2390 = vadd.f32 %v2326, %v652
      %v2391 = vadd.f32 %v2327, %v661
      %v2392 = vadd.f32 %v2328, %v670
      %v2393 = vadd.f32 %v2329, %v643
      %v2394 = vadd.f32 %v2330, %v652
      %v2395 = vadd.f32 %v2331, %v661
      %v2396 = vadd.f32 %v2332, %v670
      %v2397 = vadd.f32 %v2333, %v643
      %v2398 = vadd.f32 %v2334, %v652
      %v2399 = vadd.f32 %v2335, %v661
      %v2400 = vadd.f32 %v2336, %v670
      %v2401 = vadd.f32 %v2337, %v643
      %v2402 = vadd.f32 %v2338, %v652
      %v2403 = vadd.f32 %v2339, %v661
      %v2404 = vadd.f32 %v2340, %v670
      %v2405 = vmin.f32 %v2341, %v2345
      %v2406 = vmin.f32 %v2405, %v2349
      %v2407 = vmin.f32 %v2406, %v2353
      %v2408 = vmin.f32 %v2407, %v2357
      %v2409 = vmin.f32 %v2408, %v2361
      %v2410 = vmin.f32 %v2409, %v2365
      %v2411 = vmin.f32 %v2410, %v2369
      %v2412 = vmin.f32 %v2411, %v2373
      %v2413 = vmin.f32 %v2412, %v2377
      %v2414 = vmin.f32 %v2413, %v2381
      %v2415 = vmin.f32 %v2414, %v2385
      %v2416 = vmin.f32 %v2415, %v2389
      %v2417 = vmin.f32 %v2416, %v2393
      %v2418 = vmin.f32 %v2417, %v2397
      %v2419 = vmin.f32 %v2418, %v2401
      %v2420 = vrot.slane %v2419, 4
      %v2421 = vmin.f32 %v2419, %v2420
      %v2422 = vrot.slane %v2421, 2
      %v2423 = vmin.f32 %v2421, %v2422
      %v2424 = vrot.slane %v2423, 1
      %v2425 = vmin.f32 %v2423, %v2424
      %v2426 = vmin.f32 %v2342, %v2346
      %v2427 = vmin.f32 %v2426, %v2350
      %v2428 = vmin.f32 %v2427, %v2354
      %v2429 = vmin.f32 %v2428, %v2358
      %v2430 = vmin.f32 %v2429, %v2362
      %v2431 = vmin.f32 %v2430, %v2366
      %v2432 = vmin.f32 %v2431, %v2370
      %v2433 = vmin.f32 %v2432, %v2374
      %v2434 = vmin.f32 %v2433, %v2378
      %v2435 = vmin.f32 %v2434, %v2382
      %v2436 = vmin.f32 %v2435, %v2386
      %v2437 = vmin.f32 %v2436, %v2390
      %v2438 = vmin.f32 %v2437, %v2394
      %v2439 = vmin.f32 %v2438, %v2398
      %v2440 = vmin.f32 %v2439, %v2402
      %v2441 = vrot.slane %v2440, 4
      %v2442 = vmin.f32 %v2440, %v2441
      %v2443 = vrot.slane %v2442, 2
      %v2444 = vmin.f32 %v2442, %v2443
      %v2445 = vrot.slane %v2444, 1
      %v2446 = vmin.f32 %v2444, %v2445
      %v2447 = vmin.f32 %v2343, %v2347
      %v2448 = vmin.f32 %v2447, %v2351
      %v2449 = vmin.f32 %v2448, %v2355
      %v2450 = vmin.f32 %v2449, %v2359
      %v2451 = vmin.f32 %v2450, %v2363
      %v2452 = vmin.f32 %v2451, %v2367
      %v2453 = vmin.f32 %v2452, %v2371
      %v2454 = vmin.f32 %v2453, %v2375
      %v2455 = vmin.f32 %v2454, %v2379
      %v2456 = vmin.f32 %v2455, %v2383
      %v2457 = vmin.f32 %v2456, %v2387
      %v2458 = vmin.f32 %v2457, %v2391
      %v2459 = vmin.f32 %v2458, %v2395
      %v2460 = vmin.f32 %v2459, %v2399
      %v2461 = vmin.f32 %v2460, %v2403
      %v2462 = vrot.slane %v2461, 4
      %v2463 = vmin.f32 %v2461, %v2462
      %v2464 = vrot.slane %v2463, 2
      %v2465 = vmin.f32 %v2463, %v2464
      %v2466 = vrot.slane %v2465, 1
      %v2467 = vmin.f32 %v2465, %v2466
      %v2468 = vmin.f32 %v2344, %v2348
      %v2469 = vmin.f32 %v2468, %v2352
      %v2470 = vmin.f32 %v2469, %v2356
      %v2471 = vmin.f32 %v2470, %v2360
      %v2472 = vmin.f32 %v2471, %v2364
      %v2473 = vmin.f32 %v2472, %v2368
      %v2474 = vmin.f32 %v2473, %v2372
      %v2475 = vmin.f32 %v2474, %v2376
      %v2476 = vmin.f32 %v2475, %v2380
      %v2477 = vmin.f32 %v2476, %v2384
      %v2478 = vmin.f32 %v2477, %v2388
      %v2479 = vmin.f32 %v2478, %v2392
      %v2480 = vmin.f32 %v2479, %v2396
      %v2481 = vmin.f32 %v2480, %v2400
      %v2482 = vmin.f32 %v2481, %v2404
      %v2483 = vrot.slane %v2482, 4
      %v2484 = vmin.f32 %v2482, %v2483
      %v2485 = vrot.slane %v2484, 2
      %v2486 = vmin.f32 %v2484, %v2485
      %v2487 = vrot.slane %v2486, 1
      %v2488 = vmin.f32 %v2486, %v2487
      %v2489 = vadd.s32 %v1431, 128
      %v2490 = vadd.s32 %v1432, 128
      %v2491 = vadd.s32 %v1433, 128
      %v2492 = vadd.s32 %v1434, 128
      %v2493 = vadd.s32 %v1435, 128
      %v2494 = vadd.s32 %v1436, 128
      %v2495 = vadd.s32 %v1437, 128
      %v2496 = vadd.s32 %v1438, 128
      %v2497 = vadd.s32 %v1439, 128
      %v2498 = vadd.s32 %v1440, 128
      %v2499 = vadd.s32 %v1441, 128
      %v2500 = vadd.s32 %v1442, 128
      %v2501 = vadd.s32 %v1443, 128
      %v2502 = vadd.s32 %v1444, 128
      %v2503 = vadd.s32 %v1445, 128
      %v2504 = vadd.s32 %v1446, 128
      %vm2505 = vcmp.le.f32.partialorder %v2341, %v2425
      %vm2506 = vcmp.le.f32.partialorder %v2342, %v2446
      %vm2507 = vcmp.le.f32.partialorder %v2343, %v2467
      %vm2508 = vcmp.le.f32.partialorder %v2344, %v2488
      %vm2509 = vcmp.le.f32.partialorder %v2345, %v2425
      %vm2510 = vcmp.le.f32.partialorder %v2346, %v2446
      %vm2511 = vcmp.le.f32.partialorder %v2347, %v2467
      %vm2512 = vcmp.le.f32.partialorder %v2348, %v2488
      %vm2513 = vcmp.le.f32.partialorder %v2349, %v2425
      %vm2514 = vcmp.le.f32.partialorder %v2350, %v2446
      %vm2515 = vcmp.le.f32.partialorder %v2351, %v2467
      %vm2516 = vcmp.le.f32.partialorder %v2352, %v2488
      %vm2517 = vcmp.le.f32.partialorder %v2353, %v2425
      %vm2518 = vcmp.le.f32.partialorder %v2354, %v2446
      %vm2519 = vcmp.le.f32.partialorder %v2355, %v2467
      %vm2520 = vcmp.le.f32.partialorder %v2356, %v2488
      %vm2521 = vcmp.le.f32.partialorder %v2357, %v2425
      %vm2522 = vcmp.le.f32.partialorder %v2358, %v2446
      %vm2523 = vcmp.le.f32.partialorder %v2359, %v2467
      %vm2524 = vcmp.le.f32.partialorder %v2360, %v2488
      %vm2525 = vcmp.le.f32.partialorder %v2361, %v2425
      %vm2526 = vcmp.le.f32.partialorder %v2362, %v2446
      %vm2527 = vcmp.le.f32.partialorder %v2363, %v2467
      %vm2528 = vcmp.le.f32.partialorder %v2364, %v2488
      %vm2529 = vcmp.le.f32.partialorder %v2365, %v2425
      %vm2530 = vcmp.le.f32.partialorder %v2366, %v2446
      %vm2531 = vcmp.le.f32.partialorder %v2367, %v2467
      %vm2532 = vcmp.le.f32.partialorder %v2368, %v2488
      %vm2533 = vcmp.le.f32.partialorder %v2369, %v2425
      %vm2534 = vcmp.le.f32.partialorder %v2370, %v2446
      %vm2535 = vcmp.le.f32.partialorder %v2371, %v2467
      %vm2536 = vcmp.le.f32.partialorder %v2372, %v2488
      %vm2537 = vcmp.le.f32.partialorder %v2373, %v2425
      %vm2538 = vcmp.le.f32.partialorder %v2374, %v2446
      %vm2539 = vcmp.le.f32.partialorder %v2375, %v2467
      %vm2540 = vcmp.le.f32.partialorder %v2376, %v2488
      %vm2541 = vcmp.le.f32.partialorder %v2377, %v2425
      %vm2542 = vcmp.le.f32.partialorder %v2378, %v2446
      %vm2543 = vcmp.le.f32.partialorder %v2379, %v2467
      %vm2544 = vcmp.le.f32.partialorder %v2380, %v2488
      %vm2545 = vcmp.le.f32.partialorder %v2381, %v2425
      %vm2546 = vcmp.le.f32.partialorder %v2382, %v2446
      %vm2547 = vcmp.le.f32.partialorder %v2383, %v2467
      %vm2548 = vcmp.le.f32.partialorder %v2384, %v2488
      %vm2549 = vcmp.le.f32.partialorder %v2385, %v2425
      %vm2550 = vcmp.le.f32.partialorder %v2386, %v2446
      %vm2551 = vcmp.le.f32.partialorder %v2387, %v2467
      %vm2552 = vcmp.le.f32.partialorder %v2388, %v2488
      %vm2553 = vcmp.le.f32.partialorder %v2389, %v2425
      %vm2554 = vcmp.le.f32.partialorder %v2390, %v2446
      %vm2555 = vcmp.le.f32.partialorder %v2391, %v2467
      %vm2556 = vcmp.le.f32.partialorder %v2392, %v2488
      %vm2557 = vcmp.le.f32.partialorder %v2393, %v2425
      %vm2558 = vcmp.le.f32.partialorder %v2394, %v2446
      %vm2559 = vcmp.le.f32.partialorder %v2395, %v2467
      %vm2560 = vcmp.le.f32.partialorder %v2396, %v2488
      %vm2561 = vcmp.le.f32.partialorder %v2397, %v2425
      %vm2562 = vcmp.le.f32.partialorder %v2398, %v2446
      %vm2563 = vcmp.le.f32.partialorder %v2399, %v2467
      %vm2564 = vcmp.le.f32.partialorder %v2400, %v2488
      %vm2565 = vcmp.le.f32.partialorder %v2401, %v2425
      %vm2566 = vcmp.le.f32.partialorder %v2402, %v2446
      %vm2567 = vcmp.le.f32.partialorder %v2403, %v2467
      %vm2568 = vcmp.le.f32.partialorder %v2404, %v2488
      %v2569 = vsel %vm2505, %v2489, 256
      %v2570 = vsel %vm2506, %v2489, 256
      %v2571 = vsel %vm2507, %v2489, 256
      %v2572 = vsel %vm2508, %v2489, 256
      %v2573 = vsel %vm2509, %v2490, 256
      %v2574 = vsel %vm2510, %v2490, 256
      %v2575 = vsel %vm2511, %v2490, 256
      %v2576 = vsel %vm2512, %v2490, 256
      %v2577 = vsel %vm2513, %v2491, 256
      %v2578 = vsel %vm2514, %v2491, 256
      %v2579 = vsel %vm2515, %v2491, 256
      %v2580 = vsel %vm2516, %v2491, 256
      %v2581 = vsel %vm2517, %v2492, 256
      %v2582 = vsel %vm2518, %v2492, 256
      %v2583 = vsel %vm2519, %v2492, 256
      %v2584 = vsel %vm2520, %v2492, 256
      %v2585 = vsel %vm2521, %v2493, 256
      %v2586 = vsel %vm2522, %v2493, 256
      %v2587 = vsel %vm2523, %v2493, 256
      %v2588 = vsel %vm2524, %v2493, 256
      %v2589 = vsel %vm2525, %v2494, 256
      %v2590 = vsel %vm2526, %v2494, 256
      %v2591 = vsel %vm2527, %v2494, 256
      %v2592 = vsel %vm2528, %v2494, 256
      %v2593 = vsel %vm2529, %v2495, 256
      %v2594 = vsel %vm2530, %v2495, 256
      %v2595 = vsel %vm2531, %v2495, 256
      %v2596 = vsel %vm2532, %v2495, 256
      %v2597 = vsel %vm2533, %v2496, 256
      %v2598 = vsel %vm2534, %v2496, 256
      %v2599 = vsel %vm2535, %v2496, 256
      %v2600 = vsel %vm2536, %v2496, 256
      %v2601 = vsel %vm2537, %v2497, 256
      %v2602 = vsel %vm2538, %v2497, 256
      %v2603 = vsel %vm2539, %v2497, 256
      %v2604 = vsel %vm2540, %v2497, 256
      %v2605 = vsel %vm2541, %v2498, 256
      %v2606 = vsel %vm2542, %v2498, 256
      %v2607 = vsel %vm2543, %v2498, 256
      %v2608 = vsel %vm2544, %v2498, 256
      %v2609 = vsel %vm2545, %v2499, 256
      %v2610 = vsel %vm2546, %v2499, 256
      %v2611 = vsel %vm2547, %v2499, 256
      %v2612 = vsel %vm2548, %v2499, 256
      %v2613 = vsel %vm2549, %v2500, 256
      %v2614 = vsel %vm2550, %v2500, 256
      %v2615 = vsel %vm2551, %v2500, 256
      %v2616 = vsel %vm2552, %v2500, 256
      %v2617 = vsel %vm2553, %v2501, 256
      %v2618 = vsel %vm2554, %v2501, 256
      %v2619 = vsel %vm2555, %v2501, 256
      %v2620 = vsel %vm2556, %v2501, 256
      %v2621 = vsel %vm2557, %v2502, 256
      %v2622 = vsel %vm2558, %v2502, 256
      %v2623 = vsel %vm2559, %v2502, 256
      %v2624 = vsel %vm2560, %v2502, 256
      %v2625 = vsel %vm2561, %v2503, 256
      %v2626 = vsel %vm2562, %v2503, 256
      %v2627 = vsel %vm2563, %v2503, 256
      %v2628 = vsel %vm2564, %v2503, 256
      %v2629 = vsel %vm2565, %v2504, 256
      %v2630 = vsel %vm2566, %v2504, 256
      %v2631 = vsel %vm2567, %v2504, 256
      %v2632 = vsel %vm2568, %v2504, 256
      %vm2633 = vcmp.lt.s32.totalorder %v2569, %v2573
      %v2634 = vsel %vm2633, %v2569, %v2573
      %vm2635 = vcmp.lt.s32.totalorder %v2634, %v2577
      %v2636 = vsel %vm2635, %v2634, %v2577
      %vm2637 = vcmp.lt.s32.totalorder %v2636, %v2581
      %v2638 = vsel %vm2637, %v2636, %v2581
      %vm2639 = vcmp.lt.s32.totalorder %v2638, %v2585
      %v2640 = vsel %vm2639, %v2638, %v2585
      %vm2641 = vcmp.lt.s32.totalorder %v2640, %v2589
      %v2642 = vsel %vm2641, %v2640, %v2589
      %vm2643 = vcmp.lt.s32.totalorder %v2642, %v2593
      %v2644 = vsel %vm2643, %v2642, %v2593
      %vm2645 = vcmp.lt.s32.totalorder %v2644, %v2597
      %v2646 = vsel %vm2645, %v2644, %v2597
      %vm2647 = vcmp.lt.s32.totalorder %v2646, %v2601
      %v2648 = vsel %vm2647, %v2646, %v2601
      %vm2649 = vcmp.lt.s32.totalorder %v2648, %v2605
      %v2650 = vsel %vm2649, %v2648, %v2605
      %vm2651 = vcmp.lt.s32.totalorder %v2650, %v2609
      %v2652 = vsel %vm2651, %v2650, %v2609
      %vm2653 = vcmp.lt.s32.totalorder %v2652, %v2613
      %v2654 = vsel %vm2653, %v2652, %v2613
      %vm2655 = vcmp.lt.s32.totalorder %v2654, %v2617
      %v2656 = vsel %vm2655, %v2654, %v2617
      %vm2657 = vcmp.lt.s32.totalorder %v2656, %v2621
      %v2658 = vsel %vm2657, %v2656, %v2621
      %vm2659 = vcmp.lt.s32.totalorder %v2658, %v2625
      %v2660 = vsel %vm2659, %v2658, %v2625
      %vm2661 = vcmp.lt.s32.totalorder %v2660, %v2629
      %v2662 = vsel %vm2661, %v2660, %v2629
      %v2663 = vrot.slane %v2662, 4
      %vm2664 = vcmp.lt.s32.totalorder %v2662, %v2663
      %v2665 = vsel %vm2664, %v2662, %v2663
      %v2666 = vrot.slane %v2665, 2
      %vm2667 = vcmp.lt.s32.totalorder %v2665, %v2666
      %v2668 = vsel %vm2667, %v2665, %v2666
      %v2669 = vrot.slane %v2668, 1
      %vm2670 = vcmp.lt.s32.totalorder %v2668, %v2669
      %v2671 = vsel %vm2670, %v2668, %v2669
      %vm2672 = vcmp.lt.s32.totalorder %v2570, %v2574
      %v2673 = vsel %vm2672, %v2570, %v2574
      %vm2674 = vcmp.lt.s32.totalorder %v2673, %v2578
      %v2675 = vsel %vm2674, %v2673, %v2578
      %vm2676 = vcmp.lt.s32.totalorder %v2675, %v2582
      %v2677 = vsel %vm2676, %v2675, %v2582
      %vm2678 = vcmp.lt.s32.totalorder %v2677, %v2586
      %v2679 = vsel %vm2678, %v2677, %v2586
      %vm2680 = vcmp.lt.s32.totalorder %v2679, %v2590
      %v2681 = vsel %vm2680, %v2679, %v2590
      %vm2682 = vcmp.lt.s32.totalorder %v2681, %v2594
      %v2683 = vsel %vm2682, %v2681, %v2594
      %vm2684 = vcmp.lt.s32.totalorder %v2683, %v2598
      %v2685 = vsel %vm2684, %v2683, %v2598
      %vm2686 = vcmp.lt.s32.totalorder %v2685, %v2602
      %v2687 = vsel %vm2686, %v2685, %v2602
      %vm2688 = vcmp.lt.s32.totalorder %v2687, %v2606
      %v2689 = vsel %vm2688, %v2687, %v2606
      %vm2690 = vcmp.lt.s32.totalorder %v2689, %v2610
      %v2691 = vsel %vm2690, %v2689, %v2610
      %vm2692 = vcmp.lt.s32.totalorder %v2691, %v2614
      %v2693 = vsel %vm2692, %v2691, %v2614
      %vm2694 = vcmp.lt.s32.totalorder %v2693, %v2618
      %v2695 = vsel %vm2694, %v2693, %v2618
      %vm2696 = vcmp.lt.s32.totalorder %v2695, %v2622
      %v2697 = vsel %vm2696, %v2695, %v2622
      %vm2698 = vcmp.lt.s32.totalorder %v2697, %v2626
      %v2699 = vsel %vm2698, %v2697, %v2626
      %vm2700 = vcmp.lt.s32.totalorder %v2699, %v2630
      %v2701 = vsel %vm2700, %v2699, %v2630
      %v2702 = vrot.slane %v2701, 4
      %vm2703 = vcmp.lt.s32.totalorder %v2701, %v2702
      %v2704 = vsel %vm2703, %v2701, %v2702
      %v2705 = vrot.slane %v2704, 2
      %vm2706 = vcmp.lt.s32.totalorder %v2704, %v2705
      %v2707 = vsel %vm2706, %v2704, %v2705
      %v2708 = vrot.slane %v2707, 1
      %vm2709 = vcmp.lt.s32.totalorder %v2707, %v2708
      %v2710 = vsel %vm2709, %v2707, %v2708
      %vm2711 = vcmp.lt.s32.totalorder %v2571, %v2575
      %v2712 = vsel %vm2711, %v2571, %v2575
      %vm2713 = vcmp.lt.s32.totalorder %v2712, %v2579
      %v2714 = vsel %vm2713, %v2712, %v2579
      %vm2715 = vcmp.lt.s32.totalorder %v2714, %v2583
      %v2716 = vsel %vm2715, %v2714, %v2583
      %vm2717 = vcmp.lt.s32.totalorder %v2716, %v2587
      %v2718 = vsel %vm2717, %v2716, %v2587
      %vm2719 = vcmp.lt.s32.totalorder %v2718, %v2591
      %v2720 = vsel %vm2719, %v2718, %v2591
      %vm2721 = vcmp.lt.s32.totalorder %v2720, %v2595
      %v2722 = vsel %vm2721, %v2720, %v2595
      %vm2723 = vcmp.lt.s32.totalorder %v2722, %v2599
      %v2724 = vsel %vm2723, %v2722, %v2599
      %vm2725 = vcmp.lt.s32.totalorder %v2724, %v2603
      %v2726 = vsel %vm2725, %v2724, %v2603
      %vm2727 = vcmp.lt.s32.totalorder %v2726, %v2607
      %v2728 = vsel %vm2727, %v2726, %v2607
      %vm2729 = vcmp.lt.s32.totalorder %v2728, %v2611
      %v2730 = vsel %vm2729, %v2728, %v2611
      %vm2731 = vcmp.lt.s32.totalorder %v2730, %v2615
      %v2732 = vsel %vm2731, %v2730, %v2615
      %vm2733 = vcmp.lt.s32.totalorder %v2732, %v2619
      %v2734 = vsel %vm2733, %v2732, %v2619
      %vm2735 = vcmp.lt.s32.totalorder %v2734, %v2623
      %v2736 = vsel %vm2735, %v2734, %v2623
      %vm2737 = vcmp.lt.s32.totalorder %v2736, %v2627
      %v2738 = vsel %vm2737, %v2736, %v2627
      %vm2739 = vcmp.lt.s32.totalorder %v2738, %v2631
      %v2740 = vsel %vm2739, %v2738, %v2631
      %v2741 = vrot.slane %v2740, 4
      %vm2742 = vcmp.lt.s32.totalorder %v2740, %v2741
      %v2743 = vsel %vm2742, %v2740, %v2741
      %v2744 = vrot.slane %v2743, 2
      %vm2745 = vcmp.lt.s32.totalorder %v2743, %v2744
      %v2746 = vsel %vm2745, %v2743, %v2744
      %v2747 = vrot.slane %v2746, 1
      %vm2748 = vcmp.lt.s32.totalorder %v2746, %v2747
      %v2749 = vsel %vm2748, %v2746, %v2747
      %vm2750 = vcmp.lt.s32.totalorder %v2572, %v2576
      %v2751 = vsel %vm2750, %v2572, %v2576
      %vm2752 = vcmp.lt.s32.totalorder %v2751, %v2580
      %v2753 = vsel %vm2752, %v2751, %v2580
      %vm2754 = vcmp.lt.s32.totalorder %v2753, %v2584
      %v2755 = vsel %vm2754, %v2753, %v2584
      %vm2756 = vcmp.lt.s32.totalorder %v2755, %v2588
      %v2757 = vsel %vm2756, %v2755, %v2588
      %vm2758 = vcmp.lt.s32.totalorder %v2757, %v2592
      %v2759 = vsel %vm2758, %v2757, %v2592
      %vm2760 = vcmp.lt.s32.totalorder %v2759, %v2596
      %v2761 = vsel %vm2760, %v2759, %v2596
      %vm2762 = vcmp.lt.s32.totalorder %v2761, %v2600
      %v2763 = vsel %vm2762, %v2761, %v2600
      %vm2764 = vcmp.lt.s32.totalorder %v2763, %v2604
      %v2765 = vsel %vm2764, %v2763, %v2604
      %vm2766 = vcmp.lt.s32.totalorder %v2765, %v2608
      %v2767 = vsel %vm2766, %v2765, %v2608
      %vm2768 = vcmp.lt.s32.totalorder %v2767, %v2612
      %v2769 = vsel %vm2768, %v2767, %v2612
      %vm2770 = vcmp.lt.s32.totalorder %v2769, %v2616
      %v2771 = vsel %vm2770, %v2769, %v2616
      %vm2772 = vcmp.lt.s32.totalorder %v2771, %v2620
      %v2773 = vsel %vm2772, %v2771, %v2620
      %vm2774 = vcmp.lt.s32.totalorder %v2773, %v2624
      %v2775 = vsel %vm2774, %v2773, %v2624
      %vm2776 = vcmp.lt.s32.totalorder %v2775, %v2628
      %v2777 = vsel %vm2776, %v2775, %v2628
      %vm2778 = vcmp.lt.s32.totalorder %v2777, %v2632
      %v2779 = vsel %vm2778, %v2777, %v2632
      %v2780 = vrot.slane %v2779, 4
      %vm2781 = vcmp.lt.s32.totalorder %v2779, %v2780
      %v2782 = vsel %vm2781, %v2779, %v2780
      %v2783 = vrot.slane %v2782, 2
      %vm2784 = vcmp.lt.s32.totalorder %v2782, %v2783
      %v2785 = vsel %vm2784, %v2782, %v2783
      %v2786 = vrot.slane %v2785, 1
      %vm2787 = vcmp.lt.s32.totalorder %v2785, %v2786
      %v2788 = vsel %vm2787, %v2785, %v2786
      %vm2789 = vcmp.lt.f32.partialorder %v2425, %v1366
      %vm2790 = vcmp.lt.f32.partialorder %v2446, %v1387
      %vm2791 = vcmp.lt.f32.partialorder %v2467, %v1408
      %vm2792 = vcmp.lt.f32.partialorder %v2488, %v1429
      %v2793 = vsel %vm2789, %v2671, %v1613
      %v2794 = vsel %vm2790, %v2710, %v1652
      %v2795 = vsel %vm2791, %v2749, %v1691
      %v2796 = vsel %vm2792, %v2788, %v1730
      %v2797 = vmin.f32 %v1366, %v2425
      %v2798 = vmin.f32 %v1387, %v2446
      %v2799 = vmin.f32 %v1408, %v2467
      %v2800 = vmin.f32 %v1429, %v2488
      %v2801 = vcombine.low %v2793, %v2794
      %v2802 = vcombine.low %v2795, %v2796
      %v2804 = vunpack.c.l.s4 1966171168
      %v2805 = vunpack.c.0.s8 %v2804
      %v2806 = vlaneseq
      %v2807 = vshrl.u32 %v2806, 7
      %v2808 = vsub.s32 %v2805, %v2807
      %v2809 = vrot.slane %v2801, %v2808
      %v2811 = vunpack.c.l.s4 1966171168
      %v2812 = vunpack.c.0.s8 %v2811
      %v2813 = vlaneseq
      %v2814 = vshrl.u32 %v2813, 7
      %v2815 = vsub.s32 %v2812, %v2814
      %v2816 = vrot.slane %v2802, %v2815
      %v2817 = vcombine.low %v2809, %v2816
      %v2819 = vunpack.c.l.s4 1966171168
      %v2820 = vunpack.c.0.s8 %v2819
      %v2821 = vlaneseq
      %v2822 = vshrl.u32 %v2821, 7
      %v2823 = vsub.s32 %v2820, %v2822
      %v2824 = vrot.slane %v2817, %v2823
      %v2825 = vlaneseq
      %vm2826 = vcmp.ge.s32.totalorder %v2825, 0
      %vm2827 = vcmp.lt.s32.totalorder %v2825, 512
      %vm2828 = vmand %vm2826, %vm2827
      %2829 = vst.msk [vmem:[%s510] sm:$0xf] %vm2828, %v2824
      %v2830 = vmax.f32 %v2797, 0.0
      %v2831 = vmax.f32 %v2798, 0.0
      %v2832 = vmax.f32 %v2799, 0.0
      %v2833 = vmax.f32 %v2800, 0.0
      %v2838 = vcombine.low %v2830, %v2831
      %v2839 = vcombine.low %v2832, %v2833
      %v2841 = vunpack.c.l.s4 1966171168
      %v2842 = vunpack.c.0.s8 %v2841
      %v2843 = vlaneseq
      %v2844 = vshrl.u32 %v2843, 7
      %v2845 = vsub.s32 %v2842, %v2844
      %v2846 = vrot.slane %v2838, %v2845
      %v2848 = vunpack.c.l.s4 1966171168
      %v2849 = vunpack.c.0.s8 %v2848
      %v2850 = vlaneseq
      %v2851 = vshrl.u32 %v2850, 7
      %v2852 = vsub.s32 %v2849, %v2851
      %v2853 = vrot.slane %v2839, %v2852
      %v2854 = vcombine.low %v2846, %v2853
      %v2856 = vunpack.c.l.s4 1966171168
      %v2857 = vunpack.c.0.s8 %v2856
      %v2858 = vlaneseq
      %v2859 = vshrl.u32 %v2858, 7
      %v2860 = vsub.s32 %v2857, %v2859
      %v2861 = vrot.slane %v2854, %v2860
      %2863 = vst.msk [vmem:[%s515] sm:$0xf] %vm2828, %v2861
      %vm2864 = vcmp.eq.s32.totalorder %v1431, %v2793
      %vm2865 = vcmp.eq.s32.totalorder %v1431, %v2794
      %vm2866 = vcmp.eq.s32.totalorder %v1431, %v2795
      %vm2867 = vcmp.eq.s32.totalorder %v1431, %v2796
      %vm2868 = vcmp.eq.s32.totalorder %v1432, %v2793
      %vm2869 = vcmp.eq.s32.totalorder %v1432, %v2794
      %vm2870 = vcmp.eq.s32.totalorder %v1432, %v2795
      %vm2871 = vcmp.eq.s32.totalorder %v1432, %v2796
      %vm2872 = vcmp.eq.s32.totalorder %v1433, %v2793
      %vm2873 = vcmp.eq.s32.totalorder %v1433, %v2794
      %vm2874 = vcmp.eq.s32.totalorder %v1433, %v2795
      %vm2875 = vcmp.eq.s32.totalorder %v1433, %v2796
      %vm2876 = vcmp.eq.s32.totalorder %v1434, %v2793
      %vm2877 = vcmp.eq.s32.totalorder %v1434, %v2794
      %vm2878 = vcmp.eq.s32.totalorder %v1434, %v2795
      %vm2879 = vcmp.eq.s32.totalorder %v1434, %v2796
      %vm2880 = vcmp.eq.s32.totalorder %v1435, %v2793
      %vm2881 = vcmp.eq.s32.totalorder %v1435, %v2794
      %vm2882 = vcmp.eq.s32.totalorder %v1435, %v2795
      %vm2883 = vcmp.eq.s32.totalorder %v1435, %v2796
      %vm2884 = vcmp.eq.s32.totalorder %v1436, %v2793
      %vm2885 = vcmp.eq.s32.totalorder %v1436, %v2794
      %vm2886 = vcmp.eq.s32.totalorder %v1436, %v2795
      %vm2887 = vcmp.eq.s32.totalorder %v1436, %v2796
      %vm2888 = vcmp.eq.s32.totalorder %v1437, %v2793
      %vm2889 = vcmp.eq.s32.totalorder %v1437, %v2794
      %vm2890 = vcmp.eq.s32.totalorder %v1437, %v2795
      %vm2891 = vcmp.eq.s32.totalorder %v1437, %v2796
      %vm2892 = vcmp.eq.s32.totalorder %v1438, %v2793
      %vm2893 = vcmp.eq.s32.totalorder %v1438, %v2794
      %vm2894 = vcmp.eq.s32.totalorder %v1438, %v2795
      %vm2895 = vcmp.eq.s32.totalorder %v1438, %v2796
      %vm2896 = vcmp.eq.s32.totalorder %v1439, %v2793
      %vm2897 = vcmp.eq.s32.totalorder %v1439, %v2794
      %vm2898 = vcmp.eq.s32.totalorder %v1439, %v2795
      %vm2899 = vcmp.eq.s32.totalorder %v1439, %v2796
      %vm2900 = vcmp.eq.s32.totalorder %v1440, %v2793
      %vm2901 = vcmp.eq.s32.totalorder %v1440, %v2794
      %vm2902 = vcmp.eq.s32.totalorder %v1440, %v2795
      %vm2903 = vcmp.eq.s32.totalorder %v1440, %v2796
      %vm2904 = vcmp.eq.s32.totalorder %v1441, %v2793
      %vm2905 = vcmp.eq.s32.totalorder %v1441, %v2794
      %vm2906 = vcmp.eq.s32.totalorder %v1441, %v2795
      %vm2907 = vcmp.eq.s32.totalorder %v1441, %v2796
      %vm2908 = vcmp.eq.s32.totalorder %v1442, %v2793
      %vm2909 = vcmp.eq.s32.totalorder %v1442, %v2794
      %vm2910 = vcmp.eq.s32.totalorder %v1442, %v2795
      %vm2911 = vcmp.eq.s32.totalorder %v1442, %v2796
      %vm2912 = vcmp.eq.s32.totalorder %v1443, %v2793
      %vm2913 = vcmp.eq.s32.totalorder %v1443, %v2794
      %vm2914 = vcmp.eq.s32.totalorder %v1443, %v2795
      %vm2915 = vcmp.eq.s32.totalorder %v1443, %v2796
      %vm2916 = vcmp.eq.s32.totalorder %v1444, %v2793
      %vm2917 = vcmp.eq.s32.totalorder %v1444, %v2794
      %vm2918 = vcmp.eq.s32.totalorder %v1444, %v2795
      %vm2919 = vcmp.eq.s32.totalorder %v1444, %v2796
      %vm2920 = vcmp.eq.s32.totalorder %v1445, %v2793
      %vm2921 = vcmp.eq.s32.totalorder %v1445, %v2794
      %vm2922 = vcmp.eq.s32.totalorder %v1445, %v2795
      %vm2923 = vcmp.eq.s32.totalorder %v1445, %v2796
      %vm2924 = vcmp.eq.s32.totalorder %v1446, %v2793
      %vm2925 = vcmp.eq.s32.totalorder %v1446, %v2794
      %vm2926 = vcmp.eq.s32.totalorder %v1446, %v2795
      %vm2927 = vcmp.eq.s32.totalorder %v1446, %v2796
      %v2928 = vld [vmem:[%s495] sm:$0xff]
      %v2929 = vld [vmem:[%s495 + $0x8] sm:$0xff]
      %v2930 = vld [vmem:[%s495 + $0x10] sm:$0xff]
      %v2931 = vld [vmem:[%s495 + $0x18] sm:$0xff]
      %v2932 = vld [vmem:[%s495 + $0x20] sm:$0xff]
      %v2933 = vld [vmem:[%s495 + $0x28] sm:$0xff]
      %v2934 = vld [vmem:[%s495 + $0x30] sm:$0xff]
      %v2935 = vld [vmem:[%s495 + $0x38] sm:$0xff]
      %v2936 = vld [vmem:[%s495 + $0x40] sm:$0xff]
      %v2937 = vld [vmem:[%s495 + $0x48] sm:$0xff]
      %v2938 = vld [vmem:[%s495 + $0x50] sm:$0xff]
      %v2939 = vld [vmem:[%s495 + $0x58] sm:$0xff]
      %v2940 = vld [vmem:[%s495 + $0x60] sm:$0xff]
      %v2941 = vld [vmem:[%s495 + $0x68] sm:$0xff]
      %v2942 = vld [vmem:[%s495 + $0x70] sm:$0xff]
      %v2943 = vld [vmem:[%s495 + $0x78] sm:$0xff]
      %2945 = vset.pattern.permute.xlu0 0
      %2946 = vperm.xlu0 %2945, %v2928
      %v2947 = vpop.permute.xlu0 %2946
      %2950 = vset.pattern.permute.xlu0 0
      %2951 = vperm.xlu0 %2950, %v2929
      %v2952 = vpop.permute.xlu0 %2951
      %2955 = vset.pattern.permute.xlu0 0
      %2956 = vperm.xlu0 %2955, %v2930
      %v2957 = vpop.permute.xlu0 %2956
      %2960 = vset.pattern.permute.xlu0 0
      %2961 = vperm.xlu0 %2960, %v2931
      %v2962 = vpop.permute.xlu0 %2961
      %2965 = vset.pattern.permute.xlu0 0
      %2966 = vperm.xlu0 %2965, %v2932
      %v2967 = vpop.permute.xlu0 %2966
      %2970 = vset.pattern.permute.xlu0 0
      %2971 = vperm.xlu0 %2970, %v2933
      %v2972 = vpop.permute.xlu0 %2971
      %2975 = vset.pattern.permute.xlu0 0
      %2976 = vperm.xlu0 %2975, %v2934
      %v2977 = vpop.permute.xlu0 %2976
      %2980 = vset.pattern.permute.xlu0 0
      %2981 = vperm.xlu0 %2980, %v2935
      %v2982 = vpop.permute.xlu0 %2981
      %2985 = vset.pattern.permute.xlu0 0
      %2986 = vperm.xlu0 %2985, %v2936
      %v2987 = vpop.permute.xlu0 %2986
      %2990 = vset.pattern.permute.xlu0 0
      %2991 = vperm.xlu0 %2990, %v2937
      %v2992 = vpop.permute.xlu0 %2991
      %2995 = vset.pattern.permute.xlu0 0
      %2996 = vperm.xlu0 %2995, %v2938
      %v2997 = vpop.permute.xlu0 %2996
      %3000 = vset.pattern.permute.xlu0 0
      %3001 = vperm.xlu0 %3000, %v2939
      %v3002 = vpop.permute.xlu0 %3001
      %3005 = vset.pattern.permute.xlu0 0
      %3006 = vperm.xlu0 %3005, %v2940
      %v3007 = vpop.permute.xlu0 %3006
      %3010 = vset.pattern.permute.xlu0 0
      %3011 = vperm.xlu0 %3010, %v2941
      %v3012 = vpop.permute.xlu0 %3011
      %3015 = vset.pattern.permute.xlu0 0
      %3016 = vperm.xlu0 %3015, %v2942
      %v3017 = vpop.permute.xlu0 %3016
      %3020 = vset.pattern.permute.xlu0 0
      %3021 = vperm.xlu0 %3020, %v2943
      %v3022 = vpop.permute.xlu0 %3021
      %v3024 = vsel %vm2864, %v2947, 0.0
      %v3025 = vsel %vm2865, %v2947, 0.0
      %v3026 = vsel %vm2866, %v2947, 0.0
      %v3027 = vsel %vm2867, %v2947, 0.0
      %v3028 = vsel %vm2868, %v2952, 0.0
      %v3029 = vsel %vm2869, %v2952, 0.0
      %v3030 = vsel %vm2870, %v2952, 0.0
      %v3031 = vsel %vm2871, %v2952, 0.0
      %v3032 = vsel %vm2872, %v2957, 0.0
      %v3033 = vsel %vm2873, %v2957, 0.0
      %v3034 = vsel %vm2874, %v2957, 0.0
      %v3035 = vsel %vm2875, %v2957, 0.0
      %v3036 = vsel %vm2876, %v2962, 0.0
      %v3037 = vsel %vm2877, %v2962, 0.0
      %v3038 = vsel %vm2878, %v2962, 0.0
      %v3039 = vsel %vm2879, %v2962, 0.0
      %v3040 = vsel %vm2880, %v2967, 0.0
      %v3041 = vsel %vm2881, %v2967, 0.0
      %v3042 = vsel %vm2882, %v2967, 0.0
      %v3043 = vsel %vm2883, %v2967, 0.0
      %v3044 = vsel %vm2884, %v2972, 0.0
      %v3045 = vsel %vm2885, %v2972, 0.0
      %v3046 = vsel %vm2886, %v2972, 0.0
      %v3047 = vsel %vm2887, %v2972, 0.0
      %v3048 = vsel %vm2888, %v2977, 0.0
      %v3049 = vsel %vm2889, %v2977, 0.0
      %v3050 = vsel %vm2890, %v2977, 0.0
      %v3051 = vsel %vm2891, %v2977, 0.0
      %v3052 = vsel %vm2892, %v2982, 0.0
      %v3053 = vsel %vm2893, %v2982, 0.0
      %v3054 = vsel %vm2894, %v2982, 0.0
      %v3055 = vsel %vm2895, %v2982, 0.0
      %v3056 = vsel %vm2896, %v2987, 0.0
      %v3057 = vsel %vm2897, %v2987, 0.0
      %v3058 = vsel %vm2898, %v2987, 0.0
      %v3059 = vsel %vm2899, %v2987, 0.0
      %v3060 = vsel %vm2900, %v2992, 0.0
      %v3061 = vsel %vm2901, %v2992, 0.0
      %v3062 = vsel %vm2902, %v2992, 0.0
      %v3063 = vsel %vm2903, %v2992, 0.0
      %v3064 = vsel %vm2904, %v2997, 0.0
      %v3065 = vsel %vm2905, %v2997, 0.0
      %v3066 = vsel %vm2906, %v2997, 0.0
      %v3067 = vsel %vm2907, %v2997, 0.0
      %v3068 = vsel %vm2908, %v3002, 0.0
      %v3069 = vsel %vm2909, %v3002, 0.0
      %v3070 = vsel %vm2910, %v3002, 0.0
      %v3071 = vsel %vm2911, %v3002, 0.0
      %v3072 = vsel %vm2912, %v3007, 0.0
      %v3073 = vsel %vm2913, %v3007, 0.0
      %v3074 = vsel %vm2914, %v3007, 0.0
      %v3075 = vsel %vm2915, %v3007, 0.0
      %v3076 = vsel %vm2916, %v3012, 0.0
      %v3077 = vsel %vm2917, %v3012, 0.0
      %v3078 = vsel %vm2918, %v3012, 0.0
      %v3079 = vsel %vm2919, %v3012, 0.0
      %v3080 = vsel %vm2920, %v3017, 0.0
      %v3081 = vsel %vm2921, %v3017, 0.0
      %v3082 = vsel %vm2922, %v3017, 0.0
      %v3083 = vsel %vm2923, %v3017, 0.0
      %v3084 = vsel %vm2924, %v3022, 0.0
      %v3085 = vsel %vm2925, %v3022, 0.0
      %v3086 = vsel %vm2926, %v3022, 0.0
      %v3087 = vsel %vm2927, %v3022, 0.0
      %v3088 = vadd.f32 %v3024, %v3028
      %v3089 = vadd.f32 %v3088, %v3032
      %v3090 = vadd.f32 %v3089, %v3036
      %v3091 = vadd.f32 %v3090, %v3040
      %v3092 = vadd.f32 %v3091, %v3044
      %v3093 = vadd.f32 %v3092, %v3048
      %v3094 = vadd.f32 %v3093, %v3052
      %v3095 = vadd.f32 %v3094, %v3056
      %v3096 = vadd.f32 %v3095, %v3060
      %v3097 = vadd.f32 %v3096, %v3064
      %v3098 = vadd.f32 %v3097, %v3068
      %v3099 = vadd.f32 %v3098, %v3072
      %v3100 = vadd.f32 %v3099, %v3076
      %v3101 = vadd.f32 %v3100, %v3080
      %v3102 = vadd.f32 %v3101, %v3084
      %v3103 = vrot.slane %v3102, 4
      %v3104 = vadd.f32 %v3102, %v3103
      %v3105 = vrot.slane %v3104, 2
      %v3106 = vadd.f32 %v3104, %v3105
      %v3107 = vrot.slane %v3106, 1
      %v3108 = vadd.f32 %v3106, %v3107
      %v3109 = vadd.f32 %v3025, %v3029
      %v3110 = vadd.f32 %v3109, %v3033
      %v3111 = vadd.f32 %v3110, %v3037
      %v3112 = vadd.f32 %v3111, %v3041
      %v3113 = vadd.f32 %v3112, %v3045
      %v3114 = vadd.f32 %v3113, %v3049
      %v3115 = vadd.f32 %v3114, %v3053
      %v3116 = vadd.f32 %v3115, %v3057
      %v3117 = vadd.f32 %v3116, %v3061
      %v3118 = vadd.f32 %v3117, %v3065
      %v3119 = vadd.f32 %v3118, %v3069
      %v3120 = vadd.f32 %v3119, %v3073
      %v3121 = vadd.f32 %v3120, %v3077
      %v3122 = vadd.f32 %v3121, %v3081
      %v3123 = vadd.f32 %v3122, %v3085
      %v3124 = vrot.slane %v3123, 4
      %v3125 = vadd.f32 %v3123, %v3124
      %v3126 = vrot.slane %v3125, 2
      %v3127 = vadd.f32 %v3125, %v3126
      %v3128 = vrot.slane %v3127, 1
      %v3129 = vadd.f32 %v3127, %v3128
      %v3130 = vadd.f32 %v3026, %v3030
      %v3131 = vadd.f32 %v3130, %v3034
      %v3132 = vadd.f32 %v3131, %v3038
      %v3133 = vadd.f32 %v3132, %v3042
      %v3134 = vadd.f32 %v3133, %v3046
      %v3135 = vadd.f32 %v3134, %v3050
      %v3136 = vadd.f32 %v3135, %v3054
      %v3137 = vadd.f32 %v3136, %v3058
      %v3138 = vadd.f32 %v3137, %v3062
      %v3139 = vadd.f32 %v3138, %v3066
      %v3140 = vadd.f32 %v3139, %v3070
      %v3141 = vadd.f32 %v3140, %v3074
      %v3142 = vadd.f32 %v3141, %v3078
      %v3143 = vadd.f32 %v3142, %v3082
      %v3144 = vadd.f32 %v3143, %v3086
      %v3145 = vrot.slane %v3144, 4
      %v3146 = vadd.f32 %v3144, %v3145
      %v3147 = vrot.slane %v3146, 2
      %v3148 = vadd.f32 %v3146, %v3147
      %v3149 = vrot.slane %v3148, 1
      %v3150 = vadd.f32 %v3148, %v3149
      %v3151 = vadd.f32 %v3027, %v3031
      %v3152 = vadd.f32 %v3151, %v3035
      %v3153 = vadd.f32 %v3152, %v3039
      %v3154 = vadd.f32 %v3153, %v3043
      %v3155 = vadd.f32 %v3154, %v3047
      %v3156 = vadd.f32 %v3155, %v3051
      %v3157 = vadd.f32 %v3156, %v3055
      %v3158 = vadd.f32 %v3157, %v3059
      %v3159 = vadd.f32 %v3158, %v3063
      %v3160 = vadd.f32 %v3159, %v3067
      %v3161 = vadd.f32 %v3160, %v3071
      %v3162 = vadd.f32 %v3161, %v3075
      %v3163 = vadd.f32 %v3162, %v3079
      %v3164 = vadd.f32 %v3163, %v3083
      %v3165 = vadd.f32 %v3164, %v3087
      %v3166 = vrot.slane %v3165, 4
      %v3167 = vadd.f32 %v3165, %v3166
      %v3168 = vrot.slane %v3167, 2
      %v3169 = vadd.f32 %v3167, %v3168
      %v3170 = vrot.slane %v3169, 1
      %v3171 = vadd.f32 %v3169, %v3170
      %v3172 = vadd.f32 %v3108, 0.0
      %v3173 = vadd.f32 %v3129, 0.0
      %v3174 = vadd.f32 %v3150, 0.0
      %v3175 = vadd.f32 %v3171, 0.0
      %vm3176 = vcmp.eq.s32.totalorder %v2489, %v2793
      %vm3177 = vcmp.eq.s32.totalorder %v2489, %v2794
      %vm3178 = vcmp.eq.s32.totalorder %v2489, %v2795
      %vm3179 = vcmp.eq.s32.totalorder %v2489, %v2796
      %vm3180 = vcmp.eq.s32.totalorder %v2490, %v2793
      %vm3181 = vcmp.eq.s32.totalorder %v2490, %v2794
      %vm3182 = vcmp.eq.s32.totalorder %v2490, %v2795
      %vm3183 = vcmp.eq.s32.totalorder %v2490, %v2796
      %vm3184 = vcmp.eq.s32.totalorder %v2491, %v2793
      %vm3185 = vcmp.eq.s32.totalorder %v2491, %v2794
      %vm3186 = vcmp.eq.s32.totalorder %v2491, %v2795
      %vm3187 = vcmp.eq.s32.totalorder %v2491, %v2796
      %vm3188 = vcmp.eq.s32.totalorder %v2492, %v2793
      %vm3189 = vcmp.eq.s32.totalorder %v2492, %v2794
      %vm3190 = vcmp.eq.s32.totalorder %v2492, %v2795
      %vm3191 = vcmp.eq.s32.totalorder %v2492, %v2796
      %vm3192 = vcmp.eq.s32.totalorder %v2493, %v2793
      %vm3193 = vcmp.eq.s32.totalorder %v2493, %v2794
      %vm3194 = vcmp.eq.s32.totalorder %v2493, %v2795
      %vm3195 = vcmp.eq.s32.totalorder %v2493, %v2796
      %vm3196 = vcmp.eq.s32.totalorder %v2494, %v2793
      %vm3197 = vcmp.eq.s32.totalorder %v2494, %v2794
      %vm3198 = vcmp.eq.s32.totalorder %v2494, %v2795
      %vm3199 = vcmp.eq.s32.totalorder %v2494, %v2796
      %vm3200 = vcmp.eq.s32.totalorder %v2495, %v2793
      %vm3201 = vcmp.eq.s32.totalorder %v2495, %v2794
      %vm3202 = vcmp.eq.s32.totalorder %v2495, %v2795
      %vm3203 = vcmp.eq.s32.totalorder %v2495, %v2796
      %vm3204 = vcmp.eq.s32.totalorder %v2496, %v2793
      %vm3205 = vcmp.eq.s32.totalorder %v2496, %v2794
      %vm3206 = vcmp.eq.s32.totalorder %v2496, %v2795
      %vm3207 = vcmp.eq.s32.totalorder %v2496, %v2796
      %vm3208 = vcmp.eq.s32.totalorder %v2497, %v2793
      %vm3209 = vcmp.eq.s32.totalorder %v2497, %v2794
      %vm3210 = vcmp.eq.s32.totalorder %v2497, %v2795
      %vm3211 = vcmp.eq.s32.totalorder %v2497, %v2796
      %vm3212 = vcmp.eq.s32.totalorder %v2498, %v2793
      %vm3213 = vcmp.eq.s32.totalorder %v2498, %v2794
      %vm3214 = vcmp.eq.s32.totalorder %v2498, %v2795
      %vm3215 = vcmp.eq.s32.totalorder %v2498, %v2796
      %vm3216 = vcmp.eq.s32.totalorder %v2499, %v2793
      %vm3217 = vcmp.eq.s32.totalorder %v2499, %v2794
      %vm3218 = vcmp.eq.s32.totalorder %v2499, %v2795
      %vm3219 = vcmp.eq.s32.totalorder %v2499, %v2796
      %vm3220 = vcmp.eq.s32.totalorder %v2500, %v2793
      %vm3221 = vcmp.eq.s32.totalorder %v2500, %v2794
      %vm3222 = vcmp.eq.s32.totalorder %v2500, %v2795
      %vm3223 = vcmp.eq.s32.totalorder %v2500, %v2796
      %vm3224 = vcmp.eq.s32.totalorder %v2501, %v2793
      %vm3225 = vcmp.eq.s32.totalorder %v2501, %v2794
      %vm3226 = vcmp.eq.s32.totalorder %v2501, %v2795
      %vm3227 = vcmp.eq.s32.totalorder %v2501, %v2796
      %vm3228 = vcmp.eq.s32.totalorder %v2502, %v2793
      %vm3229 = vcmp.eq.s32.totalorder %v2502, %v2794
      %vm3230 = vcmp.eq.s32.totalorder %v2502, %v2795
      %vm3231 = vcmp.eq.s32.totalorder %v2502, %v2796
      %vm3232 = vcmp.eq.s32.totalorder %v2503, %v2793
      %vm3233 = vcmp.eq.s32.totalorder %v2503, %v2794
      %vm3234 = vcmp.eq.s32.totalorder %v2503, %v2795
      %vm3235 = vcmp.eq.s32.totalorder %v2503, %v2796
      %vm3236 = vcmp.eq.s32.totalorder %v2504, %v2793
      %vm3237 = vcmp.eq.s32.totalorder %v2504, %v2794
      %vm3238 = vcmp.eq.s32.totalorder %v2504, %v2795
      %vm3239 = vcmp.eq.s32.totalorder %v2504, %v2796
      %v3240 = vld [vmem:[%s495 + $0x80] sm:$0xff]
      %v3241 = vld [vmem:[%s495 + $0x88] sm:$0xff]
      %v3242 = vld [vmem:[%s495 + $0x90] sm:$0xff]
      %v3243 = vld [vmem:[%s495 + $0x98] sm:$0xff]
      %v3244 = vld [vmem:[%s495 + $0xa0] sm:$0xff]
      %v3245 = vld [vmem:[%s495 + $0xa8] sm:$0xff]
      %v3246 = vld [vmem:[%s495 + $0xb0] sm:$0xff]
      %v3247 = vld [vmem:[%s495 + $0xb8] sm:$0xff]
      %v3248 = vld [vmem:[%s495 + $0xc0] sm:$0xff]
      %v3249 = vld [vmem:[%s495 + $0xc8] sm:$0xff]
      %v3250 = vld [vmem:[%s495 + $0xd0] sm:$0xff]
      %v3251 = vld [vmem:[%s495 + $0xd8] sm:$0xff]
      %v3252 = vld [vmem:[%s495 + $0xe0] sm:$0xff]
      %v3253 = vld [vmem:[%s495 + $0xe8] sm:$0xff]
      %v3254 = vld [vmem:[%s495 + $0xf0] sm:$0xff]
      %v3255 = vld [vmem:[%s495 + $0xf8] sm:$0xff]
      %3257 = vset.pattern.permute.xlu0 0
      %3258 = vperm.xlu0 %3257, %v3240
      %v3259 = vpop.permute.xlu0 %3258
      %3262 = vset.pattern.permute.xlu0 0
      %3263 = vperm.xlu0 %3262, %v3241
      %v3264 = vpop.permute.xlu0 %3263
      %3267 = vset.pattern.permute.xlu0 0
      %3268 = vperm.xlu0 %3267, %v3242
      %v3269 = vpop.permute.xlu0 %3268
      %3272 = vset.pattern.permute.xlu0 0
      %3273 = vperm.xlu0 %3272, %v3243
      %v3274 = vpop.permute.xlu0 %3273
      %3277 = vset.pattern.permute.xlu0 0
      %3278 = vperm.xlu0 %3277, %v3244
      %v3279 = vpop.permute.xlu0 %3278
      %3282 = vset.pattern.permute.xlu0 0
      %3283 = vperm.xlu0 %3282, %v3245
      %v3284 = vpop.permute.xlu0 %3283
      %3287 = vset.pattern.permute.xlu0 0
      %3288 = vperm.xlu0 %3287, %v3246
      %v3289 = vpop.permute.xlu0 %3288
      %3292 = vset.pattern.permute.xlu0 0
      %3293 = vperm.xlu0 %3292, %v3247
      %v3294 = vpop.permute.xlu0 %3293
      %3297 = vset.pattern.permute.xlu0 0
      %3298 = vperm.xlu0 %3297, %v3248
      %v3299 = vpop.permute.xlu0 %3298
      %3302 = vset.pattern.permute.xlu0 0
      %3303 = vperm.xlu0 %3302, %v3249
      %v3304 = vpop.permute.xlu0 %3303
      %3307 = vset.pattern.permute.xlu0 0
      %3308 = vperm.xlu0 %3307, %v3250
      %v3309 = vpop.permute.xlu0 %3308
      %3312 = vset.pattern.permute.xlu0 0
      %3313 = vperm.xlu0 %3312, %v3251
      %v3314 = vpop.permute.xlu0 %3313
      %3317 = vset.pattern.permute.xlu0 0
      %3318 = vperm.xlu0 %3317, %v3252
      %v3319 = vpop.permute.xlu0 %3318
      %3322 = vset.pattern.permute.xlu0 0
      %3323 = vperm.xlu0 %3322, %v3253
      %v3324 = vpop.permute.xlu0 %3323
      %3327 = vset.pattern.permute.xlu0 0
      %3328 = vperm.xlu0 %3327, %v3254
      %v3329 = vpop.permute.xlu0 %3328
      %3332 = vset.pattern.permute.xlu0 0
      %3333 = vperm.xlu0 %3332, %v3255
      %v3334 = vpop.permute.xlu0 %3333
      %v3336 = vsel %vm3176, %v3259, 0.0
      %v3337 = vsel %vm3177, %v3259, 0.0
      %v3338 = vsel %vm3178, %v3259, 0.0
      %v3339 = vsel %vm3179, %v3259, 0.0
      %v3340 = vsel %vm3180, %v3264, 0.0
      %v3341 = vsel %vm3181, %v3264, 0.0
      %v3342 = vsel %vm3182, %v3264, 0.0
      %v3343 = vsel %vm3183, %v3264, 0.0
      %v3344 = vsel %vm3184, %v3269, 0.0
      %v3345 = vsel %vm3185, %v3269, 0.0
      %v3346 = vsel %vm3186, %v3269, 0.0
      %v3347 = vsel %vm3187, %v3269, 0.0
      %v3348 = vsel %vm3188, %v3274, 0.0
      %v3349 = vsel %vm3189, %v3274, 0.0
      %v3350 = vsel %vm3190, %v3274, 0.0
      %v3351 = vsel %vm3191, %v3274, 0.0
      %v3352 = vsel %vm3192, %v3279, 0.0
      %v3353 = vsel %vm3193, %v3279, 0.0
      %v3354 = vsel %vm3194, %v3279, 0.0
      %v3355 = vsel %vm3195, %v3279, 0.0
      %v3356 = vsel %vm3196, %v3284, 0.0
      %v3357 = vsel %vm3197, %v3284, 0.0
      %v3358 = vsel %vm3198, %v3284, 0.0
      %v3359 = vsel %vm3199, %v3284, 0.0
      %v3360 = vsel %vm3200, %v3289, 0.0
      %v3361 = vsel %vm3201, %v3289, 0.0
      %v3362 = vsel %vm3202, %v3289, 0.0
      %v3363 = vsel %vm3203, %v3289, 0.0
      %v3364 = vsel %vm3204, %v3294, 0.0
      %v3365 = vsel %vm3205, %v3294, 0.0
      %v3366 = vsel %vm3206, %v3294, 0.0
      %v3367 = vsel %vm3207, %v3294, 0.0
      %v3368 = vsel %vm3208, %v3299, 0.0
      %v3369 = vsel %vm3209, %v3299, 0.0
      %v3370 = vsel %vm3210, %v3299, 0.0
      %v3371 = vsel %vm3211, %v3299, 0.0
      %v3372 = vsel %vm3212, %v3304, 0.0
      %v3373 = vsel %vm3213, %v3304, 0.0
      %v3374 = vsel %vm3214, %v3304, 0.0
      %v3375 = vsel %vm3215, %v3304, 0.0
      %v3376 = vsel %vm3216, %v3309, 0.0
      %v3377 = vsel %vm3217, %v3309, 0.0
      %v3378 = vsel %vm3218, %v3309, 0.0
      %v3379 = vsel %vm3219, %v3309, 0.0
      %v3380 = vsel %vm3220, %v3314, 0.0
      %v3381 = vsel %vm3221, %v3314, 0.0
      %v3382 = vsel %vm3222, %v3314, 0.0
      %v3383 = vsel %vm3223, %v3314, 0.0
      %v3384 = vsel %vm3224, %v3319, 0.0
      %v3385 = vsel %vm3225, %v3319, 0.0
      %v3386 = vsel %vm3226, %v3319, 0.0
      %v3387 = vsel %vm3227, %v3319, 0.0
      %v3388 = vsel %vm3228, %v3324, 0.0
      %v3389 = vsel %vm3229, %v3324, 0.0
      %v3390 = vsel %vm3230, %v3324, 0.0
      %v3391 = vsel %vm3231, %v3324, 0.0
      %v3392 = vsel %vm3232, %v3329, 0.0
      %v3393 = vsel %vm3233, %v3329, 0.0
      %v3394 = vsel %vm3234, %v3329, 0.0
      %v3395 = vsel %vm3235, %v3329, 0.0
      %v3396 = vsel %vm3236, %v3334, 0.0
      %v3397 = vsel %vm3237, %v3334, 0.0
      %v3398 = vsel %vm3238, %v3334, 0.0
      %v3399 = vsel %vm3239, %v3334, 0.0
      %v3400 = vadd.f32 %v3336, %v3340
      %v3401 = vadd.f32 %v3400, %v3344
      %v3402 = vadd.f32 %v3401, %v3348
      %v3403 = vadd.f32 %v3402, %v3352
      %v3404 = vadd.f32 %v3403, %v3356
      %v3405 = vadd.f32 %v3404, %v3360
      %v3406 = vadd.f32 %v3405, %v3364
      %v3407 = vadd.f32 %v3406, %v3368
      %v3408 = vadd.f32 %v3407, %v3372
      %v3409 = vadd.f32 %v3408, %v3376
      %v3410 = vadd.f32 %v3409, %v3380
      %v3411 = vadd.f32 %v3410, %v3384
      %v3412 = vadd.f32 %v3411, %v3388
      %v3413 = vadd.f32 %v3412, %v3392
      %v3414 = vadd.f32 %v3413, %v3396
      %v3415 = vrot.slane %v3414, 4
      %v3416 = vadd.f32 %v3414, %v3415
      %v3417 = vrot.slane %v3416, 2
      %v3418 = vadd.f32 %v3416, %v3417
      %v3419 = vrot.slane %v3418, 1
      %v3420 = vadd.f32 %v3418, %v3419
      %v3421 = vadd.f32 %v3337, %v3341
      %v3422 = vadd.f32 %v3421, %v3345
      %v3423 = vadd.f32 %v3422, %v3349
      %v3424 = vadd.f32 %v3423, %v3353
      %v3425 = vadd.f32 %v3424, %v3357
      %v3426 = vadd.f32 %v3425, %v3361
      %v3427 = vadd.f32 %v3426, %v3365
      %v3428 = vadd.f32 %v3427, %v3369
      %v3429 = vadd.f32 %v3428, %v3373
      %v3430 = vadd.f32 %v3429, %v3377
      %v3431 = vadd.f32 %v3430, %v3381
      %v3432 = vadd.f32 %v3431, %v3385
      %v3433 = vadd.f32 %v3432, %v3389
      %v3434 = vadd.f32 %v3433, %v3393
      %v3435 = vadd.f32 %v3434, %v3397
      %v3436 = vrot.slane %v3435, 4
      %v3437 = vadd.f32 %v3435, %v3436
      %v3438 = vrot.slane %v3437, 2
      %v3439 = vadd.f32 %v3437, %v3438
      %v3440 = vrot.slane %v3439, 1
      %v3441 = vadd.f32 %v3439, %v3440
      %v3442 = vadd.f32 %v3338, %v3342
      %v3443 = vadd.f32 %v3442, %v3346
      %v3444 = vadd.f32 %v3443, %v3350
      %v3445 = vadd.f32 %v3444, %v3354
      %v3446 = vadd.f32 %v3445, %v3358
      %v3447 = vadd.f32 %v3446, %v3362
      %v3448 = vadd.f32 %v3447, %v3366
      %v3449 = vadd.f32 %v3448, %v3370
      %v3450 = vadd.f32 %v3449, %v3374
      %v3451 = vadd.f32 %v3450, %v3378
      %v3452 = vadd.f32 %v3451, %v3382
      %v3453 = vadd.f32 %v3452, %v3386
      %v3454 = vadd.f32 %v3453, %v3390
      %v3455 = vadd.f32 %v3454, %v3394
      %v3456 = vadd.f32 %v3455, %v3398
      %v3457 = vrot.slane %v3456, 4
      %v3458 = vadd.f32 %v3456, %v3457
      %v3459 = vrot.slane %v3458, 2
      %v3460 = vadd.f32 %v3458, %v3459
      %v3461 = vrot.slane %v3460, 1
      %v3462 = vadd.f32 %v3460, %v3461
      %v3463 = vadd.f32 %v3339, %v3343
      %v3464 = vadd.f32 %v3463, %v3347
      %v3465 = vadd.f32 %v3464, %v3351
      %v3466 = vadd.f32 %v3465, %v3355
      %v3467 = vadd.f32 %v3466, %v3359
      %v3468 = vadd.f32 %v3467, %v3363
      %v3469 = vadd.f32 %v3468, %v3367
      %v3470 = vadd.f32 %v3469, %v3371
      %v3471 = vadd.f32 %v3470, %v3375
      %v3472 = vadd.f32 %v3471, %v3379
      %v3473 = vadd.f32 %v3472, %v3383
      %v3474 = vadd.f32 %v3473, %v3387
      %v3475 = vadd.f32 %v3474, %v3391
      %v3476 = vadd.f32 %v3475, %v3395
      %v3477 = vadd.f32 %v3476, %v3399
      %v3478 = vrot.slane %v3477, 4
      %v3479 = vadd.f32 %v3477, %v3478
      %v3480 = vrot.slane %v3479, 2
      %v3481 = vadd.f32 %v3479, %v3480
      %v3482 = vrot.slane %v3481, 1
      %v3483 = vadd.f32 %v3481, %v3482
      %v3484 = vadd.f32 %v3172, %v3420
      %v3485 = vadd.f32 %v3173, %v3441
      %v3486 = vadd.f32 %v3174, %v3462
      %v3487 = vadd.f32 %v3175, %v3483
      %v3488 = vld [vmem:[%s500] sm:$0x1]
      %3490 = vset.pattern.permute.xlu0 0
      %3491 = vperm.xlu0 %3490, %v3488
      %v3492 = vpop.permute.xlu0 %3491
      %v3494 = vlaneseq
      %v3495 = vshrl.u32 %v3494, 7
      %v3496 = vsub.s32 0, %v3495
      %v3497 = vrot.slane %v3492, %v3496
      %v3498 = vadd.f32 %v3484, %v3497
      %v3499 = vadd.f32 %v3485, %v3497
      %v3500 = vadd.f32 %v3486, %v3497
      %v3501 = vadd.f32 %v3487, %v3497
      %v3506 = vcombine.low %v3498, %v3499
      %v3507 = vcombine.low %v3500, %v3501
      %v3509 = vunpack.c.l.s4 1966171168
      %v3510 = vunpack.c.0.s8 %v3509
      %v3511 = vlaneseq
      %v3512 = vshrl.u32 %v3511, 7
      %v3513 = vsub.s32 %v3510, %v3512
      %v3514 = vrot.slane %v3506, %v3513
      %v3516 = vunpack.c.l.s4 1966171168
      %v3517 = vunpack.c.0.s8 %v3516
      %v3518 = vlaneseq
      %v3519 = vshrl.u32 %v3518, 7
      %v3520 = vsub.s32 %v3517, %v3519
      %v3521 = vrot.slane %v3507, %v3520
      %v3522 = vcombine.low %v3514, %v3521
      %v3524 = vunpack.c.l.s4 1966171168
      %v3525 = vunpack.c.0.s8 %v3524
      %v3526 = vlaneseq
      %v3527 = vshrl.u32 %v3526, 7
      %v3528 = vsub.s32 %v3525, %v3527
      %v3529 = vrot.slane %v3522, %v3528
      %3531 = vst.msk [vmem:[%s505] sm:$0xf] %vm2828, %v3529
      %s3532 = smul.u32 4, %s28
      %p3533 = scmp.lt.s32.totalorder %s3532, 43
      %s3534 = scalar_select %p3533, %s3532, 43
      %s3535 = scalar_lea.vmem %s8, %s3534
      %s3536 = smul.u32 4, %s28
      %p3537 = scmp.lt.s32.totalorder %s3536, 43
      %s3538 = scalar_select %p3537, %s3536, 43
      %s3539 = scalar_lea.vmem %s9, %s3538
      %s3540 = smul.u32 4, %s28
      %p3541 = scmp.lt.s32.totalorder %s3540, 43
      %s3542 = scalar_select %p3541, %s3540, 43
      %s3543 = scalar_lea.vmem %s10, %s3542
      // Predicated region
      $region49: #{forward.1} parent=47 // pred_check
        %p3544 = pneg %p240
      $region50: #{forward.1} parent=47 // pred_check_branch
        %3546 = sbr.rel (%p3544) target = $region52
      $region51: #{forward.1} parent=47 // pred_region
        %s3547 = smul.u32 4, %s28
      $region52: #{forward.1} parent=47 // pred_fallthru
        _
      // Predicated region
      $region53: #{forward.1} parent=47 // pred_check
        %p3548 = pneg %p266
      $region54: #{forward.1} parent=47 // pred_check_branch
        %3550 = sbr.rel (%p3548) target = $region56
      $region55: #{forward.1} parent=47 // pred_region
        %s3551 = smul.u32 4, %s28
      $region56: #{forward.1} parent=47 // pred_fallthru
        _
      // Predicated region
      $region57: #{forward.1} parent=47 // pred_check
        %p3552 = pneg %p292
      $region58: #{forward.1} parent=47 // pred_check_branch
        %3554 = sbr.rel (%p3552) target = $region60
      $region59: #{forward.1} parent=47 // pred_region
        %s3555 = smul.u32 4, %s28
      $region60: #{forward.1} parent=47 // pred_fallthru
        _
    $region48: #{forward.1} parent=5 // pred_fallthru
      _
    %p3556 = scmp.le.s32.totalorder 2, %s23
    // Predicated region
    $region61: #{forward.1} parent=5 // pred_check
      %p3557 = pneg %p3556
    $region62: #{forward.1} parent=5 // pred_check_branch
      %3559 = sbr.rel (%p3557) target = $region64
    $region63: #{forward.1} parent=5 // pred_region
      %s3560 = ssub.s32 %s23, 2
      // Predicated region
      $region65: #{forward.1} parent=63 // pred_check
        %p3561 = pneg %p246
      $region66: #{forward.1} parent=63 // pred_check_branch
        %3563 = sbr.rel (%p3561) target = $region68
      $region67: #{forward.1} parent=63 // pred_region
        %s3564 = smul.u32 4, %s29
        %p3565 = scmp.lt.s32.totalorder %s3564, 43
        %s3566 = scalar_select %p3565, %s3564, 43
        %s3567 = scalar_lea.vmem %s8, %s3566
      $region68: #{forward.1} parent=63 // pred_fallthru
        _
      // Predicated region
      $region69: #{forward.1} parent=63 // pred_check
        %p3568 = pneg %p272
      $region70: #{forward.1} parent=63 // pred_check_branch
        %3570 = sbr.rel (%p3568) target = $region72
      $region71: #{forward.1} parent=63 // pred_region
        %s3571 = smul.u32 4, %s29
        %p3572 = scmp.lt.s32.totalorder %s3571, 43
        %s3573 = scalar_select %p3572, %s3571, 43
        %s3574 = scalar_lea.vmem %s9, %s3573
      $region72: #{forward.1} parent=63 // pred_fallthru
        _
      // Predicated region
      $region73: #{forward.1} parent=63 // pred_check
        %p3575 = pneg %p298
      $region74: #{forward.1} parent=63 // pred_check_branch
        %3577 = sbr.rel (%p3575) target = $region76
      $region75: #{forward.1} parent=63 // pred_region
        %s3578 = smul.u32 4, %s29
        %p3579 = scmp.lt.s32.totalorder %s3578, 43
        %s3580 = scalar_select %p3579, %s3578, 43
        %s3581 = scalar_lea.vmem %s10, %s3580
      $region76: #{forward.1} parent=63 // pred_fallthru
        _
    $region64: #{forward.1} parent=5 // pred_fallthru
      _
  $region6: #{forward.1} parent=0 // loop_footer
    %s27 = sadd.s32 1, %s23
  $region7: #{forward.1} parent=0 // loop_footer_branch
    %22 = sbr.rel target = $region3
  $region8: #{forward.1} parent=0 // loop_exit
    _

</llo_original>
